<compile_context>
chip_gen: v7x
topology: tpu7x:2x2x1
jax: 0.10.0
libtpu: 0.0.40
codegen_flags: <defaults>
</compile_context>

<pallas_src>
import jax
import jax.numpy as jnp
from jax.experimental import pallas as pl
from jax.experimental.pallas import tpu as pltpu

EPS = 1e-3


def _fused_kernel(x1_ref, x2_ref, w_ref, gamma_ref, beta_ref, o_ref):
    # x1/x2: (Cin, P)   w: (TC, Cin)   gamma/beta: (TC, 1)   o: (TC, P)
    p = x1_ref.shape[1]

    x = x1_ref[...] + x2_ref[...]                        # residual add (VPU)
    # 1x1 conv == matmul on the MXU.  Kept in f32: bf16 inputs would push the
    # error past the 1e-3 check at these magnitudes.
    y = jnp.dot(w_ref[...], x, preferred_element_type=jnp.float32)   # (TC, P)

    # Per-channel batch statistics over all P pixels.  Two-pass (centered)
    # variance: robust against cancellation, and the centered tile is reused
    # directly for the normalized output (biased var matches PyTorch's
    # training-mode normalization path).
    inv_p = jnp.float32(1.0 / p)
    mean = jnp.sum(y, axis=1, keepdims=True) * inv_p      # (TC, 1)
    centered = y - mean                                    # (TC, P)
    var = jnp.sum(centered * centered, axis=1, keepdims=True) * inv_p
    inv_std = jax.lax.rsqrt(var + EPS)

    # Fold BN into a per-channel scale/bias => single fused mul+add on the
    # big (TC, P) tile.
    scale = gamma_ref[...] * inv_std                       # (TC, 1)
    o_ref[...] = centered * scale + beta_ref[...]


def _pick_cout_tile(cout: int) -> int:
    # Largest tile that is a multiple of 8 (sublane rule) and divides Cout.
    # 528 first: for Cout=1056 it yields grid=(2,), which balances v7x's two
    # TensorCores and minimizes per-step overhead on single-TC chips while
    # keeping one step of DMA/compute overlap.
    for tc in (528, 512, 384, 352, 264, 256, 176, 128, 96, 88, 64, 48, 32, 24, 16, 8):
        if cout % tc == 0:
            return tc
    return cout  # fall back to a single (gridless) block


@jax.jit
def fused_add_conv1x1_bn(x319, x304, w_oi, gamma, beta):
    """
    x319, x304 : (N, Cin, H, W) float32  (NCHW, matching PyTorch)
    w_oi       : (Cout, Cin)    float32  (Conv2d weight squeezed from (Cout,Cin,1,1))
    gamma,beta : (Cout,)        float32  (BatchNorm affine params)
    returns    : (N, Cout, H, W) float32
    """
    N, Cin, H, W = x319.shape
    Cout = w_oi.shape[0]
    P = N * H * W

    # Channel-major views.  For N=1 these transposes are degenerate (size-1
    # axis move) -> pure reshapes, no data movement.
    x1 = jnp.transpose(x319, (1, 0, 2, 3)).reshape(Cin, P)
    x2 = jnp.transpose(x304, (1, 0, 2, 3)).reshape(Cin, P)
    g = gamma.reshape(Cout, 1)
    b = beta.reshape(Cout, 1)

    TC = _pick_cout_tile(Cout)
    grid = (Cout // TC,)

    flops = 2 * Cout * Cin * P + Cin * P + 5 * Cout * P
    bytes_accessed = 4 * (2 * Cin * P + Cout * Cin + 2 * Cout + Cout * P)

    # TODO(synk): BatchNorm training-mode running_mean/running_var update is a
    # module side effect and is not emitted here; only the normalized output.
    out_cm = pl.pallas_call(
        _fused_kernel,
        out_shape=jax.ShapeDtypeStruct((Cout, P), jnp.float32),
        grid_spec=pltpu.PrefetchScalarGridSpec(
            num_scalar_prefetch=0,
            grid=grid,
            in_specs=[
                pl.BlockSpec((Cin, P), lambda i: (0, 0)),    # x1 (pinned, loaded once)
                pl.BlockSpec((Cin, P), lambda i: (0, 0)),    # x2 (pinned, loaded once)
                pl.BlockSpec((TC, Cin), lambda i: (i, 0)),   # weight tile over Cout
                pl.BlockSpec((TC, 1), lambda i: (i, 0)),     # gamma tile
                pl.BlockSpec((TC, 1), lambda i: (i, 0)),     # beta tile
            ],
            out_specs=pl.BlockSpec((TC, P), lambda i: (i, 0)),
        ),
        compiler_params=pltpu.CompilerParams(
            # Cout tiles are fully independent (per-channel stats) -> megacore
            # can shard the axis across v7x's two TensorCores.
            dimension_semantics=("parallel",),
        ),
        cost_estimate=pl.CostEstimate(
            flops=flops,
            transcendentals=Cout,          # one rsqrt per output channel
            bytes_accessed=bytes_accessed,
        ),
    )(x1, x2, w_oi, g, b)

    # (Cout, P) -> (N, Cout, H, W): free for N=1.
    return jnp.transpose(out_cm.reshape(Cout, N, H, W), (1, 0, 2, 3))


if __name__ == "__main__":
    key = jax.random.PRNGKey(0)
    k1, k2, k3 = jax.random.split(key, 3)

    N, Cin, H, W = 1, 176, 14, 14
    Cout = 1056

    # Deterministic synthetic inputs / parameters (no checkpoint loading).
    x319 = jax.random.normal(k1, (N, Cin, H, W), dtype=jnp.float32)
    x304 = jax.random.normal(k2, (N, Cin, H, W), dtype=jnp.float32)
    # Conv2d(176, 1056, 1x1, bias=False) weight, squeezed from (Cout, Cin, 1, 1)
    w_oi = jax.random.normal(k3, (Cout, Cin), dtype=jnp.float32) * 0.05
    # BatchNorm2d defaults: weight=1, bias=0
    gamma = jnp.ones((Cout,), dtype=jnp.float32)
    beta = jnp.zeros((Cout,), dtype=jnp.float32)

    out = fused_add_conv1x1_bn(x319, x304, w_oi, gamma, beta)
    jax.block_until_ready(out)

    # Pure-JAX reference of the same math (independent path: pixel-major,
    # two-pass statistics).
    x = jnp.transpose(x319 + x304, (0, 2, 3, 1)).reshape(-1, Cin)
    y = x @ w_oi.T                                        # (P, Cout)
    mu = y.mean(axis=0, keepdims=True)
    var = ((y - mu) ** 2).mean(axis=0, keepdims=True)     # biased
    ref = (y - mu) / jnp.sqrt(var + EPS) * gamma + beta
    ref = jnp.transpose(ref.reshape(N, H, W, Cout), (0, 3, 1, 2))

    assert jnp.allclose(out, ref, atol=1e-3, rtol=1e-3), float(
        jnp.max(jnp.abs(out - ref))
    )

    print("KERNEL_OK")
</pallas_src>

<mosaic_0001>
module attributes {stable_mosaic.version = 11 : i64} {
  func.func @_fused_kernel(%arg0: i32, %arg1: memref<176x196xf32, #tpu.memory_space<vmem>>, %arg2: memref<176x196xf32, #tpu.memory_space<vmem>>, %arg3: memref<528x176xf32, #tpu.memory_space<vmem>>, %arg4: memref<528x1xf32, #tpu.memory_space<vmem>>, %arg5: memref<528x1xf32, #tpu.memory_space<vmem>>, %arg6: memref<528x196xf32, #tpu.memory_space<vmem>>) attributes {dimension_semantics = [#tpu.dimension_semantics<parallel>], iteration_bounds = array<i64: 2>, scalar_prefetch = 0 : i64, scratch_operands = 0 : i64, tpu.core_type = #tpu.core_type<tc>, window_params = [{pipeline_mode = #tpu.pipeline_mode<synchronous>, transform_indices = @transform_0, window_bounds = array<i64: 176, 196>}, {pipeline_mode = #tpu.pipeline_mode<synchronous>, transform_indices = @transform_1, window_bounds = array<i64: 176, 196>}, {transform_indices = @transform_2, window_bounds = array<i64: 528, 176>}, {transform_indices = @transform_3, window_bounds = array<i64: 528, 1>}, {transform_indices = @transform_4, window_bounds = array<i64: 528, 1>}, {transform_indices = @transform_5, window_bounds = array<i64: 528, 196>}]} {
    %c0 = arith.constant 0 : index
    %c0_0 = arith.constant 0 : index
    %0 = vector.load %arg1[%c0, %c0_0] : memref<176x196xf32, #tpu.memory_space<vmem>>, vector<176x196xf32>
    %c0_1 = arith.constant 0 : index
    %c0_2 = arith.constant 0 : index
    %1 = vector.load %arg2[%c0_1, %c0_2] : memref<176x196xf32, #tpu.memory_space<vmem>>, vector<176x196xf32>
    %2 = arith.addf %0, %1 : vector<176x196xf32>
    %c0_3 = arith.constant 0 : index
    %c0_4 = arith.constant 0 : index
    %3 = vector.load %arg3[%c0_3, %c0_4] : memref<528x176xf32, #tpu.memory_space<vmem>>, vector<528x176xf32>
    %cst = arith.constant dense<0.000000e+00> : vector<528x196xf32>
    %4 = tpu.matmul %3, %2, %cst {dimension_numbers = #tpu.dot_dimension_numbers<[1], [0], [0], [1], [0, 0, 1, 1], [], []>} : vector<528x176xf32>, vector<176x196xf32>, vector<528x196xf32> -> vector<528x196xf32>
    %cst_5 = arith.constant dense<0.000000e+00> : vector<528xf32>
    %5 = vector.multi_reduction <add>, %4, %cst_5 [1] : vector<528x196xf32> to vector<528xf32>
    %6 = vector.shape_cast %5 : vector<528xf32> to vector<528x1xf32>
    %cst_6 = arith.constant 0.00510204071 : f32
    %7 = vector.broadcast %cst_6 : f32 to vector<528x1xf32>
    %8 = arith.mulf %6, %7 : vector<528x1xf32>
    %9 = vector.broadcast %8 : vector<528x1xf32> to vector<528x196xf32>
    %10 = arith.subf %4, %9 : vector<528x196xf32>
    %11 = arith.mulf %10, %10 : vector<528x196xf32>
    %cst_7 = arith.constant dense<0.000000e+00> : vector<528xf32>
    %12 = vector.multi_reduction <add>, %11, %cst_7 [1] : vector<528x196xf32> to vector<528xf32>
    %13 = vector.shape_cast %12 : vector<528xf32> to vector<528x1xf32>
    %cst_8 = arith.constant 0.00510204071 : f32
    %14 = vector.broadcast %cst_8 : f32 to vector<528x1xf32>
    %15 = arith.mulf %13, %14 : vector<528x1xf32>
    %cst_9 = arith.constant 1.000000e-03 : f32
    %16 = vector.broadcast %cst_9 : f32 to vector<528x1xf32>
    %17 = arith.addf %15, %16 : vector<528x1xf32>
    %18 = math.rsqrt %17 : vector<528x1xf32>
    %c0_10 = arith.constant 0 : index
    %c0_11 = arith.constant 0 : index
    %19 = vector.load %arg4[%c0_10, %c0_11] : memref<528x1xf32, #tpu.memory_space<vmem>>, vector<528x1xf32>
    %20 = arith.mulf %19, %18 : vector<528x1xf32>
    %21 = vector.broadcast %20 : vector<528x1xf32> to vector<528x196xf32>
    %22 = arith.mulf %10, %21 : vector<528x196xf32>
    %c0_12 = arith.constant 0 : index
    %c0_13 = arith.constant 0 : index
    %23 = vector.load %arg5[%c0_12, %c0_13] : memref<528x1xf32, #tpu.memory_space<vmem>>, vector<528x1xf32>
    %24 = vector.broadcast %23 : vector<528x1xf32> to vector<528x196xf32>
    %25 = arith.addf %22, %24 : vector<528x196xf32>
    %c0_14 = arith.constant 0 : index
    %c0_15 = arith.constant 0 : index
    %26 = vector.load %arg6[%c0_14, %c0_15] : memref<528x196xf32, #tpu.memory_space<vmem>>, vector<528x196xf32>
    tpu.vector_store %arg6[%c0_14, %c0_15], %25 {strides = array<i32>} : memref<528x196xf32, #tpu.memory_space<vmem>>, vector<528x196xf32>,
    return
  }
  func.func @transform_0(%arg0: i32) -> (i32, i32) {
    %c0_i32 = arith.constant 0 : i32
    %c0_i32_0 = arith.constant 0 : i32
    %c0_i32_1 = arith.constant 0 : i32
    return %c0_i32, %c0_i32_0 : i32, i32
  }
  func.func @transform_1(%arg0: i32) -> (i32, i32) {
    %c0_i32 = arith.constant 0 : i32
    %c0_i32_0 = arith.constant 0 : i32
    %c0_i32_1 = arith.constant 0 : i32
    return %c0_i32, %c0_i32_0 : i32, i32
  }
  func.func @transform_2(%arg0: i32) -> (i32, i32) {
    %c0_i32 = arith.constant 0 : i32
    %c0_i32_0 = arith.constant 0 : i32
    return %arg0, %c0_i32 : i32, i32
  }
  func.func @transform_3(%arg0: i32) -> (i32, i32) {
    %c0_i32 = arith.constant 0 : i32
    %c0_i32_0 = arith.constant 0 : i32
    return %arg0, %c0_i32 : i32, i32
  }
  func.func @transform_4(%arg0: i32) -> (i32, i32) {
    %c0_i32 = arith.constant 0 : i32
    %c0_i32_0 = arith.constant 0 : i32
    return %arg0, %c0_i32 : i32, i32
  }
  func.func @transform_5(%arg0: i32) -> (i32, i32) {
    %c0_i32 = arith.constant 0 : i32
    %c0_i32_0 = arith.constant 0 : i32
    return %arg0, %c0_i32 : i32, i32
  }
}

</mosaic_0001>

<llo_original>
// kernel: fused_add_conv1x1_bn.1
$region0: #{fused_add_conv1x1_bn.1}
  #allocation0 [shape = 'u32[]', space=smem, size = 0x4, offset = 0x4, fixed_abs, tag = 'smem constant byte address 0x4 - core index']
  #allocation1 [shape = 'u32[144,128]{1,0:T(1,128)}', space=vmem, size = 0x12000, scoped, tag = 'internal scratch']
  %s0 = inlined_call_operand.vmem [shape: f32[176,196], index: 0, kind: input, shape index: {}]
  %s1 = inlined_call_operand.vmem [shape: f32[176,196], index: 1, kind: input, shape index: {}]
  %s2 = inlined_call_operand.vmem [shape: f32[1056,176], index: 2, kind: input, shape index: {}]
  %s3 = inlined_call_operand.vmem [shape: f32[1056,1], index: 3, kind: input, shape index: {}]
  %s4 = inlined_call_operand.vmem [shape: f32[1056,1], index: 4, kind: input, shape index: {}]
  %s5 = inlined_call_operand.vmem [shape: f32[1056,196], index: 5, kind: output, shape index: {}]
  %s6 = sld [smem:[#allocation0]]
  $region53: #{fused_add_conv1x1_bn.1} parent=0
    _
  %s8 = ssub.s32 1, %s6
  %s9 = scalar_select 0, %s8, %s6
  loop: start=0, step=1, limit=4
  $region2: #{fused_add_conv1x1_bn.1} parent=0 // loop_pre_header
    _
  $region3: #{fused_add_conv1x1_bn.1} parent=0 // loop_header
    %s11 = sphi 0, %s15
    %p12 = scmp.ge.s32.totalorder %s11, 4
    %s19 = sphi 0, %s19
    %s21 = sphi 0, %s19
    %s22 = sphi 0, %s21
    %s36 = sphi 0, %s22
    %s40 = sphi 0, %s40
    %s42 = sphi 0, %s40
    %s43 = sphi 0, %s42
    %s57 = sphi 0, %s43
    %s63 = sphi 0, %s65
    %s66 = sphi 0, %s63
    %s67 = sphi 0, %s66
    %s83 = sphi 0, %s67
    %s89 = sphi 0, %s91
    %s92 = sphi 0, %s89
    %s93 = sphi 0, %s92
    %s109 = sphi 0, %s93
    %s115 = sphi 0, %s117
    %s118 = sphi 0, %s115
    %s119 = sphi 0, %s118
    %s135 = sphi 0, %s119
    %s141 = sphi 0, %s143
    %s144 = sphi 0, %s141
    %s145 = sphi 0, %s144
    %s161 = sphi 0, %s145
  $region4: #{fused_add_conv1x1_bn.1} parent=0 // loop_header_branch
    %14 = sbr.rel (%p12) target = $region8
  $region5: #{fused_add_conv1x1_bn.1} parent=0 // loop_body
    %s16 = ssub.s32 %s11, 1
    %s17 = ssub.s32 %s11, 2
    %s18 = sadd.s32 %s11, 1
    %s20 = sadd.s32 %s19, 1
    %p23 = scmp.eq.s32.totalorder %s11, 1
    %p24 = scmp.ne.s32.totalorder %s19, %s21
    %p25 = scmp.eq.s32.totalorder %s11, 0
    %p26 = por %p24, %p25
    %p27 = scmp.ne.s32.totalorder %s19, %s21
    %p28 = scmp.eq.s32.totalorder %s16, 1
    %p29 = por %p27, %p28
    %p30 = scmp.ne.s32.totalorder %s21, %s22
    %p31 = scmp.eq.s32.totalorder %s16, 0
    %p32 = por %p30, %p31
    %p33 = scmp.ne.s32.totalorder %s21, %s22
    %p34 = scmp.eq.s32.totalorder %s17, 1
    %p35 = por %p33, %p34
    %p37 = scmp.ne.s32.totalorder %s22, %s36
    %p38 = scmp.eq.s32.totalorder %s17, 0
    %p39 = por %p37, %p38
    %s41 = sadd.s32 %s40, 1
    %p44 = scmp.eq.s32.totalorder %s11, 1
    %p45 = scmp.ne.s32.totalorder %s40, %s42
    %p46 = scmp.eq.s32.totalorder %s11, 0
    %p47 = por %p45, %p46
    %p48 = scmp.ne.s32.totalorder %s40, %s42
    %p49 = scmp.eq.s32.totalorder %s16, 1
    %p50 = por %p48, %p49
    %p51 = scmp.ne.s32.totalorder %s42, %s43
    %p52 = scmp.eq.s32.totalorder %s16, 0
    %p53 = por %p51, %p52
    %p54 = scmp.ne.s32.totalorder %s42, %s43
    %p55 = scmp.eq.s32.totalorder %s17, 1
    %p56 = por %p54, %p55
    %p58 = scmp.ne.s32.totalorder %s43, %s57
    %p59 = scmp.eq.s32.totalorder %s17, 0
    %p60 = por %p58, %p59
    %s61 = ssub.s32 %s11, %s18
    %p62 = scmp.eq.s32.totalorder %s61, 0
    %s64 = sadd.s32 %s63, 1
    %s65 = scalar_select %p62, %s63, %s64
    %p68 = pneg %p62
    %p69 = scmp.eq.s32.totalorder %s11, 1
    %p70 = por %p68, %p69
    %p71 = scmp.ne.s32.totalorder %s63, %s66
    %p72 = scmp.eq.s32.totalorder %s11, 0
    %p73 = por %p71, %p72
    %p74 = scmp.ne.s32.totalorder %s63, %s66
    %p75 = scmp.eq.s32.totalorder %s16, 1
    %p76 = por %p74, %p75
    %p77 = scmp.ne.s32.totalorder %s66, %s67
    %p78 = scmp.eq.s32.totalorder %s16, 0
    %p79 = por %p77, %p78
    %p80 = scmp.ne.s32.totalorder %s66, %s67
    %p81 = scmp.eq.s32.totalorder %s17, 1
    %p82 = por %p80, %p81
    %p84 = scmp.ne.s32.totalorder %s67, %s83
    %p85 = scmp.eq.s32.totalorder %s17, 0
    %p86 = por %p84, %p85
    %s87 = ssub.s32 %s11, %s18
    %p88 = scmp.eq.s32.totalorder %s87, 0
    %s90 = sadd.s32 %s89, 1
    %s91 = scalar_select %p88, %s89, %s90
    %p94 = pneg %p88
    %p95 = scmp.eq.s32.totalorder %s11, 1
    %p96 = por %p94, %p95
    %p97 = scmp.ne.s32.totalorder %s89, %s92
    %p98 = scmp.eq.s32.totalorder %s11, 0
    %p99 = por %p97, %p98
    %p100 = scmp.ne.s32.totalorder %s89, %s92
    %p101 = scmp.eq.s32.totalorder %s16, 1
    %p102 = por %p100, %p101
    %p103 = scmp.ne.s32.totalorder %s92, %s93
    %p104 = scmp.eq.s32.totalorder %s16, 0
    %p105 = por %p103, %p104
    %p106 = scmp.ne.s32.totalorder %s92, %s93
    %p107 = scmp.eq.s32.totalorder %s17, 1
    %p108 = por %p106, %p107
    %p110 = scmp.ne.s32.totalorder %s93, %s109
    %p111 = scmp.eq.s32.totalorder %s17, 0
    %p112 = por %p110, %p111
    %s113 = ssub.s32 %s11, %s18
    %p114 = scmp.eq.s32.totalorder %s113, 0
    %s116 = sadd.s32 %s115, 1
    %s117 = scalar_select %p114, %s115, %s116
    %p120 = pneg %p114
    %p121 = scmp.eq.s32.totalorder %s11, 1
    %p122 = por %p120, %p121
    %p123 = scmp.ne.s32.totalorder %s115, %s118
    %p124 = scmp.eq.s32.totalorder %s11, 0
    %p125 = por %p123, %p124
    %p126 = scmp.ne.s32.totalorder %s115, %s118
    %p127 = scmp.eq.s32.totalorder %s16, 1
    %p128 = por %p126, %p127
    %p129 = scmp.ne.s32.totalorder %s118, %s119
    %p130 = scmp.eq.s32.totalorder %s16, 0
    %p131 = por %p129, %p130
    %p132 = scmp.ne.s32.totalorder %s118, %s119
    %p133 = scmp.eq.s32.totalorder %s17, 1
    %p134 = por %p132, %p133
    %p136 = scmp.ne.s32.totalorder %s119, %s135
    %p137 = scmp.eq.s32.totalorder %s17, 0
    %p138 = por %p136, %p137
    %s139 = ssub.s32 %s11, %s18
    %p140 = scmp.eq.s32.totalorder %s139, 0
    %s142 = sadd.s32 %s141, 1
    %s143 = scalar_select %p140, %s141, %s142
    %p146 = pneg %p140
    %p147 = scmp.eq.s32.totalorder %s11, 1
    %p148 = por %p146, %p147
    %p149 = scmp.ne.s32.totalorder %s141, %s144
    %p150 = scmp.eq.s32.totalorder %s11, 0
    %p151 = por %p149, %p150
    %p152 = scmp.ne.s32.totalorder %s141, %s144
    %p153 = scmp.eq.s32.totalorder %s16, 1
    %p154 = por %p152, %p153
    %p155 = scmp.ne.s32.totalorder %s144, %s145
    %p156 = scmp.eq.s32.totalorder %s16, 0
    %p157 = por %p155, %p156
    %p158 = scmp.ne.s32.totalorder %s144, %s145
    %p159 = scmp.eq.s32.totalorder %s17, 1
    %p160 = por %p158, %p159
    %p162 = scmp.ne.s32.totalorder %s145, %s161
    %p163 = scmp.eq.s32.totalorder %s17, 0
    %p164 = por %p162, %p163
    %p165 = scmp.le.s32.totalorder 1, %s11
    %p166 = scmp.lt.s32.totalorder %s11, 3
    %p167 = pnand %p165, %p166
    %p168 = pneg %p167
    // Predicated region
    $region9: #{fused_add_conv1x1_bn.1} parent=5 // pred_check
      _
    $region10: #{fused_add_conv1x1_bn.1} parent=5 // pred_check_branch
      %170 = sbr.rel (%p167) target = $region12
    $region11: #{fused_add_conv1x1_bn.1} parent=5 // pred_region
      %s171 = ssub.s32 %s11, 1
      // Predicated region
      $region13: #{fused_add_conv1x1_bn.1} parent=11 // pred_check
        %p172 = pneg %p32
      $region14: #{fused_add_conv1x1_bn.1} parent=11 // pred_check_branch
        %174 = sbr.rel (%p172) target = $region16
      $region15: #{fused_add_conv1x1_bn.1} parent=11 // pred_region
        _
      $region16: #{fused_add_conv1x1_bn.1} parent=11 // pred_fallthru
        _
      // Predicated region
      $region17: #{fused_add_conv1x1_bn.1} parent=11 // pred_check
        %p175 = pneg %p53
      $region18: #{fused_add_conv1x1_bn.1} parent=11 // pred_check_branch
        %177 = sbr.rel (%p175) target = $region20
      $region19: #{fused_add_conv1x1_bn.1} parent=11 // pred_region
        _
      $region20: #{fused_add_conv1x1_bn.1} parent=11 // pred_fallthru
        _
    $region12: #{fused_add_conv1x1_bn.1} parent=5 // pred_fallthru
      _
    %p178 = scmp.lt.s32.totalorder %s11, 2
    // Predicated region
    $region21: #{fused_add_conv1x1_bn.1} parent=5 // pred_check
      %p179 = pneg %p178
    $region22: #{fused_add_conv1x1_bn.1} parent=5 // pred_check_branch
      %181 = sbr.rel (%p179) target = $region24
    $region23: #{fused_add_conv1x1_bn.1} parent=5 // pred_region
      // Predicated region
      $region25: #{fused_add_conv1x1_bn.1} parent=23 // pred_check
        %p182 = pneg %p73
      $region26: #{fused_add_conv1x1_bn.1} parent=23 // pred_check_branch
        %184 = sbr.rel (%p182) target = $region28
      $region27: #{fused_add_conv1x1_bn.1} parent=23 // pred_region
        %s185 = smul.u32 66, %s11
        %p186 = scmp.lt.s32.totalorder %s185, 131
        %s187 = scalar_select %p186, %s185, 131
        %s188 = smul.addr %s187, 2
        %s189 = smul.addr %s188, 8
        %s190 = scalar_lea.vmem %s2, %s189
        %s191 = smul.u32 66, %s11
      $region28: #{fused_add_conv1x1_bn.1} parent=23 // pred_fallthru
        _
      // Predicated region
      $region29: #{fused_add_conv1x1_bn.1} parent=23 // pred_check
        %p192 = pneg %p99
      $region30: #{fused_add_conv1x1_bn.1} parent=23 // pred_check_branch
        %194 = sbr.rel (%p192) target = $region32
      $region31: #{fused_add_conv1x1_bn.1} parent=23 // pred_region
        %s195 = smul.u32 66, %s11
        %p196 = scmp.lt.s32.totalorder %s195, 131
        %s197 = scalar_select %p196, %s195, 131
        %s198 = smul.addr %s197, 8
        %s199 = scalar_lea.vmem %s3, %s198
        %s200 = smul.u32 66, %s11
      $region32: #{fused_add_conv1x1_bn.1} parent=23 // pred_fallthru
        _
      // Predicated region
      $region33: #{fused_add_conv1x1_bn.1} parent=23 // pred_check
        %p201 = pneg %p125
      $region34: #{fused_add_conv1x1_bn.1} parent=23 // pred_check_branch
        %203 = sbr.rel (%p201) target = $region36
      $region35: #{fused_add_conv1x1_bn.1} parent=23 // pred_region
        %s204 = smul.u32 66, %s11
        %p205 = scmp.lt.s32.totalorder %s204, 131
        %s206 = scalar_select %p205, %s204, 131
        %s207 = smul.addr %s206, 8
        %s208 = scalar_lea.vmem %s4, %s207
        %s209 = smul.u32 66, %s11
      $region36: #{fused_add_conv1x1_bn.1} parent=23 // pred_fallthru
        _
    $region24: #{fused_add_conv1x1_bn.1} parent=5 // pred_fallthru
      _
    %p210 = scmp.le.s32.totalorder 1, %s11
    %p211 = scmp.lt.s32.totalorder %s11, 3
    %p212 = pnand %p210, %p211
    %p213 = pneg %p212
    // Predicated region
    $region37: #{fused_add_conv1x1_bn.1} parent=5 // pred_check
      _
    $region38: #{fused_add_conv1x1_bn.1} parent=5 // pred_check_branch
      %215 = sbr.rel (%p212) target = $region40
    $region39: #{fused_add_conv1x1_bn.1} parent=5 // pred_region
      %s216 = ssub.s32 %s11, 1
      %p217 = pneg %p32
      %p218 = pneg %p29
      %p219 = pneg %p53
      %p220 = pneg %p50
      %s221 = smul.u32 66, %s16
      %p222 = scmp.lt.s32.totalorder %s221, 131
      %s223 = scalar_select %p222, %s221, 131
      %s224 = smul.addr %s223, 2
      %s225 = smul.addr %s224, 8
      %s226 = scalar_lea.vmem %s2, %s225
      %p227 = pneg %p79
      %p228 = pneg %p76
      %s229 = smul.u32 66, %s16
      %p230 = scmp.lt.s32.totalorder %s229, 131
      %s231 = scalar_select %p230, %s229, 131
      %s232 = smul.addr %s231, 8
      %s233 = scalar_lea.vmem %s3, %s232
      %p234 = pneg %p105
      %p235 = pneg %p102
      %s236 = smul.u32 66, %s16
      %p237 = scmp.lt.s32.totalorder %s236, 131
      %s238 = scalar_select %p237, %s236, 131
      %s239 = smul.addr %s238, 8
      %s240 = scalar_lea.vmem %s4, %s239
      %p241 = pneg %p131
      %p242 = pneg %p128
      %p243 = pneg %p157
      %p244 = pneg %p154
      %s245 = smul.u32 66, %s16
      %p246 = scmp.lt.s32.totalorder %s245, 131
      %s247 = scalar_select %p246, %s245, 131
      %s248 = smul.addr %s247, 2
      %s249 = smul.addr %s248, 8
      %s250 = scalar_lea.vmem %s5, %s249
      %s251 = smul.u32 66, %s16
      %p252 = scmp.lt.s32.totalorder %s251, 131
      %s253 = scalar_select %p252, %s251, 131
      %s254 = smul.addr %s253, 2
      %s255 = smul.addr %s254, 8
      %s256 = scalar_lea.vmem %s2, %s255
      %s257 = smul.u32 66, %s16
      %s258 = smul.u32 66, %s16
      %p259 = scmp.lt.s32.totalorder %s258, 131
      %s260 = scalar_select %p259, %s258, 131
      %s261 = smul.addr %s260, 8
      %s262 = scalar_lea.vmem %s3, %s261
      %s263 = smul.u32 66, %s16
      %s264 = smul.u32 66, %s16
      %p265 = scmp.lt.s32.totalorder %s264, 131
      %s266 = scalar_select %p265, %s264, 131
      %s267 = smul.addr %s266, 8
      %s268 = scalar_lea.vmem %s4, %s267
      %s269 = smul.u32 66, %s16
      %s270 = smul.u32 66, %s16
      %p271 = scmp.lt.s32.totalorder %s270, 131
      %s272 = scalar_select %p271, %s270, 131
      %s273 = smul.addr %s272, 2
      %s274 = smul.addr %s273, 8
      %s275 = scalar_lea.vmem %s5, %s274
      %s276 = smul.u32 66, %s16
      %v277 = vld [vmem:[%s0] sm:$0xff]
      %v278 = vld [vmem:[%s0 + $0x8] sm:$0xff]
      %v279 = vld [vmem:[%s0 + $0x10] sm:$0xff]
      %v280 = vld [vmem:[%s0 + $0x18] sm:$0xff]
      %v281 = vld [vmem:[%s0 + $0x20] sm:$0xff]
      %v282 = vld [vmem:[%s0 + $0x28] sm:$0xff]
      %v283 = vld [vmem:[%s0 + $0x30] sm:$0xff]
      %v284 = vld [vmem:[%s0 + $0x38] sm:$0xff]
      %v285 = vld [vmem:[%s0 + $0x40] sm:$0xff]
      %v286 = vld [vmem:[%s0 + $0x48] sm:$0xff]
      %v287 = vld [vmem:[%s0 + $0x50] sm:$0xff]
      %v288 = vld [vmem:[%s0 + $0x58] sm:$0xff]
      %v289 = vld [vmem:[%s0 + $0x60] sm:$0xff]
      %v290 = vld [vmem:[%s0 + $0x68] sm:$0xff]
      %v291 = vld [vmem:[%s0 + $0x70] sm:$0xff]
      %v292 = vld [vmem:[%s0 + $0x78] sm:$0xff]
      %v293 = vld [vmem:[%s0 + $0x80] sm:$0xff]
      %v294 = vld [vmem:[%s0 + $0x88] sm:$0xff]
      %v295 = vld [vmem:[%s0 + $0x90] sm:$0xff]
      %v296 = vld [vmem:[%s0 + $0x98] sm:$0xff]
      %v297 = vld [vmem:[%s0 + $0xa0] sm:$0xff]
      %v298 = vld [vmem:[%s0 + $0xa8] sm:$0xff]
      %v299 = vld [vmem:[%s0 + $0xb0] sm:$0xff]
      %v300 = vld [vmem:[%s0 + $0xb8] sm:$0xff]
      %v301 = vld [vmem:[%s0 + $0xc0] sm:$0xff]
      %v302 = vld [vmem:[%s0 + $0xc8] sm:$0xff]
      %v303 = vld [vmem:[%s0 + $0xd0] sm:$0xff]
      %v304 = vld [vmem:[%s0 + $0xd8] sm:$0xff]
      %v305 = vld [vmem:[%s0 + $0xe0] sm:$0xff]
      %v306 = vld [vmem:[%s0 + $0xe8] sm:$0xff]
      %v307 = vld [vmem:[%s0 + $0xf0] sm:$0xff]
      %v308 = vld [vmem:[%s0 + $0xf8] sm:$0xff]
      %v309 = vld [vmem:[%s0 + $0x100] sm:$0xff]
      %v310 = vld [vmem:[%s0 + $0x108] sm:$0xff]
      %v311 = vld [vmem:[%s0 + $0x110] sm:$0xff]
      %v312 = vld [vmem:[%s0 + $0x118] sm:$0xff]
      %v313 = vld [vmem:[%s0 + $0x120] sm:$0xff]
      %v314 = vld [vmem:[%s0 + $0x128] sm:$0xff]
      %v315 = vld [vmem:[%s0 + $0x130] sm:$0xff]
      %v316 = vld [vmem:[%s0 + $0x138] sm:$0xff]
      %v317 = vld [vmem:[%s0 + $0x140] sm:$0xff]
      %v318 = vld [vmem:[%s0 + $0x148] sm:$0xff]
      %v319 = vld [vmem:[%s0 + $0x150] sm:$0xff]
      %v320 = vld [vmem:[%s0 + $0x158] sm:$0xff]
      %v321 = vld [vmem:[%s1] sm:$0xff]
      %v322 = vld [vmem:[%s1 + $0x8] sm:$0xff]
      %v323 = vld [vmem:[%s1 + $0x10] sm:$0xff]
      %v324 = vld [vmem:[%s1 + $0x18] sm:$0xff]
      %v325 = vld [vmem:[%s1 + $0x20] sm:$0xff]
      %v326 = vld [vmem:[%s1 + $0x28] sm:$0xff]
      %v327 = vld [vmem:[%s1 + $0x30] sm:$0xff]
      %v328 = vld [vmem:[%s1 + $0x38] sm:$0xff]
      %v329 = vld [vmem:[%s1 + $0x40] sm:$0xff]
      %v330 = vld [vmem:[%s1 + $0x48] sm:$0xff]
      %v331 = vld [vmem:[%s1 + $0x50] sm:$0xff]
      %v332 = vld [vmem:[%s1 + $0x58] sm:$0xff]
      %v333 = vld [vmem:[%s1 + $0x60] sm:$0xff]
      %v334 = vld [vmem:[%s1 + $0x68] sm:$0xff]
      %v335 = vld [vmem:[%s1 + $0x70] sm:$0xff]
      %v336 = vld [vmem:[%s1 + $0x78] sm:$0xff]
      %v337 = vld [vmem:[%s1 + $0x80] sm:$0xff]
      %v338 = vld [vmem:[%s1 + $0x88] sm:$0xff]
      %v339 = vld [vmem:[%s1 + $0x90] sm:$0xff]
      %v340 = vld [vmem:[%s1 + $0x98] sm:$0xff]
      %v341 = vld [vmem:[%s1 + $0xa0] sm:$0xff]
      %v342 = vld [vmem:[%s1 + $0xa8] sm:$0xff]
      %v343 = vld [vmem:[%s1 + $0xb0] sm:$0xff]
      %v344 = vld [vmem:[%s1 + $0xb8] sm:$0xff]
      %v345 = vld [vmem:[%s1 + $0xc0] sm:$0xff]
      %v346 = vld [vmem:[%s1 + $0xc8] sm:$0xff]
      %v347 = vld [vmem:[%s1 + $0xd0] sm:$0xff]
      %v348 = vld [vmem:[%s1 + $0xd8] sm:$0xff]
      %v349 = vld [vmem:[%s1 + $0xe0] sm:$0xff]
      %v350 = vld [vmem:[%s1 + $0xe8] sm:$0xff]
      %v351 = vld [vmem:[%s1 + $0xf0] sm:$0xff]
      %v352 = vld [vmem:[%s1 + $0xf8] sm:$0xff]
      %v353 = vld [vmem:[%s1 + $0x100] sm:$0xff]
      %v354 = vld [vmem:[%s1 + $0x108] sm:$0xff]
      %v355 = vld [vmem:[%s1 + $0x110] sm:$0xff]
      %v356 = vld [vmem:[%s1 + $0x118] sm:$0xff]
      %v357 = vld [vmem:[%s1 + $0x120] sm:$0xff]
      %v358 = vld [vmem:[%s1 + $0x128] sm:$0xff]
      %v359 = vld [vmem:[%s1 + $0x130] sm:$0xff]
      %v360 = vld [vmem:[%s1 + $0x138] sm:$0xff]
      %v361 = vld [vmem:[%s1 + $0x140] sm:$0xff]
      %v362 = vld [vmem:[%s1 + $0x148] sm:$0xff]
      %v363 = vld [vmem:[%s1 + $0x150] sm:$0xff]
      %v364 = vld [vmem:[%s1 + $0x158] sm:$0xff]
      %v365 = vadd.f32 %v277, %v321
      %v366 = vadd.f32 %v278, %v322
      %v367 = vadd.f32 %v279, %v323
      %v368 = vadd.f32 %v280, %v324
      %v369 = vadd.f32 %v281, %v325
      %v370 = vadd.f32 %v282, %v326
      %v371 = vadd.f32 %v283, %v327
      %v372 = vadd.f32 %v284, %v328
      %v373 = vadd.f32 %v285, %v329
      %v374 = vadd.f32 %v286, %v330
      %v375 = vadd.f32 %v287, %v331
      %v376 = vadd.f32 %v288, %v332
      %v377 = vadd.f32 %v289, %v333
      %v378 = vadd.f32 %v290, %v334
      %v379 = vadd.f32 %v291, %v335
      %v380 = vadd.f32 %v292, %v336
      %v381 = vadd.f32 %v293, %v337
      %v382 = vadd.f32 %v294, %v338
      %v383 = vadd.f32 %v295, %v339
      %v384 = vadd.f32 %v296, %v340
      %v385 = vadd.f32 %v297, %v341
      %v386 = vadd.f32 %v298, %v342
      %v387 = vadd.f32 %v299, %v343
      %v388 = vadd.f32 %v300, %v344
      %v389 = vadd.f32 %v301, %v345
      %v390 = vadd.f32 %v302, %v346
      %v391 = vadd.f32 %v303, %v347
      %v392 = vadd.f32 %v304, %v348
      %v393 = vadd.f32 %v305, %v349
      %v394 = vadd.f32 %v306, %v350
      %v395 = vadd.f32 %v307, %v351
      %v396 = vadd.f32 %v308, %v352
      %v397 = vadd.f32 %v309, %v353
      %v398 = vadd.f32 %v310, %v354
      %v399 = vadd.f32 %v311, %v355
      %v400 = vadd.f32 %v312, %v356
      %v401 = vadd.f32 %v313, %v357
      %v402 = vadd.f32 %v314, %v358
      %v403 = vadd.f32 %v315, %v359
      %v404 = vadd.f32 %v316, %v360
      %v405 = vadd.f32 %v317, %v361
      %v406 = vadd.f32 %v318, %v362
      %v407 = vadd.f32 %v319, %v363
      %v408 = vadd.f32 %v320, %v364
      %v409 = vld [vmem:[%s256] sm:$0xff]
      %v410 = vld [vmem:[%s256 + $0x8] sm:$0xff]
      %v411 = vld [vmem:[%s256 + $0x10] sm:$0xff]
      %v412 = vld [vmem:[%s256 + $0x18] sm:$0xff]
      %v413 = vld [vmem:[%s256 + $0x20] sm:$0xff]
      %v414 = vld [vmem:[%s256 + $0x28] sm:$0xff]
      %v415 = vld [vmem:[%s256 + $0x30] sm:$0xff]
      %v416 = vld [vmem:[%s256 + $0x38] sm:$0xff]
      %v417 = vld [vmem:[%s256 + $0x40] sm:$0xff]
      %v418 = vld [vmem:[%s256 + $0x48] sm:$0xff]
      %v419 = vld [vmem:[%s256 + $0x50] sm:$0xff]
      %v420 = vld [vmem:[%s256 + $0x58] sm:$0xff]
      %v421 = vld [vmem:[%s256 + $0x60] sm:$0xff]
      %v422 = vld [vmem:[%s256 + $0x68] sm:$0xff]
      %v423 = vld [vmem:[%s256 + $0x70] sm:$0xff]
      %v424 = vld [vmem:[%s256 + $0x78] sm:$0xff]
      %v425 = vld [vmem:[%s256 + $0x80] sm:$0xff]
      %v426 = vld [vmem:[%s256 + $0x88] sm:$0xff]
      %v427 = vld [vmem:[%s256 + $0x90] sm:$0xff]
      %v428 = vld [vmem:[%s256 + $0x98] sm:$0xff]
      %v429 = vld [vmem:[%s256 + $0xa0] sm:$0xff]
      %v430 = vld [vmem:[%s256 + $0xa8] sm:$0xff]
      %v431 = vld [vmem:[%s256 + $0xb0] sm:$0xff]
      %v432 = vld [vmem:[%s256 + $0xb8] sm:$0xff]
      %v433 = vld [vmem:[%s256 + $0xc0] sm:$0xff]
      %v434 = vld [vmem:[%s256 + $0xc8] sm:$0xff]
      %v435 = vld [vmem:[%s256 + $0xd0] sm:$0xff]
      %v436 = vld [vmem:[%s256 + $0xd8] sm:$0xff]
      %v437 = vld [vmem:[%s256 + $0xe0] sm:$0xff]
      %v438 = vld [vmem:[%s256 + $0xe8] sm:$0xff]
      %v439 = vld [vmem:[%s256 + $0xf0] sm:$0xff]
      %v440 = vld [vmem:[%s256 + $0xf8] sm:$0xff]
      %v441 = vld [vmem:[%s256 + $0x100] sm:$0xff]
      %v442 = vld [vmem:[%s256 + $0x108] sm:$0xff]
      %v443 = vld [vmem:[%s256 + $0x110] sm:$0xff]
      %v444 = vld [vmem:[%s256 + $0x118] sm:$0xff]
      %v445 = vld [vmem:[%s256 + $0x120] sm:$0xff]
      %v446 = vld [vmem:[%s256 + $0x128] sm:$0xff]
      %v447 = vld [vmem:[%s256 + $0x130] sm:$0xff]
      %v448 = vld [vmem:[%s256 + $0x138] sm:$0xff]
      %v449 = vld [vmem:[%s256 + $0x140] sm:$0xff]
      %v450 = vld [vmem:[%s256 + $0x148] sm:$0xff]
      %v451 = vld [vmem:[%s256 + $0x150] sm:$0xff]
      %v452 = vld [vmem:[%s256 + $0x158] sm:$0xff]
      %v453 = vld [vmem:[%s256 + $0x160] sm:$0xff]
      %v454 = vld [vmem:[%s256 + $0x168] sm:$0xff]
      %v455 = vld [vmem:[%s256 + $0x170] sm:$0xff]
      %v456 = vld [vmem:[%s256 + $0x178] sm:$0xff]
      %v457 = vld [vmem:[%s256 + $0x180] sm:$0xff]
      %v458 = vld [vmem:[%s256 + $0x188] sm:$0xff]
      %v459 = vld [vmem:[%s256 + $0x190] sm:$0xff]
      %v460 = vld [vmem:[%s256 + $0x198] sm:$0xff]
      %v461 = vld [vmem:[%s256 + $0x1a0] sm:$0xff]
      %v462 = vld [vmem:[%s256 + $0x1a8] sm:$0xff]
      %v463 = vld [vmem:[%s256 + $0x1b0] sm:$0xff]
      %v464 = vld [vmem:[%s256 + $0x1b8] sm:$0xff]
      %v465 = vld [vmem:[%s256 + $0x1c0] sm:$0xff]
      %v466 = vld [vmem:[%s256 + $0x1c8] sm:$0xff]
      %v467 = vld [vmem:[%s256 + $0x1d0] sm:$0xff]
      %v468 = vld [vmem:[%s256 + $0x1d8] sm:$0xff]
      %v469 = vld [vmem:[%s256 + $0x1e0] sm:$0xff]
      %v470 = vld [vmem:[%s256 + $0x1e8] sm:$0xff]
      %v471 = vld [vmem:[%s256 + $0x1f0] sm:$0xff]
      %v472 = vld [vmem:[%s256 + $0x1f8] sm:$0xff]
      %v473 = vld [vmem:[%s256 + $0x200] sm:$0xff]
      %v474 = vld [vmem:[%s256 + $0x208] sm:$0xff]
      %v475 = vld [vmem:[%s256 + $0x210] sm:$0xff]
      %v476 = vld [vmem:[%s256 + $0x218] sm:$0xff]
      %v477 = vld [vmem:[%s256 + $0x220] sm:$0xff]
      %v478 = vld [vmem:[%s256 + $0x228] sm:$0xff]
      %v479 = vld [vmem:[%s256 + $0x230] sm:$0xff]
      %v480 = vld [vmem:[%s256 + $0x238] sm:$0xff]
      %v481 = vld [vmem:[%s256 + $0x240] sm:$0xff]
      %v482 = vld [vmem:[%s256 + $0x248] sm:$0xff]
      %v483 = vld [vmem:[%s256 + $0x250] sm:$0xff]
      %v484 = vld [vmem:[%s256 + $0x258] sm:$0xff]
      %v485 = vld [vmem:[%s256 + $0x260] sm:$0xff]
      %v486 = vld [vmem:[%s256 + $0x268] sm:$0xff]
      %v487 = vld [vmem:[%s256 + $0x270] sm:$0xff]
      %v488 = vld [vmem:[%s256 + $0x278] sm:$0xff]
      %v489 = vld [vmem:[%s256 + $0x280] sm:$0xff]
      %v490 = vld [vmem:[%s256 + $0x288] sm:$0xff]
      %v491 = vld [vmem:[%s256 + $0x290] sm:$0xff]
      %v492 = vld [vmem:[%s256 + $0x298] sm:$0xff]
      %v493 = vld [vmem:[%s256 + $0x2a0] sm:$0xff]
      %v494 = vld [vmem:[%s256 + $0x2a8] sm:$0xff]
      %v495 = vld [vmem:[%s256 + $0x2b0] sm:$0xff]
      %v496 = vld [vmem:[%s256 + $0x2b8] sm:$0xff]
      %v497 = vld [vmem:[%s256 + $0x2c0] sm:$0xff]
      %v498 = vld [vmem:[%s256 + $0x2c8] sm:$0xff]
      %v499 = vld [vmem:[%s256 + $0x2d0] sm:$0xff]
      %v500 = vld [vmem:[%s256 + $0x2d8] sm:$0xff]
      %v501 = vld [vmem:[%s256 + $0x2e0] sm:$0xff]
      %v502 = vld [vmem:[%s256 + $0x2e8] sm:$0xff]
      %v503 = vld [vmem:[%s256 + $0x2f0] sm:$0xff]
      %v504 = vld [vmem:[%s256 + $0x2f8] sm:$0xff]
      %v505 = vld [vmem:[%s256 + $0x300] sm:$0xff]
      %v506 = vld [vmem:[%s256 + $0x308] sm:$0xff]
      %v507 = vld [vmem:[%s256 + $0x310] sm:$0xff]
      %v508 = vld [vmem:[%s256 + $0x318] sm:$0xff]
      %v509 = vld [vmem:[%s256 + $0x320] sm:$0xff]
      %v510 = vld [vmem:[%s256 + $0x328] sm:$0xff]
      %v511 = vld [vmem:[%s256 + $0x330] sm:$0xff]
      %v512 = vld [vmem:[%s256 + $0x338] sm:$0xff]
      %v513 = vld [vmem:[%s256 + $0x340] sm:$0xff]
      %v514 = vld [vmem:[%s256 + $0x348] sm:$0xff]
      %v515 = vld [vmem:[%s256 + $0x350] sm:$0xff]
      %v516 = vld [vmem:[%s256 + $0x358] sm:$0xff]
      %v517 = vld [vmem:[%s256 + $0x360] sm:$0xff]
      %v518 = vld [vmem:[%s256 + $0x368] sm:$0xff]
      %v519 = vld [vmem:[%s256 + $0x370] sm:$0xff]
      %v520 = vld [vmem:[%s256 + $0x378] sm:$0xff]
      %v521 = vld [vmem:[%s256 + $0x380] sm:$0xff]
      %v522 = vld [vmem:[%s256 + $0x388] sm:$0xff]
      %v523 = vld [vmem:[%s256 + $0x390] sm:$0xff]
      %v524 = vld [vmem:[%s256 + $0x398] sm:$0xff]
      %v525 = vld [vmem:[%s256 + $0x3a0] sm:$0xff]
      %v526 = vld [vmem:[%s256 + $0x3a8] sm:$0xff]
      %v527 = vld [vmem:[%s256 + $0x3b0] sm:$0xff]
      %v528 = vld [vmem:[%s256 + $0x3b8] sm:$0xff]
      %v529 = vld [vmem:[%s256 + $0x3c0] sm:$0xff]
      %v530 = vld [vmem:[%s256 + $0x3c8] sm:$0xff]
      %v531 = vld [vmem:[%s256 + $0x3d0] sm:$0xff]
      %v532 = vld [vmem:[%s256 + $0x3d8] sm:$0xff]
      %v533 = vld [vmem:[%s256 + $0x3e0] sm:$0xff]
      %v534 = vld [vmem:[%s256 + $0x3e8] sm:$0xff]
      %v535 = vld [vmem:[%s256 + $0x3f0] sm:$0xff]
      %v536 = vld [vmem:[%s256 + $0x3f8] sm:$0xff]
      %v537 = vld [vmem:[%s256 + $0x400] sm:$0xff]
      %v538 = vld [vmem:[%s256 + $0x408] sm:$0xff]
      %v539 = vld [vmem:[%s256 + $0x410] sm:$0xff]
      %v540 = vld [vmem:[%s256 + $0x418] sm:$0xff]
      %vm541 = vcmask 392192
      %v543 = vsel %vm541, %v410, 0
      %v546 = vsel %vm541, %v412, 0
      %v549 = vsel %vm541, %v414, 0
      %v552 = vsel %vm541, %v416, 0
      %v555 = vsel %vm541, %v418, 0
      %v558 = vsel %vm541, %v420, 0
      %v561 = vsel %vm541, %v422, 0
      %v564 = vsel %vm541, %v424, 0
      %v567 = vsel %vm541, %v426, 0
      %v570 = vsel %vm541, %v428, 0
      %v573 = vsel %vm541, %v430, 0
      %v576 = vsel %vm541, %v432, 0
      %v579 = vsel %vm541, %v434, 0
      %v582 = vsel %vm541, %v436, 0
      %v585 = vsel %vm541, %v438, 0
      %v588 = vsel %vm541, %v440, 0
      %v591 = vsel %vm541, %v442, 0
      %v594 = vsel %vm541, %v444, 0
      %v597 = vsel %vm541, %v446, 0
      %v600 = vsel %vm541, %v448, 0
      %v603 = vsel %vm541, %v450, 0
      %v606 = vsel %vm541, %v452, 0
      %v609 = vsel %vm541, %v454, 0
      %v612 = vsel %vm541, %v456, 0
      %v615 = vsel %vm541, %v458, 0
      %v618 = vsel %vm541, %v460, 0
      %v621 = vsel %vm541, %v462, 0
      %v624 = vsel %vm541, %v464, 0
      %v627 = vsel %vm541, %v466, 0
      %v630 = vsel %vm541, %v468, 0
      %v633 = vsel %vm541, %v470, 0
      %v636 = vsel %vm541, %v472, 0
      %v639 = vsel %vm541, %v474, 0
      %v642 = vsel %vm541, %v476, 0
      %v645 = vsel %vm541, %v478, 0
      %v648 = vsel %vm541, %v480, 0
      %v651 = vsel %vm541, %v482, 0
      %v654 = vsel %vm541, %v484, 0
      %v657 = vsel %vm541, %v486, 0
      %v660 = vsel %vm541, %v488, 0
      %v663 = vsel %vm541, %v490, 0
      %v666 = vsel %vm541, %v492, 0
      %v669 = vsel %vm541, %v494, 0
      %v672 = vsel %vm541, %v496, 0
      %v675 = vsel %vm541, %v498, 0
      %v678 = vsel %vm541, %v500, 0
      %v681 = vsel %vm541, %v502, 0
      %v684 = vsel %vm541, %v504, 0
      %v687 = vsel %vm541, %v506, 0
      %v690 = vsel %vm541, %v508, 0
      %v693 = vsel %vm541, %v510, 0
      %v696 = vsel %vm541, %v512, 0
      %v699 = vsel %vm541, %v514, 0
      %v702 = vsel %vm541, %v516, 0
      %v705 = vsel %vm541, %v518, 0
      %v708 = vsel %vm541, %v520, 0
      %v711 = vsel %vm541, %v522, 0
      %v714 = vsel %vm541, %v524, 0
      %v717 = vsel %vm541, %v526, 0
      %v720 = vsel %vm541, %v528, 0
      %v723 = vsel %vm541, %v530, 0
      %v726 = vsel %vm541, %v532, 0
      %v729 = vsel %vm541, %v534, 0
      %v732 = vsel %vm541, %v536, 0
      %v735 = vsel %vm541, %v538, 0
      %v738 = vsel %vm541, %v540, 0
      %740 = vmatprep.subr.mxu0 %v366
      %741 = vmatpush1.msra.mxu0 %v365
      %742 = vmatprep.subr.mxu0 %v368
      %743 = vmatpush1.msra.mxu0 %v367
      %744 = vmatprep.subr.mxu0 %v370
      %745 = vmatpush1.msra.mxu0 %v369
      %746 = vmatprep.subr.mxu0 %v372
      %747 = vmatpush1.msra.mxu0 %v371
      %748 = vmatprep.subr.mxu0 %v374
      %749 = vmatpush1.msra.mxu0 %v373
      %750 = vmatprep.subr.mxu0 %v376
      %751 = vmatpush1.msra.mxu0 %v375
      %752 = vmatprep.subr.mxu0 %v378
      %753 = vmatpush1.msra.mxu0 %v377
      %754 = vmatprep.subr.mxu0 %v380
      %755 = vmatpush1.msra.mxu0 %v379
      %756 = vmatprep.subr.mxu0 %v382
      %757 = vmatpush1.msra.mxu0 %v381
      %758 = vmatprep.subr.mxu0 %v384
      %759 = vmatpush1.msra.mxu0 %v383
      %760 = vmatprep.subr.mxu0 %v386
      %761 = vmatpush1.msra.mxu0 %v385
      %762 = vmatprep.subr.mxu0 %v388
      %763 = vmatpush1.msra.mxu0 %v387
      %764 = vmatprep.subr.mxu0 %v390
      %765 = vmatpush1.msra.mxu0 %v389
      %766 = vmatprep.subr.mxu0 %v392
      %767 = vmatpush1.msra.mxu0 %v391
      %768 = vmatprep.subr.mxu0 %v394
      %769 = vmatpush1.msra.mxu0 %v393
      %770 = vmatprep.subr.mxu0 %v396
      %771 = vmatpush1.msra.mxu0 %v395
      %772 = vmatprep.subr.mxu0 %v398
      %773 = vmatpush1.msra.mxu0 %v397
      %774 = vmatprep.subr.mxu0 %v400
      %775 = vmatpush1.msra.mxu0 %v399
      %776 = vmatprep.subr.mxu0 %v402
      %777 = vmatpush1.msra.mxu0 %v401
      %778 = vmatprep.subr.mxu0 %v404
      %779 = vmatpush1.msra.mxu0 %v403
      %780 = vmatprep.subr.mxu0 %v406
      %781 = vmatpush1.msra.mxu0 %v405
      %782 = vmatprep.subr.mxu0 %v408
      %783 = vmatpush1.msra.mxu0 %v407
      %784 = vmatprep.subr.mxu0 0.0
      %785 = vmatpush1.msra.mxu0 0.0
      %786 = vmatprep.subr.mxu0 0.0
      %787 = vmatpush1.msra.mxu0 0.0
      %788 = vmatprep.subr.mxu0 0.0
      %789 = vmatpush1.msra.mxu0 0.0
      %790 = vmatprep.subr.mxu0 0.0
      %791 = vmatpush1.msra.mxu0 0.0
      %792 = vmatprep.subr.mxu0 0.0
      %793 = vmatpush1.msra.mxu0 0.0
      %794 = vmatprep.subr.mxu0 0.0
      %795 = vmatpush1.msra.mxu0 0.0
      %796 = vmatprep.subr.mxu0 0.0
      %797 = vmatpush1.msra.mxu0 0.0
      %798 = vmatprep.subr.mxu0 0.0
      %799 = vmatpush1.msra.mxu0 0.0
      %800 = vmatprep.subr.mxu0 0.0
      %801 = vmatpush1.msra.mxu0 0.0
      %802 = vmatprep.subr.mxu0 0.0
      %803 = vmatpush1.msra.mxu0 0.0
      %804 = vmatprep.mubr.f32.mxu0 %v543
      %805 = vmatmul.mubr.f32.gmra.mrb[0].mxu0 %v409
      %v806 = vpop.f32.mrb[0].mxu0
      %v807 = vadd.f32 0.0, %v806
      %v808 = vpop.f32.mrb[0].mxu0
      %v809 = vadd.f32 0.0, %v808
      %810 = vmatprep.mubr.f32.mxu0 %v546
      %811 = vmatmul.mubr.f32.gmra.mrb[0].mxu0 %v411
      %v812 = vpop.f32.mrb[0].mxu0
      %v813 = vadd.f32 0.0, %v812
      %v814 = vpop.f32.mrb[0].mxu0
      %v815 = vadd.f32 0.0, %v814
      %816 = vmatprep.mubr.f32.mxu0 %v549
      %817 = vmatmul.mubr.f32.gmra.mrb[0].mxu0 %v413
      %v818 = vpop.f32.mrb[0].mxu0
      %v819 = vadd.f32 0.0, %v818
      %v820 = vpop.f32.mrb[0].mxu0
      %v821 = vadd.f32 0.0, %v820
      %822 = vmatprep.mubr.f32.mxu0 %v552
      %823 = vmatmul.mubr.f32.gmra.mrb[0].mxu0 %v415
      %v824 = vpop.f32.mrb[0].mxu0
      %v825 = vadd.f32 0.0, %v824
      %v826 = vpop.f32.mrb[0].mxu0
      %v827 = vadd.f32 0.0, %v826
      %828 = vmatprep.mubr.f32.mxu0 %v555
      %829 = vmatmul.mubr.f32.gmra.mrb[0].mxu0 %v417
      %v830 = vpop.f32.mrb[0].mxu0
      %v831 = vadd.f32 0.0, %v830
      %v832 = vpop.f32.mrb[0].mxu0
      %v833 = vadd.f32 0.0, %v832
      %834 = vmatprep.mubr.f32.mxu0 %v558
      %835 = vmatmul.mubr.f32.gmra.mrb[0].mxu0 %v419
      %v836 = vpop.f32.mrb[0].mxu0
      %v837 = vadd.f32 0.0, %v836
      %v838 = vpop.f32.mrb[0].mxu0
      %v839 = vadd.f32 0.0, %v838
      %840 = vmatprep.mubr.f32.mxu0 %v561
      %841 = vmatmul.mubr.f32.gmra.mrb[0].mxu0 %v421
      %v842 = vpop.f32.mrb[0].mxu0
      %v843 = vadd.f32 0.0, %v842
      %v844 = vpop.f32.mrb[0].mxu0
      %v845 = vadd.f32 0.0, %v844
      %846 = vmatprep.mubr.f32.mxu0 %v564
      %847 = vmatmul.mubr.f32.gmra.mrb[0].mxu0 %v423
      %v848 = vpop.f32.mrb[0].mxu0
      %v849 = vadd.f32 0.0, %v848
      %v850 = vpop.f32.mrb[0].mxu0
      %v851 = vadd.f32 0.0, %v850
      %852 = vmatprep.mubr.f32.mxu0 %v567
      %853 = vmatmul.mubr.f32.gmra.mrb[0].mxu0 %v425
      %v854 = vpop.f32.mrb[0].mxu0
      %v855 = vadd.f32 0.0, %v854
      %v856 = vpop.f32.mrb[0].mxu0
      %v857 = vadd.f32 0.0, %v856
      %858 = vmatprep.mubr.f32.mxu0 %v570
      %859 = vmatmul.mubr.f32.gmra.mrb[0].mxu0 %v427
      %v860 = vpop.f32.mrb[0].mxu0
      %v861 = vadd.f32 0.0, %v860
      %v862 = vpop.f32.mrb[0].mxu0
      %v863 = vadd.f32 0.0, %v862
      %864 = vmatprep.mubr.f32.mxu0 %v573
      %865 = vmatmul.mubr.f32.gmra.mrb[0].mxu0 %v429
      %v866 = vpop.f32.mrb[0].mxu0
      %v867 = vadd.f32 0.0, %v866
      %v868 = vpop.f32.mrb[0].mxu0
      %v869 = vadd.f32 0.0, %v868
      %870 = vmatprep.mubr.f32.mxu0 %v576
      %871 = vmatmul.mubr.f32.gmra.mrb[0].mxu0 %v431
      %v872 = vpop.f32.mrb[0].mxu0
      %v873 = vadd.f32 0.0, %v872
      %v874 = vpop.f32.mrb[0].mxu0
      %v875 = vadd.f32 0.0, %v874
      %876 = vmatprep.mubr.f32.mxu0 %v579
      %877 = vmatmul.mubr.f32.gmra.mrb[0].mxu0 %v433
      %v878 = vpop.f32.mrb[0].mxu0
      %v879 = vadd.f32 0.0, %v878
      %v880 = vpop.f32.mrb[0].mxu0
      %v881 = vadd.f32 0.0, %v880
      %882 = vmatprep.mubr.f32.mxu0 %v582
      %883 = vmatmul.mubr.f32.gmra.mrb[0].mxu0 %v435
      %v884 = vpop.f32.mrb[0].mxu0
      %v885 = vadd.f32 0.0, %v884
      %v886 = vpop.f32.mrb[0].mxu0
      %v887 = vadd.f32 0.0, %v886
      %888 = vmatprep.mubr.f32.mxu0 %v585
      %889 = vmatmul.mubr.f32.gmra.mrb[0].mxu0 %v437
      %v890 = vpop.f32.mrb[0].mxu0
      %v891 = vadd.f32 0.0, %v890
      %v892 = vpop.f32.mrb[0].mxu0
      %v893 = vadd.f32 0.0, %v892
      %894 = vmatprep.mubr.f32.mxu0 %v588
      %895 = vmatmul.mubr.f32.gmra.mrb[0].mxu0 %v439
      %v896 = vpop.f32.mrb[0].mxu0
      %v897 = vadd.f32 0.0, %v896
      %v898 = vpop.f32.mrb[0].mxu0
      %v899 = vadd.f32 0.0, %v898
      %900 = vmatprep.mubr.f32.mxu0 %v591
      %901 = vmatmul.mubr.f32.gmra.mrb[0].mxu0 %v441
      %v902 = vpop.f32.mrb[0].mxu0
      %v903 = vadd.f32 0.0, %v902
      %v904 = vpop.f32.mrb[0].mxu0
      %v905 = vadd.f32 0.0, %v904
      %906 = vmatprep.mubr.f32.mxu0 %v594
      %907 = vmatmul.mubr.f32.gmra.mrb[0].mxu0 %v443
      %v908 = vpop.f32.mrb[0].mxu0
      %v909 = vadd.f32 0.0, %v908
      %v910 = vpop.f32.mrb[0].mxu0
      %v911 = vadd.f32 0.0, %v910
      %912 = vmatprep.mubr.f32.mxu0 %v597
      %913 = vmatmul.mubr.f32.gmra.mrb[0].mxu0 %v445
      %v914 = vpop.f32.mrb[0].mxu0
      %v915 = vadd.f32 0.0, %v914
      %v916 = vpop.f32.mrb[0].mxu0
      %v917 = vadd.f32 0.0, %v916
      %918 = vmatprep.mubr.f32.mxu0 %v600
      %919 = vmatmul.mubr.f32.gmra.mrb[0].mxu0 %v447
      %v920 = vpop.f32.mrb[0].mxu0
      %v921 = vadd.f32 0.0, %v920
      %v922 = vpop.f32.mrb[0].mxu0
      %v923 = vadd.f32 0.0, %v922
      %924 = vmatprep.mubr.f32.mxu0 %v603
      %925 = vmatmul.mubr.f32.gmra.mrb[0].mxu0 %v449
      %v926 = vpop.f32.mrb[0].mxu0
      %v927 = vadd.f32 0.0, %v926
      %v928 = vpop.f32.mrb[0].mxu0
      %v929 = vadd.f32 0.0, %v928
      %930 = vmatprep.mubr.f32.mxu0 %v606
      %931 = vmatmul.mubr.f32.gmra.mrb[0].mxu0 %v451
      %v932 = vpop.f32.mrb[0].mxu0
      %v933 = vadd.f32 0.0, %v932
      %v934 = vpop.f32.mrb[0].mxu0
      %v935 = vadd.f32 0.0, %v934
      %936 = vmatprep.mubr.f32.mxu0 %v609
      %937 = vmatmul.mubr.f32.gmra.mrb[0].mxu0 %v453
      %v938 = vpop.f32.mrb[0].mxu0
      %v939 = vadd.f32 0.0, %v938
      %v940 = vpop.f32.mrb[0].mxu0
      %v941 = vadd.f32 0.0, %v940
      %942 = vmatprep.mubr.f32.mxu0 %v612
      %943 = vmatmul.mubr.f32.gmra.mrb[0].mxu0 %v455
      %v944 = vpop.f32.mrb[0].mxu0
      %v945 = vadd.f32 0.0, %v944
      %v946 = vpop.f32.mrb[0].mxu0
      %v947 = vadd.f32 0.0, %v946
      %948 = vmatprep.mubr.f32.mxu0 %v615
      %949 = vmatmul.mubr.f32.gmra.mrb[0].mxu0 %v457
      %v950 = vpop.f32.mrb[0].mxu0
      %v951 = vadd.f32 0.0, %v950
      %v952 = vpop.f32.mrb[0].mxu0
      %v953 = vadd.f32 0.0, %v952
      %954 = vmatprep.mubr.f32.mxu0 %v618
      %955 = vmatmul.mubr.f32.gmra.mrb[0].mxu0 %v459
      %v956 = vpop.f32.mrb[0].mxu0
      %v957 = vadd.f32 0.0, %v956
      %v958 = vpop.f32.mrb[0].mxu0
      %v959 = vadd.f32 0.0, %v958
      %960 = vmatprep.mubr.f32.mxu0 %v621
      %961 = vmatmul.mubr.f32.gmra.mrb[0].mxu0 %v461
      %v962 = vpop.f32.mrb[0].mxu0
      %v963 = vadd.f32 0.0, %v962
      %v964 = vpop.f32.mrb[0].mxu0
      %v965 = vadd.f32 0.0, %v964
      %966 = vmatprep.mubr.f32.mxu0 %v624
      %967 = vmatmul.mubr.f32.gmra.mrb[0].mxu0 %v463
      %v968 = vpop.f32.mrb[0].mxu0
      %v969 = vadd.f32 0.0, %v968
      %v970 = vpop.f32.mrb[0].mxu0
      %v971 = vadd.f32 0.0, %v970
      %972 = vmatprep.mubr.f32.mxu0 %v627
      %973 = vmatmul.mubr.f32.gmra.mrb[0].mxu0 %v465
      %v974 = vpop.f32.mrb[0].mxu0
      %v975 = vadd.f32 0.0, %v974
      %v976 = vpop.f32.mrb[0].mxu0
      %v977 = vadd.f32 0.0, %v976
      %978 = vmatprep.mubr.f32.mxu0 %v630
      %979 = vmatmul.mubr.f32.gmra.mrb[0].mxu0 %v467
      %v980 = vpop.f32.mrb[0].mxu0
      %v981 = vadd.f32 0.0, %v980
      %v982 = vpop.f32.mrb[0].mxu0
      %v983 = vadd.f32 0.0, %v982
      %984 = vmatprep.mubr.f32.mxu0 %v633
      %985 = vmatmul.mubr.f32.gmra.mrb[0].mxu0 %v469
      %v986 = vpop.f32.mrb[0].mxu0
      %v987 = vadd.f32 0.0, %v986
      %v988 = vpop.f32.mrb[0].mxu0
      %v989 = vadd.f32 0.0, %v988
      %990 = vmatprep.mubr.f32.mxu0 %v636
      %991 = vmatmul.mubr.f32.gmra.mrb[0].mxu0 %v471
      %v992 = vpop.f32.mrb[0].mxu0
      %v993 = vadd.f32 0.0, %v992
      %v994 = vpop.f32.mrb[0].mxu0
      %v995 = vadd.f32 0.0, %v994
      %996 = vmatprep.mubr.f32.mxu0 %v639
      %997 = vmatmul.mubr.f32.gmra.mrb[0].mxu0 %v473
      %v998 = vpop.f32.mrb[0].mxu0
      %v999 = vadd.f32 0.0, %v998
      %v1000 = vpop.f32.mrb[0].mxu0
      %v1001 = vadd.f32 0.0, %v1000
      %1002 = vmatprep.mubr.f32.mxu0 %v642
      %1003 = vmatmul.mubr.f32.gmra.mrb[0].mxu0 %v475
      %v1004 = vpop.f32.mrb[0].mxu0
      %v1005 = vadd.f32 0.0, %v1004
      %v1006 = vpop.f32.mrb[0].mxu0
      %v1007 = vadd.f32 0.0, %v1006
      %1008 = vmatprep.mubr.f32.mxu0 %v645
      %1009 = vmatmul.mubr.f32.gmra.mrb[0].mxu0 %v477
      %v1010 = vpop.f32.mrb[0].mxu0
      %v1011 = vadd.f32 0.0, %v1010
      %v1012 = vpop.f32.mrb[0].mxu0
      %v1013 = vadd.f32 0.0, %v1012
      %1014 = vmatprep.mubr.f32.mxu0 %v648
      %1015 = vmatmul.mubr.f32.gmra.mrb[0].mxu0 %v479
      %v1016 = vpop.f32.mrb[0].mxu0
      %v1017 = vadd.f32 0.0, %v1016
      %v1018 = vpop.f32.mrb[0].mxu0
      %v1019 = vadd.f32 0.0, %v1018
      %1020 = vmatprep.mubr.f32.mxu0 %v651
      %1021 = vmatmul.mubr.f32.gmra.mrb[0].mxu0 %v481
      %v1022 = vpop.f32.mrb[0].mxu0
      %v1023 = vadd.f32 0.0, %v1022
      %v1024 = vpop.f32.mrb[0].mxu0
      %v1025 = vadd.f32 0.0, %v1024
      %1026 = vmatprep.mubr.f32.mxu0 %v654
      %1027 = vmatmul.mubr.f32.gmra.mrb[0].mxu0 %v483
      %v1028 = vpop.f32.mrb[0].mxu0
      %v1029 = vadd.f32 0.0, %v1028
      %v1030 = vpop.f32.mrb[0].mxu0
      %v1031 = vadd.f32 0.0, %v1030
      %1032 = vmatprep.mubr.f32.mxu0 %v657
      %1033 = vmatmul.mubr.f32.gmra.mrb[0].mxu0 %v485
      %v1034 = vpop.f32.mrb[0].mxu0
      %v1035 = vadd.f32 0.0, %v1034
      %v1036 = vpop.f32.mrb[0].mxu0
      %v1037 = vadd.f32 0.0, %v1036
      %1038 = vmatprep.mubr.f32.mxu0 %v660
      %1039 = vmatmul.mubr.f32.gmra.mrb[0].mxu0 %v487
      %v1040 = vpop.f32.mrb[0].mxu0
      %v1041 = vadd.f32 0.0, %v1040
      %v1042 = vpop.f32.mrb[0].mxu0
      %v1043 = vadd.f32 0.0, %v1042
      %1044 = vmatprep.mubr.f32.mxu0 %v663
      %1045 = vmatmul.mubr.f32.gmra.mrb[0].mxu0 %v489
      %v1046 = vpop.f32.mrb[0].mxu0
      %v1047 = vadd.f32 0.0, %v1046
      %v1048 = vpop.f32.mrb[0].mxu0
      %v1049 = vadd.f32 0.0, %v1048
      %1050 = vmatprep.mubr.f32.mxu0 %v666
      %1051 = vmatmul.mubr.f32.gmra.mrb[0].mxu0 %v491
      %v1052 = vpop.f32.mrb[0].mxu0
      %v1053 = vadd.f32 0.0, %v1052
      %v1054 = vpop.f32.mrb[0].mxu0
      %v1055 = vadd.f32 0.0, %v1054
      %1056 = vmatprep.mubr.f32.mxu0 %v669
      %1057 = vmatmul.mubr.f32.gmra.mrb[0].mxu0 %v493
      %v1058 = vpop.f32.mrb[0].mxu0
      %v1059 = vadd.f32 0.0, %v1058
      %v1060 = vpop.f32.mrb[0].mxu0
      %v1061 = vadd.f32 0.0, %v1060
      %1062 = vmatprep.mubr.f32.mxu0 %v672
      %1063 = vmatmul.mubr.f32.gmra.mrb[0].mxu0 %v495
      %v1064 = vpop.f32.mrb[0].mxu0
      %v1065 = vadd.f32 0.0, %v1064
      %v1066 = vpop.f32.mrb[0].mxu0
      %v1067 = vadd.f32 0.0, %v1066
      %1068 = vmatprep.mubr.f32.mxu0 %v675
      %1069 = vmatmul.mubr.f32.gmra.mrb[0].mxu0 %v497
      %v1070 = vpop.f32.mrb[0].mxu0
      %v1071 = vadd.f32 0.0, %v1070
      %v1072 = vpop.f32.mrb[0].mxu0
      %v1073 = vadd.f32 0.0, %v1072
      %1074 = vmatprep.mubr.f32.mxu0 %v678
      %1075 = vmatmul.mubr.f32.gmra.mrb[0].mxu0 %v499
      %v1076 = vpop.f32.mrb[0].mxu0
      %v1077 = vadd.f32 0.0, %v1076
      %v1078 = vpop.f32.mrb[0].mxu0
      %v1079 = vadd.f32 0.0, %v1078
      %1080 = vmatprep.mubr.f32.mxu0 %v681
      %1081 = vmatmul.mubr.f32.gmra.mrb[0].mxu0 %v501
      %v1082 = vpop.f32.mrb[0].mxu0
      %v1083 = vadd.f32 0.0, %v1082
      %v1084 = vpop.f32.mrb[0].mxu0
      %v1085 = vadd.f32 0.0, %v1084
      %1086 = vmatprep.mubr.f32.mxu0 %v684
      %1087 = vmatmul.mubr.f32.gmra.mrb[0].mxu0 %v503
      %v1088 = vpop.f32.mrb[0].mxu0
      %v1089 = vadd.f32 0.0, %v1088
      %v1090 = vpop.f32.mrb[0].mxu0
      %v1091 = vadd.f32 0.0, %v1090
      %1092 = vmatprep.mubr.f32.mxu0 %v687
      %1093 = vmatmul.mubr.f32.gmra.mrb[0].mxu0 %v505
      %v1094 = vpop.f32.mrb[0].mxu0
      %v1095 = vadd.f32 0.0, %v1094
      %v1096 = vpop.f32.mrb[0].mxu0
      %v1097 = vadd.f32 0.0, %v1096
      %1098 = vmatprep.mubr.f32.mxu0 %v690
      %1099 = vmatmul.mubr.f32.gmra.mrb[0].mxu0 %v507
      %v1100 = vpop.f32.mrb[0].mxu0
      %v1101 = vadd.f32 0.0, %v1100
      %v1102 = vpop.f32.mrb[0].mxu0
      %v1103 = vadd.f32 0.0, %v1102
      %1104 = vmatprep.mubr.f32.mxu0 %v693
      %1105 = vmatmul.mubr.f32.gmra.mrb[0].mxu0 %v509
      %v1106 = vpop.f32.mrb[0].mxu0
      %v1107 = vadd.f32 0.0, %v1106
      %v1108 = vpop.f32.mrb[0].mxu0
      %v1109 = vadd.f32 0.0, %v1108
      %1110 = vmatprep.mubr.f32.mxu0 %v696
      %1111 = vmatmul.mubr.f32.gmra.mrb[0].mxu0 %v511
      %v1112 = vpop.f32.mrb[0].mxu0
      %v1113 = vadd.f32 0.0, %v1112
      %v1114 = vpop.f32.mrb[0].mxu0
      %v1115 = vadd.f32 0.0, %v1114
      %1116 = vmatprep.mubr.f32.mxu0 %v699
      %1117 = vmatmul.mubr.f32.gmra.mrb[0].mxu0 %v513
      %v1118 = vpop.f32.mrb[0].mxu0
      %v1119 = vadd.f32 0.0, %v1118
      %v1120 = vpop.f32.mrb[0].mxu0
      %v1121 = vadd.f32 0.0, %v1120
      %1122 = vmatprep.mubr.f32.mxu0 %v702
      %1123 = vmatmul.mubr.f32.gmra.mrb[0].mxu0 %v515
      %v1124 = vpop.f32.mrb[0].mxu0
      %v1125 = vadd.f32 0.0, %v1124
      %v1126 = vpop.f32.mrb[0].mxu0
      %v1127 = vadd.f32 0.0, %v1126
      %1128 = vmatprep.mubr.f32.mxu0 %v705
      %1129 = vmatmul.mubr.f32.gmra.mrb[0].mxu0 %v517
      %v1130 = vpop.f32.mrb[0].mxu0
      %v1131 = vadd.f32 0.0, %v1130
      %v1132 = vpop.f32.mrb[0].mxu0
      %v1133 = vadd.f32 0.0, %v1132
      %1134 = vmatprep.mubr.f32.mxu0 %v708
      %1135 = vmatmul.mubr.f32.gmra.mrb[0].mxu0 %v519
      %v1136 = vpop.f32.mrb[0].mxu0
      %v1137 = vadd.f32 0.0, %v1136
      %v1138 = vpop.f32.mrb[0].mxu0
      %v1139 = vadd.f32 0.0, %v1138
      %1140 = vmatprep.mubr.f32.mxu0 %v711
      %1141 = vmatmul.mubr.f32.gmra.mrb[0].mxu0 %v521
      %v1142 = vpop.f32.mrb[0].mxu0
      %v1143 = vadd.f32 0.0, %v1142
      %v1144 = vpop.f32.mrb[0].mxu0
      %v1145 = vadd.f32 0.0, %v1144
      %1146 = vmatprep.mubr.f32.mxu0 %v714
      %1147 = vmatmul.mubr.f32.gmra.mrb[0].mxu0 %v523
      %v1148 = vpop.f32.mrb[0].mxu0
      %v1149 = vadd.f32 0.0, %v1148
      %v1150 = vpop.f32.mrb[0].mxu0
      %v1151 = vadd.f32 0.0, %v1150
      %1152 = vmatprep.mubr.f32.mxu0 %v717
      %1153 = vmatmul.mubr.f32.gmra.mrb[0].mxu0 %v525
      %v1154 = vpop.f32.mrb[0].mxu0
      %v1155 = vadd.f32 0.0, %v1154
      %v1156 = vpop.f32.mrb[0].mxu0
      %v1157 = vadd.f32 0.0, %v1156
      %1158 = vmatprep.mubr.f32.mxu0 %v720
      %1159 = vmatmul.mubr.f32.gmra.mrb[0].mxu0 %v527
      %v1160 = vpop.f32.mrb[0].mxu0
      %v1161 = vadd.f32 0.0, %v1160
      %v1162 = vpop.f32.mrb[0].mxu0
      %v1163 = vadd.f32 0.0, %v1162
      %1164 = vmatprep.mubr.f32.mxu0 %v723
      %1165 = vmatmul.mubr.f32.gmra.mrb[0].mxu0 %v529
      %v1166 = vpop.f32.mrb[0].mxu0
      %v1167 = vadd.f32 0.0, %v1166
      %v1168 = vpop.f32.mrb[0].mxu0
      %v1169 = vadd.f32 0.0, %v1168
      %1170 = vmatprep.mubr.f32.mxu0 %v726
      %1171 = vmatmul.mubr.f32.gmra.mrb[0].mxu0 %v531
      %v1172 = vpop.f32.mrb[0].mxu0
      %v1173 = vadd.f32 0.0, %v1172
      %v1174 = vpop.f32.mrb[0].mxu0
      %v1175 = vadd.f32 0.0, %v1174
      %1176 = vmatprep.mubr.f32.mxu0 %v729
      %1177 = vmatmul.mubr.f32.gmra.mrb[0].mxu0 %v533
      %v1178 = vpop.f32.mrb[0].mxu0
      %v1179 = vadd.f32 0.0, %v1178
      %v1180 = vpop.f32.mrb[0].mxu0
      %v1181 = vadd.f32 0.0, %v1180
      %1182 = vmatprep.mubr.f32.mxu0 %v732
      %1183 = vmatmul.mubr.f32.gmra.mrb[0].mxu0 %v535
      %v1184 = vpop.f32.mrb[0].mxu0
      %v1185 = vadd.f32 0.0, %v1184
      %v1186 = vpop.f32.mrb[0].mxu0
      %v1187 = vadd.f32 0.0, %v1186
      %1188 = vmatprep.mubr.f32.mxu0 %v735
      %1189 = vmatmul.mubr.f32.gmra.mrb[0].mxu0 %v537
      %v1190 = vpop.f32.mrb[0].mxu0
      %v1191 = vadd.f32 0.0, %v1190
      %v1192 = vpop.f32.mrb[0].mxu0
      %v1193 = vadd.f32 0.0, %v1192
      %1194 = vmatprep.mubr.f32.mxu0 %v738
      %1195 = vmatmul.mubr.f32.gmra.mrb[0].mxu0 %v539
      %v1196 = vpop.f32.mrb[0].mxu0
      %v1197 = vadd.f32 0.0, %v1196
      %v1198 = vpop.f32.mrb[0].mxu0
      %v1199 = vadd.f32 0.0, %v1198
      %1200 = vdwg.mxu0
      %vm1201 = vcmask 556032
      %v1202 = vsel %vm1201, %v809, 0.0
      %v1203 = vadd.f32 %v807, %v1202
      %1204 = vadd.xlane.f32.xlu0 %v1203
      %v1205 = vpop.xlane.xlu0 %1204
      %v1206 = vsel %vm1201, %v815, 0.0
      %v1207 = vadd.f32 %v813, %v1206
      %1208 = vadd.xlane.f32.xlu0 %v1207
      %v1209 = vpop.xlane.xlu0 %1208
      %v1210 = vsel %vm1201, %v821, 0.0
      %v1211 = vadd.f32 %v819, %v1210
      %1212 = vadd.xlane.f32.xlu0 %v1211
      %v1213 = vpop.xlane.xlu0 %1212
      %v1214 = vsel %vm1201, %v827, 0.0
      %v1215 = vadd.f32 %v825, %v1214
      %1216 = vadd.xlane.f32.xlu0 %v1215
      %v1217 = vpop.xlane.xlu0 %1216
      %v1218 = vsel %vm1201, %v833, 0.0
      %v1219 = vadd.f32 %v831, %v1218
      %1220 = vadd.xlane.f32.xlu0 %v1219
      %v1221 = vpop.xlane.xlu0 %1220
      %v1222 = vsel %vm1201, %v839, 0.0
      %v1223 = vadd.f32 %v837, %v1222
      %1224 = vadd.xlane.f32.xlu0 %v1223
      %v1225 = vpop.xlane.xlu0 %1224
      %v1226 = vsel %vm1201, %v845, 0.0
      %v1227 = vadd.f32 %v843, %v1226
      %1228 = vadd.xlane.f32.xlu0 %v1227
      %v1229 = vpop.xlane.xlu0 %1228
      %v1230 = vsel %vm1201, %v851, 0.0
      %v1231 = vadd.f32 %v849, %v1230
      %1232 = vadd.xlane.f32.xlu0 %v1231
      %v1233 = vpop.xlane.xlu0 %1232
      %v1234 = vsel %vm1201, %v857, 0.0
      %v1235 = vadd.f32 %v855, %v1234
      %1236 = vadd.xlane.f32.xlu0 %v1235
      %v1237 = vpop.xlane.xlu0 %1236
      %v1238 = vsel %vm1201, %v863, 0.0
      %v1239 = vadd.f32 %v861, %v1238
      %1240 = vadd.xlane.f32.xlu0 %v1239
      %v1241 = vpop.xlane.xlu0 %1240
      %v1242 = vsel %vm1201, %v869, 0.0
      %v1243 = vadd.f32 %v867, %v1242
      %1244 = vadd.xlane.f32.xlu0 %v1243
      %v1245 = vpop.xlane.xlu0 %1244
      %v1246 = vsel %vm1201, %v875, 0.0
      %v1247 = vadd.f32 %v873, %v1246
      %1248 = vadd.xlane.f32.xlu0 %v1247
      %v1249 = vpop.xlane.xlu0 %1248
      %v1250 = vsel %vm1201, %v881, 0.0
      %v1251 = vadd.f32 %v879, %v1250
      %1252 = vadd.xlane.f32.xlu0 %v1251
      %v1253 = vpop.xlane.xlu0 %1252
      %v1254 = vsel %vm1201, %v887, 0.0
      %v1255 = vadd.f32 %v885, %v1254
      %1256 = vadd.xlane.f32.xlu0 %v1255
      %v1257 = vpop.xlane.xlu0 %1256
      %v1258 = vsel %vm1201, %v893, 0.0
      %v1259 = vadd.f32 %v891, %v1258
      %1260 = vadd.xlane.f32.xlu0 %v1259
      %v1261 = vpop.xlane.xlu0 %1260
      %v1262 = vsel %vm1201, %v899, 0.0
      %v1263 = vadd.f32 %v897, %v1262
      %1264 = vadd.xlane.f32.xlu0 %v1263
      %v1265 = vpop.xlane.xlu0 %1264
      %v1266 = vsel %vm1201, %v905, 0.0
      %v1267 = vadd.f32 %v903, %v1266
      %1268 = vadd.xlane.f32.xlu0 %v1267
      %v1269 = vpop.xlane.xlu0 %1268
      %v1270 = vsel %vm1201, %v911, 0.0
      %v1271 = vadd.f32 %v909, %v1270
      %1272 = vadd.xlane.f32.xlu0 %v1271
      %v1273 = vpop.xlane.xlu0 %1272
      %v1274 = vsel %vm1201, %v917, 0.0
      %v1275 = vadd.f32 %v915, %v1274
      %1276 = vadd.xlane.f32.xlu0 %v1275
      %v1277 = vpop.xlane.xlu0 %1276
      %v1278 = vsel %vm1201, %v923, 0.0
      %v1279 = vadd.f32 %v921, %v1278
      %1280 = vadd.xlane.f32.xlu0 %v1279
      %v1281 = vpop.xlane.xlu0 %1280
      %v1282 = vsel %vm1201, %v929, 0.0
      %v1283 = vadd.f32 %v927, %v1282
      %1284 = vadd.xlane.f32.xlu0 %v1283
      %v1285 = vpop.xlane.xlu0 %1284
      %v1286 = vsel %vm1201, %v935, 0.0
      %v1287 = vadd.f32 %v933, %v1286
      %1288 = vadd.xlane.f32.xlu0 %v1287
      %v1289 = vpop.xlane.xlu0 %1288
      %v1290 = vsel %vm1201, %v941, 0.0
      %v1291 = vadd.f32 %v939, %v1290
      %1292 = vadd.xlane.f32.xlu0 %v1291
      %v1293 = vpop.xlane.xlu0 %1292
      %v1294 = vsel %vm1201, %v947, 0.0
      %v1295 = vadd.f32 %v945, %v1294
      %1296 = vadd.xlane.f32.xlu0 %v1295
      %v1297 = vpop.xlane.xlu0 %1296
      %v1298 = vsel %vm1201, %v953, 0.0
      %v1299 = vadd.f32 %v951, %v1298
      %1300 = vadd.xlane.f32.xlu0 %v1299
      %v1301 = vpop.xlane.xlu0 %1300
      %v1302 = vsel %vm1201, %v959, 0.0
      %v1303 = vadd.f32 %v957, %v1302
      %1304 = vadd.xlane.f32.xlu0 %v1303
      %v1305 = vpop.xlane.xlu0 %1304
      %v1306 = vsel %vm1201, %v965, 0.0
      %v1307 = vadd.f32 %v963, %v1306
      %1308 = vadd.xlane.f32.xlu0 %v1307
      %v1309 = vpop.xlane.xlu0 %1308
      %v1310 = vsel %vm1201, %v971, 0.0
      %v1311 = vadd.f32 %v969, %v1310
      %1312 = vadd.xlane.f32.xlu0 %v1311
      %v1313 = vpop.xlane.xlu0 %1312
      %v1314 = vsel %vm1201, %v977, 0.0
      %v1315 = vadd.f32 %v975, %v1314
      %1316 = vadd.xlane.f32.xlu0 %v1315
      %v1317 = vpop.xlane.xlu0 %1316
      %v1318 = vsel %vm1201, %v983, 0.0
      %v1319 = vadd.f32 %v981, %v1318
      %1320 = vadd.xlane.f32.xlu0 %v1319
      %v1321 = vpop.xlane.xlu0 %1320
      %v1322 = vsel %vm1201, %v989, 0.0
      %v1323 = vadd.f32 %v987, %v1322
      %1324 = vadd.xlane.f32.xlu0 %v1323
      %v1325 = vpop.xlane.xlu0 %1324
      %v1326 = vsel %vm1201, %v995, 0.0
      %v1327 = vadd.f32 %v993, %v1326
      %1328 = vadd.xlane.f32.xlu0 %v1327
      %v1329 = vpop.xlane.xlu0 %1328
      %v1330 = vsel %vm1201, %v1001, 0.0
      %v1331 = vadd.f32 %v999, %v1330
      %1332 = vadd.xlane.f32.xlu0 %v1331
      %v1333 = vpop.xlane.xlu0 %1332
      %v1334 = vsel %vm1201, %v1007, 0.0
      %v1335 = vadd.f32 %v1005, %v1334
      %1336 = vadd.xlane.f32.xlu0 %v1335
      %v1337 = vpop.xlane.xlu0 %1336
      %v1338 = vsel %vm1201, %v1013, 0.0
      %v1339 = vadd.f32 %v1011, %v1338
      %1340 = vadd.xlane.f32.xlu0 %v1339
      %v1341 = vpop.xlane.xlu0 %1340
      %v1342 = vsel %vm1201, %v1019, 0.0
      %v1343 = vadd.f32 %v1017, %v1342
      %1344 = vadd.xlane.f32.xlu0 %v1343
      %v1345 = vpop.xlane.xlu0 %1344
      %v1346 = vsel %vm1201, %v1025, 0.0
      %v1347 = vadd.f32 %v1023, %v1346
      %1348 = vadd.xlane.f32.xlu0 %v1347
      %v1349 = vpop.xlane.xlu0 %1348
      %v1350 = vsel %vm1201, %v1031, 0.0
      %v1351 = vadd.f32 %v1029, %v1350
      %1352 = vadd.xlane.f32.xlu0 %v1351
      %v1353 = vpop.xlane.xlu0 %1352
      %v1354 = vsel %vm1201, %v1037, 0.0
      %v1355 = vadd.f32 %v1035, %v1354
      %1356 = vadd.xlane.f32.xlu0 %v1355
      %v1357 = vpop.xlane.xlu0 %1356
      %v1358 = vsel %vm1201, %v1043, 0.0
      %v1359 = vadd.f32 %v1041, %v1358
      %1360 = vadd.xlane.f32.xlu0 %v1359
      %v1361 = vpop.xlane.xlu0 %1360
      %v1362 = vsel %vm1201, %v1049, 0.0
      %v1363 = vadd.f32 %v1047, %v1362
      %1364 = vadd.xlane.f32.xlu0 %v1363
      %v1365 = vpop.xlane.xlu0 %1364
      %v1366 = vsel %vm1201, %v1055, 0.0
      %v1367 = vadd.f32 %v1053, %v1366
      %1368 = vadd.xlane.f32.xlu0 %v1367
      %v1369 = vpop.xlane.xlu0 %1368
      %v1370 = vsel %vm1201, %v1061, 0.0
      %v1371 = vadd.f32 %v1059, %v1370
      %1372 = vadd.xlane.f32.xlu0 %v1371
      %v1373 = vpop.xlane.xlu0 %1372
      %v1374 = vsel %vm1201, %v1067, 0.0
      %v1375 = vadd.f32 %v1065, %v1374
      %1376 = vadd.xlane.f32.xlu0 %v1375
      %v1377 = vpop.xlane.xlu0 %1376
      %v1378 = vsel %vm1201, %v1073, 0.0
      %v1379 = vadd.f32 %v1071, %v1378
      %1380 = vadd.xlane.f32.xlu0 %v1379
      %v1381 = vpop.xlane.xlu0 %1380
      %v1382 = vsel %vm1201, %v1079, 0.0
      %v1383 = vadd.f32 %v1077, %v1382
      %1384 = vadd.xlane.f32.xlu0 %v1383
      %v1385 = vpop.xlane.xlu0 %1384
      %v1386 = vsel %vm1201, %v1085, 0.0
      %v1387 = vadd.f32 %v1083, %v1386
      %1388 = vadd.xlane.f32.xlu0 %v1387
      %v1389 = vpop.xlane.xlu0 %1388
      %v1390 = vsel %vm1201, %v1091, 0.0
      %v1391 = vadd.f32 %v1089, %v1390
      %1392 = vadd.xlane.f32.xlu0 %v1391
      %v1393 = vpop.xlane.xlu0 %1392
      %v1394 = vsel %vm1201, %v1097, 0.0
      %v1395 = vadd.f32 %v1095, %v1394
      %1396 = vadd.xlane.f32.xlu0 %v1395
      %v1397 = vpop.xlane.xlu0 %1396
      %v1398 = vsel %vm1201, %v1103, 0.0
      %v1399 = vadd.f32 %v1101, %v1398
      %1400 = vadd.xlane.f32.xlu0 %v1399
      %v1401 = vpop.xlane.xlu0 %1400
      %v1402 = vsel %vm1201, %v1109, 0.0
      %v1403 = vadd.f32 %v1107, %v1402
      %1404 = vadd.xlane.f32.xlu0 %v1403
      %v1405 = vpop.xlane.xlu0 %1404
      %v1406 = vsel %vm1201, %v1115, 0.0
      %v1407 = vadd.f32 %v1113, %v1406
      %1408 = vadd.xlane.f32.xlu0 %v1407
      %v1409 = vpop.xlane.xlu0 %1408
      %v1410 = vsel %vm1201, %v1121, 0.0
      %v1411 = vadd.f32 %v1119, %v1410
      %1412 = vadd.xlane.f32.xlu0 %v1411
      %v1413 = vpop.xlane.xlu0 %1412
      %v1414 = vsel %vm1201, %v1127, 0.0
      %v1415 = vadd.f32 %v1125, %v1414
      %1416 = vadd.xlane.f32.xlu0 %v1415
      %v1417 = vpop.xlane.xlu0 %1416
      %v1418 = vsel %vm1201, %v1133, 0.0
      %v1419 = vadd.f32 %v1131, %v1418
      %1420 = vadd.xlane.f32.xlu0 %v1419
      %v1421 = vpop.xlane.xlu0 %1420
      %v1422 = vsel %vm1201, %v1139, 0.0
      %v1423 = vadd.f32 %v1137, %v1422
      %1424 = vadd.xlane.f32.xlu0 %v1423
      %v1425 = vpop.xlane.xlu0 %1424
      %v1426 = vsel %vm1201, %v1145, 0.0
      %v1427 = vadd.f32 %v1143, %v1426
      %1428 = vadd.xlane.f32.xlu0 %v1427
      %v1429 = vpop.xlane.xlu0 %1428
      %v1430 = vsel %vm1201, %v1151, 0.0
      %v1431 = vadd.f32 %v1149, %v1430
      %1432 = vadd.xlane.f32.xlu0 %v1431
      %v1433 = vpop.xlane.xlu0 %1432
      %v1434 = vsel %vm1201, %v1157, 0.0
      %v1435 = vadd.f32 %v1155, %v1434
      %1436 = vadd.xlane.f32.xlu0 %v1435
      %v1437 = vpop.xlane.xlu0 %1436
      %v1438 = vsel %vm1201, %v1163, 0.0
      %v1439 = vadd.f32 %v1161, %v1438
      %1440 = vadd.xlane.f32.xlu0 %v1439
      %v1441 = vpop.xlane.xlu0 %1440
      %v1442 = vsel %vm1201, %v1169, 0.0
      %v1443 = vadd.f32 %v1167, %v1442
      %1444 = vadd.xlane.f32.xlu0 %v1443
      %v1445 = vpop.xlane.xlu0 %1444
      %v1446 = vsel %vm1201, %v1175, 0.0
      %v1447 = vadd.f32 %v1173, %v1446
      %1448 = vadd.xlane.f32.xlu0 %v1447
      %v1449 = vpop.xlane.xlu0 %1448
      %v1450 = vsel %vm1201, %v1181, 0.0
      %v1451 = vadd.f32 %v1179, %v1450
      %1452 = vadd.xlane.f32.xlu0 %v1451
      %v1453 = vpop.xlane.xlu0 %1452
      %v1454 = vsel %vm1201, %v1187, 0.0
      %v1455 = vadd.f32 %v1185, %v1454
      %1456 = vadd.xlane.f32.xlu0 %v1455
      %v1457 = vpop.xlane.xlu0 %1456
      %v1458 = vsel %vm1201, %v1193, 0.0
      %v1459 = vadd.f32 %v1191, %v1458
      %1460 = vadd.xlane.f32.xlu0 %v1459
      %v1461 = vpop.xlane.xlu0 %1460
      %v1462 = vsel %vm1201, %v1199, 0.0
      %v1463 = vadd.f32 %v1197, %v1462
      %1464 = vadd.xlane.f32.xlu0 %v1463
      %v1465 = vpop.xlane.xlu0 %1464
      %v1466 = vmul.f32 %v1205, 0.0051020407
      %v1467 = vmul.f32 %v1209, 0.0051020407
      %v1468 = vmul.f32 %v1213, 0.0051020407
      %v1469 = vmul.f32 %v1217, 0.0051020407
      %v1470 = vmul.f32 %v1221, 0.0051020407
      %v1471 = vmul.f32 %v1225, 0.0051020407
      %v1472 = vmul.f32 %v1229, 0.0051020407
      %v1473 = vmul.f32 %v1233, 0.0051020407
      %v1474 = vmul.f32 %v1237, 0.0051020407
      %v1475 = vmul.f32 %v1241, 0.0051020407
      %v1476 = vmul.f32 %v1245, 0.0051020407
      %v1477 = vmul.f32 %v1249, 0.0051020407
      %v1478 = vmul.f32 %v1253, 0.0051020407
      %v1479 = vmul.f32 %v1257, 0.0051020407
      %v1480 = vmul.f32 %v1261, 0.0051020407
      %v1481 = vmul.f32 %v1265, 0.0051020407
      %v1482 = vmul.f32 %v1269, 0.0051020407
      %v1483 = vmul.f32 %v1273, 0.0051020407
      %v1484 = vmul.f32 %v1277, 0.0051020407
      %v1485 = vmul.f32 %v1281, 0.0051020407
      %v1486 = vmul.f32 %v1285, 0.0051020407
      %v1487 = vmul.f32 %v1289, 0.0051020407
      %v1488 = vmul.f32 %v1293, 0.0051020407
      %v1489 = vmul.f32 %v1297, 0.0051020407
      %v1490 = vmul.f32 %v1301, 0.0051020407
      %v1491 = vmul.f32 %v1305, 0.0051020407
      %v1492 = vmul.f32 %v1309, 0.0051020407
      %v1493 = vmul.f32 %v1313, 0.0051020407
      %v1494 = vmul.f32 %v1317, 0.0051020407
      %v1495 = vmul.f32 %v1321, 0.0051020407
      %v1496 = vmul.f32 %v1325, 0.0051020407
      %v1497 = vmul.f32 %v1329, 0.0051020407
      %v1498 = vmul.f32 %v1333, 0.0051020407
      %v1499 = vmul.f32 %v1337, 0.0051020407
      %v1500 = vmul.f32 %v1341, 0.0051020407
      %v1501 = vmul.f32 %v1345, 0.0051020407
      %v1502 = vmul.f32 %v1349, 0.0051020407
      %v1503 = vmul.f32 %v1353, 0.0051020407
      %v1504 = vmul.f32 %v1357, 0.0051020407
      %v1505 = vmul.f32 %v1361, 0.0051020407
      %v1506 = vmul.f32 %v1365, 0.0051020407
      %v1507 = vmul.f32 %v1369, 0.0051020407
      %v1508 = vmul.f32 %v1373, 0.0051020407
      %v1509 = vmul.f32 %v1377, 0.0051020407
      %v1510 = vmul.f32 %v1381, 0.0051020407
      %v1511 = vmul.f32 %v1385, 0.0051020407
      %v1512 = vmul.f32 %v1389, 0.0051020407
      %v1513 = vmul.f32 %v1393, 0.0051020407
      %v1514 = vmul.f32 %v1397, 0.0051020407
      %v1515 = vmul.f32 %v1401, 0.0051020407
      %v1516 = vmul.f32 %v1405, 0.0051020407
      %v1517 = vmul.f32 %v1409, 0.0051020407
      %v1518 = vmul.f32 %v1413, 0.0051020407
      %v1519 = vmul.f32 %v1417, 0.0051020407
      %v1520 = vmul.f32 %v1421, 0.0051020407
      %v1521 = vmul.f32 %v1425, 0.0051020407
      %v1522 = vmul.f32 %v1429, 0.0051020407
      %v1523 = vmul.f32 %v1433, 0.0051020407
      %v1524 = vmul.f32 %v1437, 0.0051020407
      %v1525 = vmul.f32 %v1441, 0.0051020407
      %v1526 = vmul.f32 %v1445, 0.0051020407
      %v1527 = vmul.f32 %v1449, 0.0051020407
      %v1528 = vmul.f32 %v1453, 0.0051020407
      %v1529 = vmul.f32 %v1457, 0.0051020407
      %v1530 = vmul.f32 %v1461, 0.0051020407
      %v1531 = vmul.f32 %v1465, 0.0051020407
      %v1532 = vsub.f32 %v807, %v1466
      %v1533 = vsub.f32 %v809, %v1466
      %v1534 = vsub.f32 %v813, %v1467
      %v1535 = vsub.f32 %v815, %v1467
      %v1536 = vsub.f32 %v819, %v1468
      %v1537 = vsub.f32 %v821, %v1468
      %v1538 = vsub.f32 %v825, %v1469
      %v1539 = vsub.f32 %v827, %v1469
      %v1540 = vsub.f32 %v831, %v1470
      %v1541 = vsub.f32 %v833, %v1470
      %v1542 = vsub.f32 %v837, %v1471
      %v1543 = vsub.f32 %v839, %v1471
      %v1544 = vsub.f32 %v843, %v1472
      %v1545 = vsub.f32 %v845, %v1472
      %v1546 = vsub.f32 %v849, %v1473
      %v1547 = vsub.f32 %v851, %v1473
      %v1548 = vsub.f32 %v855, %v1474
      %v1549 = vsub.f32 %v857, %v1474
      %v1550 = vsub.f32 %v861, %v1475
      %v1551 = vsub.f32 %v863, %v1475
      %v1552 = vsub.f32 %v867, %v1476
      %v1553 = vsub.f32 %v869, %v1476
      %v1554 = vsub.f32 %v873, %v1477
      %v1555 = vsub.f32 %v875, %v1477
      %v1556 = vsub.f32 %v879, %v1478
      %v1557 = vsub.f32 %v881, %v1478
      %v1558 = vsub.f32 %v885, %v1479
      %v1559 = vsub.f32 %v887, %v1479
      %v1560 = vsub.f32 %v891, %v1480
      %v1561 = vsub.f32 %v893, %v1480
      %v1562 = vsub.f32 %v897, %v1481
      %v1563 = vsub.f32 %v899, %v1481
      %v1564 = vsub.f32 %v903, %v1482
      %v1565 = vsub.f32 %v905, %v1482
      %v1566 = vsub.f32 %v909, %v1483
      %v1567 = vsub.f32 %v911, %v1483
      %v1568 = vsub.f32 %v915, %v1484
      %v1569 = vsub.f32 %v917, %v1484
      %v1570 = vsub.f32 %v921, %v1485
      %v1571 = vsub.f32 %v923, %v1485
      %v1572 = vsub.f32 %v927, %v1486
      %v1573 = vsub.f32 %v929, %v1486
      %v1574 = vsub.f32 %v933, %v1487
      %v1575 = vsub.f32 %v935, %v1487
      %v1576 = vsub.f32 %v939, %v1488
      %v1577 = vsub.f32 %v941, %v1488
      %v1578 = vsub.f32 %v945, %v1489
      %v1579 = vsub.f32 %v947, %v1489
      %v1580 = vsub.f32 %v951, %v1490
      %v1581 = vsub.f32 %v953, %v1490
      %v1582 = vsub.f32 %v957, %v1491
      %v1583 = vsub.f32 %v959, %v1491
      %v1584 = vsub.f32 %v963, %v1492
      %v1585 = vsub.f32 %v965, %v1492
      %v1586 = vsub.f32 %v969, %v1493
      %v1587 = vsub.f32 %v971, %v1493
      %v1588 = vsub.f32 %v975, %v1494
      %v1589 = vsub.f32 %v977, %v1494
      %v1590 = vsub.f32 %v981, %v1495
      %v1591 = vsub.f32 %v983, %v1495
      %v1592 = vsub.f32 %v987, %v1496
      %v1593 = vsub.f32 %v989, %v1496
      %v1594 = vsub.f32 %v993, %v1497
      %v1595 = vsub.f32 %v995, %v1497
      %v1596 = vsub.f32 %v999, %v1498
      %v1597 = vsub.f32 %v1001, %v1498
      %v1598 = vsub.f32 %v1005, %v1499
      %v1599 = vsub.f32 %v1007, %v1499
      %v1600 = vsub.f32 %v1011, %v1500
      %v1601 = vsub.f32 %v1013, %v1500
      %v1602 = vsub.f32 %v1017, %v1501
      %v1603 = vsub.f32 %v1019, %v1501
      %v1604 = vsub.f32 %v1023, %v1502
      %v1605 = vsub.f32 %v1025, %v1502
      %v1606 = vsub.f32 %v1029, %v1503
      %v1607 = vsub.f32 %v1031, %v1503
      %v1608 = vsub.f32 %v1035, %v1504
      %v1609 = vsub.f32 %v1037, %v1504
      %v1610 = vsub.f32 %v1041, %v1505
      %v1611 = vsub.f32 %v1043, %v1505
      %v1612 = vsub.f32 %v1047, %v1506
      %v1613 = vsub.f32 %v1049, %v1506
      %v1614 = vsub.f32 %v1053, %v1507
      %v1615 = vsub.f32 %v1055, %v1507
      %v1616 = vsub.f32 %v1059, %v1508
      %v1617 = vsub.f32 %v1061, %v1508
      %v1618 = vsub.f32 %v1065, %v1509
      %v1619 = vsub.f32 %v1067, %v1509
      %v1620 = vsub.f32 %v1071, %v1510
      %v1621 = vsub.f32 %v1073, %v1510
      %v1622 = vsub.f32 %v1077, %v1511
      %v1623 = vsub.f32 %v1079, %v1511
      %v1624 = vsub.f32 %v1083, %v1512
      %v1625 = vsub.f32 %v1085, %v1512
      %v1626 = vsub.f32 %v1089, %v1513
      %v1627 = vsub.f32 %v1091, %v1513
      %v1628 = vsub.f32 %v1095, %v1514
      %v1629 = vsub.f32 %v1097, %v1514
      %v1630 = vsub.f32 %v1101, %v1515
      %v1631 = vsub.f32 %v1103, %v1515
      %v1632 = vsub.f32 %v1107, %v1516
      %v1633 = vsub.f32 %v1109, %v1516
      %v1634 = vsub.f32 %v1113, %v1517
      %v1635 = vsub.f32 %v1115, %v1517
      %v1636 = vsub.f32 %v1119, %v1518
      %v1637 = vsub.f32 %v1121, %v1518
      %v1638 = vsub.f32 %v1125, %v1519
      %v1639 = vsub.f32 %v1127, %v1519
      %v1640 = vsub.f32 %v1131, %v1520
      %v1641 = vsub.f32 %v1133, %v1520
      %v1642 = vsub.f32 %v1137, %v1521
      %v1643 = vsub.f32 %v1139, %v1521
      %v1644 = vsub.f32 %v1143, %v1522
      %v1645 = vsub.f32 %v1145, %v1522
      %v1646 = vsub.f32 %v1149, %v1523
      %v1647 = vsub.f32 %v1151, %v1523
      %v1648 = vsub.f32 %v1155, %v1524
      %v1649 = vsub.f32 %v1157, %v1524
      %v1650 = vsub.f32 %v1161, %v1525
      %v1651 = vsub.f32 %v1163, %v1525
      %v1652 = vsub.f32 %v1167, %v1526
      %v1653 = vsub.f32 %v1169, %v1526
      %v1654 = vsub.f32 %v1173, %v1527
      %v1655 = vsub.f32 %v1175, %v1527
      %v1656 = vsub.f32 %v1179, %v1528
      %v1657 = vsub.f32 %v1181, %v1528
      %v1658 = vsub.f32 %v1185, %v1529
      %v1659 = vsub.f32 %v1187, %v1529
      %v1660 = vsub.f32 %v1191, %v1530
      %v1661 = vsub.f32 %v1193, %v1530
      %v1662 = vsub.f32 %v1197, %v1531
      %v1663 = vsub.f32 %v1199, %v1531
      %v1664 = vmul.f32 %v1532, %v1532
      %v1665 = vmul.f32 %v1533, %v1533
      %v1666 = vmul.f32 %v1534, %v1534
      %v1667 = vmul.f32 %v1535, %v1535
      %v1668 = vmul.f32 %v1536, %v1536
      %v1669 = vmul.f32 %v1537, %v1537
      %v1670 = vmul.f32 %v1538, %v1538
      %v1671 = vmul.f32 %v1539, %v1539
      %v1672 = vmul.f32 %v1540, %v1540
      %v1673 = vmul.f32 %v1541, %v1541
      %v1674 = vmul.f32 %v1542, %v1542
      %v1675 = vmul.f32 %v1543, %v1543
      %v1676 = vmul.f32 %v1544, %v1544
      %v1677 = vmul.f32 %v1545, %v1545
      %v1678 = vmul.f32 %v1546, %v1546
      %v1679 = vmul.f32 %v1547, %v1547
      %v1680 = vmul.f32 %v1548, %v1548
      %v1681 = vmul.f32 %v1549, %v1549
      %v1682 = vmul.f32 %v1550, %v1550
      %v1683 = vmul.f32 %v1551, %v1551
      %v1684 = vmul.f32 %v1552, %v1552
      %v1685 = vmul.f32 %v1553, %v1553
      %v1686 = vmul.f32 %v1554, %v1554
      %v1687 = vmul.f32 %v1555, %v1555
      %v1688 = vmul.f32 %v1556, %v1556
      %v1689 = vmul.f32 %v1557, %v1557
      %v1690 = vmul.f32 %v1558, %v1558
      %v1691 = vmul.f32 %v1559, %v1559
      %v1692 = vmul.f32 %v1560, %v1560
      %v1693 = vmul.f32 %v1561, %v1561
      %v1694 = vmul.f32 %v1562, %v1562
      %v1695 = vmul.f32 %v1563, %v1563
      %v1696 = vmul.f32 %v1564, %v1564
      %v1697 = vmul.f32 %v1565, %v1565
      %v1698 = vmul.f32 %v1566, %v1566
      %v1699 = vmul.f32 %v1567, %v1567
      %v1700 = vmul.f32 %v1568, %v1568
      %v1701 = vmul.f32 %v1569, %v1569
      %v1702 = vmul.f32 %v1570, %v1570
      %v1703 = vmul.f32 %v1571, %v1571
      %v1704 = vmul.f32 %v1572, %v1572
      %v1705 = vmul.f32 %v1573, %v1573
      %v1706 = vmul.f32 %v1574, %v1574
      %v1707 = vmul.f32 %v1575, %v1575
      %v1708 = vmul.f32 %v1576, %v1576
      %v1709 = vmul.f32 %v1577, %v1577
      %v1710 = vmul.f32 %v1578, %v1578
      %v1711 = vmul.f32 %v1579, %v1579
      %v1712 = vmul.f32 %v1580, %v1580
      %v1713 = vmul.f32 %v1581, %v1581
      %v1714 = vmul.f32 %v1582, %v1582
      %v1715 = vmul.f32 %v1583, %v1583
      %v1716 = vmul.f32 %v1584, %v1584
      %v1717 = vmul.f32 %v1585, %v1585
      %v1718 = vmul.f32 %v1586, %v1586
      %v1719 = vmul.f32 %v1587, %v1587
      %v1720 = vmul.f32 %v1588, %v1588
      %v1721 = vmul.f32 %v1589, %v1589
      %v1722 = vmul.f32 %v1590, %v1590
      %v1723 = vmul.f32 %v1591, %v1591
      %v1724 = vmul.f32 %v1592, %v1592
      %v1725 = vmul.f32 %v1593, %v1593
      %v1726 = vmul.f32 %v1594, %v1594
      %v1727 = vmul.f32 %v1595, %v1595
      %v1728 = vmul.f32 %v1596, %v1596
      %v1729 = vmul.f32 %v1597, %v1597
      %v1730 = vmul.f32 %v1598, %v1598
      %v1731 = vmul.f32 %v1599, %v1599
      %v1732 = vmul.f32 %v1600, %v1600
      %v1733 = vmul.f32 %v1601, %v1601
      %v1734 = vmul.f32 %v1602, %v1602
      %v1735 = vmul.f32 %v1603, %v1603
      %v1736 = vmul.f32 %v1604, %v1604
      %v1737 = vmul.f32 %v1605, %v1605
      %v1738 = vmul.f32 %v1606, %v1606
      %v1739 = vmul.f32 %v1607, %v1607
      %v1740 = vmul.f32 %v1608, %v1608
      %v1741 = vmul.f32 %v1609, %v1609
      %v1742 = vmul.f32 %v1610, %v1610
      %v1743 = vmul.f32 %v1611, %v1611
      %v1744 = vmul.f32 %v1612, %v1612
      %v1745 = vmul.f32 %v1613, %v1613
      %v1746 = vmul.f32 %v1614, %v1614
      %v1747 = vmul.f32 %v1615, %v1615
      %v1748 = vmul.f32 %v1616, %v1616
      %v1749 = vmul.f32 %v1617, %v1617
      %v1750 = vmul.f32 %v1618, %v1618
      %v1751 = vmul.f32 %v1619, %v1619
      %v1752 = vmul.f32 %v1620, %v1620
      %v1753 = vmul.f32 %v1621, %v1621
      %v1754 = vmul.f32 %v1622, %v1622
      %v1755 = vmul.f32 %v1623, %v1623
      %v1756 = vmul.f32 %v1624, %v1624
      %v1757 = vmul.f32 %v1625, %v1625
      %v1758 = vmul.f32 %v1626, %v1626
      %v1759 = vmul.f32 %v1627, %v1627
      %v1760 = vmul.f32 %v1628, %v1628
      %v1761 = vmul.f32 %v1629, %v1629
      %v1762 = vmul.f32 %v1630, %v1630
      %v1763 = vmul.f32 %v1631, %v1631
      %v1764 = vmul.f32 %v1632, %v1632
      %v1765 = vmul.f32 %v1633, %v1633
      %v1766 = vmul.f32 %v1634, %v1634
      %v1767 = vmul.f32 %v1635, %v1635
      %v1768 = vmul.f32 %v1636, %v1636
      %v1769 = vmul.f32 %v1637, %v1637
      %v1770 = vmul.f32 %v1638, %v1638
      %v1771 = vmul.f32 %v1639, %v1639
      %v1772 = vmul.f32 %v1640, %v1640
      %v1773 = vmul.f32 %v1641, %v1641
      %v1774 = vmul.f32 %v1642, %v1642
      %v1775 = vmul.f32 %v1643, %v1643
      %v1776 = vmul.f32 %v1644, %v1644
      %v1777 = vmul.f32 %v1645, %v1645
      %v1778 = vmul.f32 %v1646, %v1646
      %v1779 = vmul.f32 %v1647, %v1647
      %v1780 = vmul.f32 %v1648, %v1648
      %v1781 = vmul.f32 %v1649, %v1649
      %v1782 = vmul.f32 %v1650, %v1650
      %v1783 = vmul.f32 %v1651, %v1651
      %v1784 = vmul.f32 %v1652, %v1652
      %v1785 = vmul.f32 %v1653, %v1653
      %v1786 = vmul.f32 %v1654, %v1654
      %v1787 = vmul.f32 %v1655, %v1655
      %v1788 = vmul.f32 %v1656, %v1656
      %v1789 = vmul.f32 %v1657, %v1657
      %v1790 = vmul.f32 %v1658, %v1658
      %v1791 = vmul.f32 %v1659, %v1659
      %v1792 = vmul.f32 %v1660, %v1660
      %v1793 = vmul.f32 %v1661, %v1661
      %v1794 = vmul.f32 %v1662, %v1662
      %v1795 = vmul.f32 %v1663, %v1663
      %v1796 = vsel %vm1201, %v1665, 0.0
      %v1797 = vadd.f32 %v1664, %v1796
      %1798 = vadd.xlane.f32.xlu0 %v1797
      %v1799 = vpop.xlane.xlu0 %1798
      %v1800 = vsel %vm1201, %v1667, 0.0
      %v1801 = vadd.f32 %v1666, %v1800
      %1802 = vadd.xlane.f32.xlu0 %v1801
      %v1803 = vpop.xlane.xlu0 %1802
      %v1804 = vsel %vm1201, %v1669, 0.0
      %v1805 = vadd.f32 %v1668, %v1804
      %1806 = vadd.xlane.f32.xlu0 %v1805
      %v1807 = vpop.xlane.xlu0 %1806
      %v1808 = vsel %vm1201, %v1671, 0.0
      %v1809 = vadd.f32 %v1670, %v1808
      %1810 = vadd.xlane.f32.xlu0 %v1809
      %v1811 = vpop.xlane.xlu0 %1810
      %v1812 = vsel %vm1201, %v1673, 0.0
      %v1813 = vadd.f32 %v1672, %v1812
      %1814 = vadd.xlane.f32.xlu0 %v1813
      %v1815 = vpop.xlane.xlu0 %1814
      %v1816 = vsel %vm1201, %v1675, 0.0
      %v1817 = vadd.f32 %v1674, %v1816
      %1818 = vadd.xlane.f32.xlu0 %v1817
      %v1819 = vpop.xlane.xlu0 %1818
      %v1820 = vsel %vm1201, %v1677, 0.0
      %v1821 = vadd.f32 %v1676, %v1820
      %1822 = vadd.xlane.f32.xlu0 %v1821
      %v1823 = vpop.xlane.xlu0 %1822
      %v1824 = vsel %vm1201, %v1679, 0.0
      %v1825 = vadd.f32 %v1678, %v1824
      %1826 = vadd.xlane.f32.xlu0 %v1825
      %v1827 = vpop.xlane.xlu0 %1826
      %v1828 = vsel %vm1201, %v1681, 0.0
      %v1829 = vadd.f32 %v1680, %v1828
      %1830 = vadd.xlane.f32.xlu0 %v1829
      %v1831 = vpop.xlane.xlu0 %1830
      %v1832 = vsel %vm1201, %v1683, 0.0
      %v1833 = vadd.f32 %v1682, %v1832
      %1834 = vadd.xlane.f32.xlu0 %v1833
      %v1835 = vpop.xlane.xlu0 %1834
      %v1836 = vsel %vm1201, %v1685, 0.0
      %v1837 = vadd.f32 %v1684, %v1836
      %1838 = vadd.xlane.f32.xlu0 %v1837
      %v1839 = vpop.xlane.xlu0 %1838
      %v1840 = vsel %vm1201, %v1687, 0.0
      %v1841 = vadd.f32 %v1686, %v1840
      %1842 = vadd.xlane.f32.xlu0 %v1841
      %v1843 = vpop.xlane.xlu0 %1842
      %v1844 = vsel %vm1201, %v1689, 0.0
      %v1845 = vadd.f32 %v1688, %v1844
      %1846 = vadd.xlane.f32.xlu0 %v1845
      %v1847 = vpop.xlane.xlu0 %1846
      %v1848 = vsel %vm1201, %v1691, 0.0
      %v1849 = vadd.f32 %v1690, %v1848
      %1850 = vadd.xlane.f32.xlu0 %v1849
      %v1851 = vpop.xlane.xlu0 %1850
      %v1852 = vsel %vm1201, %v1693, 0.0
      %v1853 = vadd.f32 %v1692, %v1852
      %1854 = vadd.xlane.f32.xlu0 %v1853
      %v1855 = vpop.xlane.xlu0 %1854
      %v1856 = vsel %vm1201, %v1695, 0.0
      %v1857 = vadd.f32 %v1694, %v1856
      %1858 = vadd.xlane.f32.xlu0 %v1857
      %v1859 = vpop.xlane.xlu0 %1858
      %v1860 = vsel %vm1201, %v1697, 0.0
      %v1861 = vadd.f32 %v1696, %v1860
      %1862 = vadd.xlane.f32.xlu0 %v1861
      %v1863 = vpop.xlane.xlu0 %1862
      %v1864 = vsel %vm1201, %v1699, 0.0
      %v1865 = vadd.f32 %v1698, %v1864
      %1866 = vadd.xlane.f32.xlu0 %v1865
      %v1867 = vpop.xlane.xlu0 %1866
      %v1868 = vsel %vm1201, %v1701, 0.0
      %v1869 = vadd.f32 %v1700, %v1868
      %1870 = vadd.xlane.f32.xlu0 %v1869
      %v1871 = vpop.xlane.xlu0 %1870
      %v1872 = vsel %vm1201, %v1703, 0.0
      %v1873 = vadd.f32 %v1702, %v1872
      %1874 = vadd.xlane.f32.xlu0 %v1873
      %v1875 = vpop.xlane.xlu0 %1874
      %v1876 = vsel %vm1201, %v1705, 0.0
      %v1877 = vadd.f32 %v1704, %v1876
      %1878 = vadd.xlane.f32.xlu0 %v1877
      %v1879 = vpop.xlane.xlu0 %1878
      %v1880 = vsel %vm1201, %v1707, 0.0
      %v1881 = vadd.f32 %v1706, %v1880
      %1882 = vadd.xlane.f32.xlu0 %v1881
      %v1883 = vpop.xlane.xlu0 %1882
      %v1884 = vsel %vm1201, %v1709, 0.0
      %v1885 = vadd.f32 %v1708, %v1884
      %1886 = vadd.xlane.f32.xlu0 %v1885
      %v1887 = vpop.xlane.xlu0 %1886
      %v1888 = vsel %vm1201, %v1711, 0.0
      %v1889 = vadd.f32 %v1710, %v1888
      %1890 = vadd.xlane.f32.xlu0 %v1889
      %v1891 = vpop.xlane.xlu0 %1890
      %v1892 = vsel %vm1201, %v1713, 0.0
      %v1893 = vadd.f32 %v1712, %v1892
      %1894 = vadd.xlane.f32.xlu0 %v1893
      %v1895 = vpop.xlane.xlu0 %1894
      %v1896 = vsel %vm1201, %v1715, 0.0
      %v1897 = vadd.f32 %v1714, %v1896
      %1898 = vadd.xlane.f32.xlu0 %v1897
      %v1899 = vpop.xlane.xlu0 %1898
      %v1900 = vsel %vm1201, %v1717, 0.0
      %v1901 = vadd.f32 %v1716, %v1900
      %1902 = vadd.xlane.f32.xlu0 %v1901
      %v1903 = vpop.xlane.xlu0 %1902
      %v1904 = vsel %vm1201, %v1719, 0.0
      %v1905 = vadd.f32 %v1718, %v1904
      %1906 = vadd.xlane.f32.xlu0 %v1905
      %v1907 = vpop.xlane.xlu0 %1906
      %v1908 = vsel %vm1201, %v1721, 0.0
      %v1909 = vadd.f32 %v1720, %v1908
      %1910 = vadd.xlane.f32.xlu0 %v1909
      %v1911 = vpop.xlane.xlu0 %1910
      %v1912 = vsel %vm1201, %v1723, 0.0
      %v1913 = vadd.f32 %v1722, %v1912
      %1914 = vadd.xlane.f32.xlu0 %v1913
      %v1915 = vpop.xlane.xlu0 %1914
      %v1916 = vsel %vm1201, %v1725, 0.0
      %v1917 = vadd.f32 %v1724, %v1916
      %1918 = vadd.xlane.f32.xlu0 %v1917
      %v1919 = vpop.xlane.xlu0 %1918
      %v1920 = vsel %vm1201, %v1727, 0.0
      %v1921 = vadd.f32 %v1726, %v1920
      %1922 = vadd.xlane.f32.xlu0 %v1921
      %v1923 = vpop.xlane.xlu0 %1922
      %v1924 = vsel %vm1201, %v1729, 0.0
      %v1925 = vadd.f32 %v1728, %v1924
      %1926 = vadd.xlane.f32.xlu0 %v1925
      %v1927 = vpop.xlane.xlu0 %1926
      %v1928 = vsel %vm1201, %v1731, 0.0
      %v1929 = vadd.f32 %v1730, %v1928
      %1930 = vadd.xlane.f32.xlu0 %v1929
      %v1931 = vpop.xlane.xlu0 %1930
      %v1932 = vsel %vm1201, %v1733, 0.0
      %v1933 = vadd.f32 %v1732, %v1932
      %1934 = vadd.xlane.f32.xlu0 %v1933
      %v1935 = vpop.xlane.xlu0 %1934
      %v1936 = vsel %vm1201, %v1735, 0.0
      %v1937 = vadd.f32 %v1734, %v1936
      %1938 = vadd.xlane.f32.xlu0 %v1937
      %v1939 = vpop.xlane.xlu0 %1938
      %v1940 = vsel %vm1201, %v1737, 0.0
      %v1941 = vadd.f32 %v1736, %v1940
      %1942 = vadd.xlane.f32.xlu0 %v1941
      %v1943 = vpop.xlane.xlu0 %1942
      %v1944 = vsel %vm1201, %v1739, 0.0
      %v1945 = vadd.f32 %v1738, %v1944
      %1946 = vadd.xlane.f32.xlu0 %v1945
      %v1947 = vpop.xlane.xlu0 %1946
      %v1948 = vsel %vm1201, %v1741, 0.0
      %v1949 = vadd.f32 %v1740, %v1948
      %1950 = vadd.xlane.f32.xlu0 %v1949
      %v1951 = vpop.xlane.xlu0 %1950
      %v1952 = vsel %vm1201, %v1743, 0.0
      %v1953 = vadd.f32 %v1742, %v1952
      %1954 = vadd.xlane.f32.xlu0 %v1953
      %v1955 = vpop.xlane.xlu0 %1954
      %v1956 = vsel %vm1201, %v1745, 0.0
      %v1957 = vadd.f32 %v1744, %v1956
      %1958 = vadd.xlane.f32.xlu0 %v1957
      %v1959 = vpop.xlane.xlu0 %1958
      %v1960 = vsel %vm1201, %v1747, 0.0
      %v1961 = vadd.f32 %v1746, %v1960
      %1962 = vadd.xlane.f32.xlu0 %v1961
      %v1963 = vpop.xlane.xlu0 %1962
      %v1964 = vsel %vm1201, %v1749, 0.0
      %v1965 = vadd.f32 %v1748, %v1964
      %1966 = vadd.xlane.f32.xlu0 %v1965
      %v1967 = vpop.xlane.xlu0 %1966
      %v1968 = vsel %vm1201, %v1751, 0.0
      %v1969 = vadd.f32 %v1750, %v1968
      %1970 = vadd.xlane.f32.xlu0 %v1969
      %v1971 = vpop.xlane.xlu0 %1970
      %v1972 = vsel %vm1201, %v1753, 0.0
      %v1973 = vadd.f32 %v1752, %v1972
      %1974 = vadd.xlane.f32.xlu0 %v1973
      %v1975 = vpop.xlane.xlu0 %1974
      %v1976 = vsel %vm1201, %v1755, 0.0
      %v1977 = vadd.f32 %v1754, %v1976
      %1978 = vadd.xlane.f32.xlu0 %v1977
      %v1979 = vpop.xlane.xlu0 %1978
      %v1980 = vsel %vm1201, %v1757, 0.0
      %v1981 = vadd.f32 %v1756, %v1980
      %1982 = vadd.xlane.f32.xlu0 %v1981
      %v1983 = vpop.xlane.xlu0 %1982
      %v1984 = vsel %vm1201, %v1759, 0.0
      %v1985 = vadd.f32 %v1758, %v1984
      %1986 = vadd.xlane.f32.xlu0 %v1985
      %v1987 = vpop.xlane.xlu0 %1986
      %v1988 = vsel %vm1201, %v1761, 0.0
      %v1989 = vadd.f32 %v1760, %v1988
      %1990 = vadd.xlane.f32.xlu0 %v1989
      %v1991 = vpop.xlane.xlu0 %1990
      %v1992 = vsel %vm1201, %v1763, 0.0
      %v1993 = vadd.f32 %v1762, %v1992
      %1994 = vadd.xlane.f32.xlu0 %v1993
      %v1995 = vpop.xlane.xlu0 %1994
      %v1996 = vsel %vm1201, %v1765, 0.0
      %v1997 = vadd.f32 %v1764, %v1996
      %1998 = vadd.xlane.f32.xlu0 %v1997
      %v1999 = vpop.xlane.xlu0 %1998
      %v2000 = vsel %vm1201, %v1767, 0.0
      %v2001 = vadd.f32 %v1766, %v2000
      %2002 = vadd.xlane.f32.xlu0 %v2001
      %v2003 = vpop.xlane.xlu0 %2002
      %v2004 = vsel %vm1201, %v1769, 0.0
      %v2005 = vadd.f32 %v1768, %v2004
      %2006 = vadd.xlane.f32.xlu0 %v2005
      %v2007 = vpop.xlane.xlu0 %2006
      %v2008 = vsel %vm1201, %v1771, 0.0
      %v2009 = vadd.f32 %v1770, %v2008
      %2010 = vadd.xlane.f32.xlu0 %v2009
      %v2011 = vpop.xlane.xlu0 %2010
      %v2012 = vsel %vm1201, %v1773, 0.0
      %v2013 = vadd.f32 %v1772, %v2012
      %2014 = vadd.xlane.f32.xlu0 %v2013
      %v2015 = vpop.xlane.xlu0 %2014
      %v2016 = vsel %vm1201, %v1775, 0.0
      %v2017 = vadd.f32 %v1774, %v2016
      %2018 = vadd.xlane.f32.xlu0 %v2017
      %v2019 = vpop.xlane.xlu0 %2018
      %v2020 = vsel %vm1201, %v1777, 0.0
      %v2021 = vadd.f32 %v1776, %v2020
      %2022 = vadd.xlane.f32.xlu0 %v2021
      %v2023 = vpop.xlane.xlu0 %2022
      %v2024 = vsel %vm1201, %v1779, 0.0
      %v2025 = vadd.f32 %v1778, %v2024
      %2026 = vadd.xlane.f32.xlu0 %v2025
      %v2027 = vpop.xlane.xlu0 %2026
      %v2028 = vsel %vm1201, %v1781, 0.0
      %v2029 = vadd.f32 %v1780, %v2028
      %2030 = vadd.xlane.f32.xlu0 %v2029
      %v2031 = vpop.xlane.xlu0 %2030
      %v2032 = vsel %vm1201, %v1783, 0.0
      %v2033 = vadd.f32 %v1782, %v2032
      %2034 = vadd.xlane.f32.xlu0 %v2033
      %v2035 = vpop.xlane.xlu0 %2034
      %v2036 = vsel %vm1201, %v1785, 0.0
      %v2037 = vadd.f32 %v1784, %v2036
      %2038 = vadd.xlane.f32.xlu0 %v2037
      %v2039 = vpop.xlane.xlu0 %2038
      %v2040 = vsel %vm1201, %v1787, 0.0
      %v2041 = vadd.f32 %v1786, %v2040
      %2042 = vadd.xlane.f32.xlu0 %v2041
      %v2043 = vpop.xlane.xlu0 %2042
      %v2044 = vsel %vm1201, %v1789, 0.0
      %v2045 = vadd.f32 %v1788, %v2044
      %2046 = vadd.xlane.f32.xlu0 %v2045
      %v2047 = vpop.xlane.xlu0 %2046
      %v2048 = vsel %vm1201, %v1791, 0.0
      %v2049 = vadd.f32 %v1790, %v2048
      %2050 = vadd.xlane.f32.xlu0 %v2049
      %v2051 = vpop.xlane.xlu0 %2050
      %v2052 = vsel %vm1201, %v1793, 0.0
      %v2053 = vadd.f32 %v1792, %v2052
      %2054 = vadd.xlane.f32.xlu0 %v2053
      %v2055 = vpop.xlane.xlu0 %2054
      %v2056 = vsel %vm1201, %v1795, 0.0
      %v2057 = vadd.f32 %v1794, %v2056
      %2058 = vadd.xlane.f32.xlu0 %v2057
      %v2059 = vpop.xlane.xlu0 %2058
      %v2060 = vmul.f32 %v1799, 0.0051020407
      %v2061 = vmul.f32 %v1803, 0.0051020407
      %v2062 = vmul.f32 %v1807, 0.0051020407
      %v2063 = vmul.f32 %v1811, 0.0051020407
      %v2064 = vmul.f32 %v1815, 0.0051020407
      %v2065 = vmul.f32 %v1819, 0.0051020407
      %v2066 = vmul.f32 %v1823, 0.0051020407
      %v2067 = vmul.f32 %v1827, 0.0051020407
      %v2068 = vmul.f32 %v1831, 0.0051020407
      %v2069 = vmul.f32 %v1835, 0.0051020407
      %v2070 = vmul.f32 %v1839, 0.0051020407
      %v2071 = vmul.f32 %v1843, 0.0051020407
      %v2072 = vmul.f32 %v1847, 0.0051020407
      %v2073 = vmul.f32 %v1851, 0.0051020407
      %v2074 = vmul.f32 %v1855, 0.0051020407
      %v2075 = vmul.f32 %v1859, 0.0051020407
      %v2076 = vmul.f32 %v1863, 0.0051020407
      %v2077 = vmul.f32 %v1867, 0.0051020407
      %v2078 = vmul.f32 %v1871, 0.0051020407
      %v2079 = vmul.f32 %v1875, 0.0051020407
      %v2080 = vmul.f32 %v1879, 0.0051020407
      %v2081 = vmul.f32 %v1883, 0.0051020407
      %v2082 = vmul.f32 %v1887, 0.0051020407
      %v2083 = vmul.f32 %v1891, 0.0051020407
      %v2084 = vmul.f32 %v1895, 0.0051020407
      %v2085 = vmul.f32 %v1899, 0.0051020407
      %v2086 = vmul.f32 %v1903, 0.0051020407
      %v2087 = vmul.f32 %v1907, 0.0051020407
      %v2088 = vmul.f32 %v1911, 0.0051020407
      %v2089 = vmul.f32 %v1915, 0.0051020407
      %v2090 = vmul.f32 %v1919, 0.0051020407
      %v2091 = vmul.f32 %v1923, 0.0051020407
      %v2092 = vmul.f32 %v1927, 0.0051020407
      %v2093 = vmul.f32 %v1931, 0.0051020407
      %v2094 = vmul.f32 %v1935, 0.0051020407
      %v2095 = vmul.f32 %v1939, 0.0051020407
      %v2096 = vmul.f32 %v1943, 0.0051020407
      %v2097 = vmul.f32 %v1947, 0.0051020407
      %v2098 = vmul.f32 %v1951, 0.0051020407
      %v2099 = vmul.f32 %v1955, 0.0051020407
      %v2100 = vmul.f32 %v1959, 0.0051020407
      %v2101 = vmul.f32 %v1963, 0.0051020407
      %v2102 = vmul.f32 %v1967, 0.0051020407
      %v2103 = vmul.f32 %v1971, 0.0051020407
      %v2104 = vmul.f32 %v1975, 0.0051020407
      %v2105 = vmul.f32 %v1979, 0.0051020407
      %v2106 = vmul.f32 %v1983, 0.0051020407
      %v2107 = vmul.f32 %v1987, 0.0051020407
      %v2108 = vmul.f32 %v1991, 0.0051020407
      %v2109 = vmul.f32 %v1995, 0.0051020407
      %v2110 = vmul.f32 %v1999, 0.0051020407
      %v2111 = vmul.f32 %v2003, 0.0051020407
      %v2112 = vmul.f32 %v2007, 0.0051020407
      %v2113 = vmul.f32 %v2011, 0.0051020407
      %v2114 = vmul.f32 %v2015, 0.0051020407
      %v2115 = vmul.f32 %v2019, 0.0051020407
      %v2116 = vmul.f32 %v2023, 0.0051020407
      %v2117 = vmul.f32 %v2027, 0.0051020407
      %v2118 = vmul.f32 %v2031, 0.0051020407
      %v2119 = vmul.f32 %v2035, 0.0051020407
      %v2120 = vmul.f32 %v2039, 0.0051020407
      %v2121 = vmul.f32 %v2043, 0.0051020407
      %v2122 = vmul.f32 %v2047, 0.0051020407
      %v2123 = vmul.f32 %v2051, 0.0051020407
      %v2124 = vmul.f32 %v2055, 0.0051020407
      %v2125 = vmul.f32 %v2059, 0.0051020407
      %v2126 = vadd.f32 %v2060, 0.001
      %v2127 = vadd.f32 %v2061, 0.001
      %v2128 = vadd.f32 %v2062, 0.001
      %v2129 = vadd.f32 %v2063, 0.001
      %v2130 = vadd.f32 %v2064, 0.001
      %v2131 = vadd.f32 %v2065, 0.001
      %v2132 = vadd.f32 %v2066, 0.001
      %v2133 = vadd.f32 %v2067, 0.001
      %v2134 = vadd.f32 %v2068, 0.001
      %v2135 = vadd.f32 %v2069, 0.001
      %v2136 = vadd.f32 %v2070, 0.001
      %v2137 = vadd.f32 %v2071, 0.001
      %v2138 = vadd.f32 %v2072, 0.001
      %v2139 = vadd.f32 %v2073, 0.001
      %v2140 = vadd.f32 %v2074, 0.001
      %v2141 = vadd.f32 %v2075, 0.001
      %v2142 = vadd.f32 %v2076, 0.001
      %v2143 = vadd.f32 %v2077, 0.001
      %v2144 = vadd.f32 %v2078, 0.001
      %v2145 = vadd.f32 %v2079, 0.001
      %v2146 = vadd.f32 %v2080, 0.001
      %v2147 = vadd.f32 %v2081, 0.001
      %v2148 = vadd.f32 %v2082, 0.001
      %v2149 = vadd.f32 %v2083, 0.001
      %v2150 = vadd.f32 %v2084, 0.001
      %v2151 = vadd.f32 %v2085, 0.001
      %v2152 = vadd.f32 %v2086, 0.001
      %v2153 = vadd.f32 %v2087, 0.001
      %v2154 = vadd.f32 %v2088, 0.001
      %v2155 = vadd.f32 %v2089, 0.001
      %v2156 = vadd.f32 %v2090, 0.001
      %v2157 = vadd.f32 %v2091, 0.001
      %v2158 = vadd.f32 %v2092, 0.001
      %v2159 = vadd.f32 %v2093, 0.001
      %v2160 = vadd.f32 %v2094, 0.001
      %v2161 = vadd.f32 %v2095, 0.001
      %v2162 = vadd.f32 %v2096, 0.001
      %v2163 = vadd.f32 %v2097, 0.001
      %v2164 = vadd.f32 %v2098, 0.001
      %v2165 = vadd.f32 %v2099, 0.001
      %v2166 = vadd.f32 %v2100, 0.001
      %v2167 = vadd.f32 %v2101, 0.001
      %v2168 = vadd.f32 %v2102, 0.001
      %v2169 = vadd.f32 %v2103, 0.001
      %v2170 = vadd.f32 %v2104, 0.001
      %v2171 = vadd.f32 %v2105, 0.001
      %v2172 = vadd.f32 %v2106, 0.001
      %v2173 = vadd.f32 %v2107, 0.001
      %v2174 = vadd.f32 %v2108, 0.001
      %v2175 = vadd.f32 %v2109, 0.001
      %v2176 = vadd.f32 %v2110, 0.001
      %v2177 = vadd.f32 %v2111, 0.001
      %v2178 = vadd.f32 %v2112, 0.001
      %v2179 = vadd.f32 %v2113, 0.001
      %v2180 = vadd.f32 %v2114, 0.001
      %v2181 = vadd.f32 %v2115, 0.001
      %v2182 = vadd.f32 %v2116, 0.001
      %v2183 = vadd.f32 %v2117, 0.001
      %v2184 = vadd.f32 %v2118, 0.001
      %v2185 = vadd.f32 %v2119, 0.001
      %v2186 = vadd.f32 %v2120, 0.001
      %v2187 = vadd.f32 %v2121, 0.001
      %v2188 = vadd.f32 %v2122, 0.001
      %v2189 = vadd.f32 %v2123, 0.001
      %v2190 = vadd.f32 %v2124, 0.001
      %v2191 = vadd.f32 %v2125, 0.001
      %v2192 = vrsqrt.pop %v2126
      %v2193 = vrsqrt.pop %v2127
      %v2194 = vrsqrt.pop %v2128
      %v2195 = vrsqrt.pop %v2129
      %v2196 = vrsqrt.pop %v2130
      %v2197 = vrsqrt.pop %v2131
      %v2198 = vrsqrt.pop %v2132
      %v2199 = vrsqrt.pop %v2133
      %v2200 = vrsqrt.pop %v2134
      %v2201 = vrsqrt.pop %v2135
      %v2202 = vrsqrt.pop %v2136
      %v2203 = vrsqrt.pop %v2137
      %v2204 = vrsqrt.pop %v2138
      %v2205 = vrsqrt.pop %v2139
      %v2206 = vrsqrt.pop %v2140
      %v2207 = vrsqrt.pop %v2141
      %v2208 = vrsqrt.pop %v2142
      %v2209 = vrsqrt.pop %v2143
      %v2210 = vrsqrt.pop %v2144
      %v2211 = vrsqrt.pop %v2145
      %v2212 = vrsqrt.pop %v2146
      %v2213 = vrsqrt.pop %v2147
      %v2214 = vrsqrt.pop %v2148
      %v2215 = vrsqrt.pop %v2149
      %v2216 = vrsqrt.pop %v2150
      %v2217 = vrsqrt.pop %v2151
      %v2218 = vrsqrt.pop %v2152
      %v2219 = vrsqrt.pop %v2153
      %v2220 = vrsqrt.pop %v2154
      %v2221 = vrsqrt.pop %v2155
      %v2222 = vrsqrt.pop %v2156
      %v2223 = vrsqrt.pop %v2157
      %v2224 = vrsqrt.pop %v2158
      %v2225 = vrsqrt.pop %v2159
      %v2226 = vrsqrt.pop %v2160
      %v2227 = vrsqrt.pop %v2161
      %v2228 = vrsqrt.pop %v2162
      %v2229 = vrsqrt.pop %v2163
      %v2230 = vrsqrt.pop %v2164
      %v2231 = vrsqrt.pop %v2165
      %v2232 = vrsqrt.pop %v2166
      %v2233 = vrsqrt.pop %v2167
      %v2234 = vrsqrt.pop %v2168
      %v2235 = vrsqrt.pop %v2169
      %v2236 = vrsqrt.pop %v2170
      %v2237 = vrsqrt.pop %v2171
      %v2238 = vrsqrt.pop %v2172
      %v2239 = vrsqrt.pop %v2173
      %v2240 = vrsqrt.pop %v2174
      %v2241 = vrsqrt.pop %v2175
      %v2242 = vrsqrt.pop %v2176
      %v2243 = vrsqrt.pop %v2177
      %v2244 = vrsqrt.pop %v2178
      %v2245 = vrsqrt.pop %v2179
      %v2246 = vrsqrt.pop %v2180
      %v2247 = vrsqrt.pop %v2181
      %v2248 = vrsqrt.pop %v2182
      %v2249 = vrsqrt.pop %v2183
      %v2250 = vrsqrt.pop %v2184
      %v2251 = vrsqrt.pop %v2185
      %v2252 = vrsqrt.pop %v2186
      %v2253 = vrsqrt.pop %v2187
      %v2254 = vrsqrt.pop %v2188
      %v2255 = vrsqrt.pop %v2189
      %v2256 = vrsqrt.pop %v2190
      %v2257 = vrsqrt.pop %v2191
      %v2258 = vld [vmem:[%s262] sm:$0xff]
      %v2259 = vld [vmem:[%s262 + $0x8] sm:$0xff]
      %v2260 = vld [vmem:[%s262 + $0x10] sm:$0xff]
      %v2261 = vld [vmem:[%s262 + $0x18] sm:$0xff]
      %v2262 = vld [vmem:[%s262 + $0x20] sm:$0xff]
      %v2263 = vld [vmem:[%s262 + $0x28] sm:$0xff]
      %v2264 = vld [vmem:[%s262 + $0x30] sm:$0xff]
      %v2265 = vld [vmem:[%s262 + $0x38] sm:$0xff]
      %v2266 = vld [vmem:[%s262 + $0x40] sm:$0xff]
      %v2267 = vld [vmem:[%s262 + $0x48] sm:$0xff]
      %v2268 = vld [vmem:[%s262 + $0x50] sm:$0xff]
      %v2269 = vld [vmem:[%s262 + $0x58] sm:$0xff]
      %v2270 = vld [vmem:[%s262 + $0x60] sm:$0xff]
      %v2271 = vld [vmem:[%s262 + $0x68] sm:$0xff]
      %v2272 = vld [vmem:[%s262 + $0x70] sm:$0xff]
      %v2273 = vld [vmem:[%s262 + $0x78] sm:$0xff]
      %v2274 = vld [vmem:[%s262 + $0x80] sm:$0xff]
      %v2275 = vld [vmem:[%s262 + $0x88] sm:$0xff]
      %v2276 = vld [vmem:[%s262 + $0x90] sm:$0xff]
      %v2277 = vld [vmem:[%s262 + $0x98] sm:$0xff]
      %v2278 = vld [vmem:[%s262 + $0xa0] sm:$0xff]
      %v2279 = vld [vmem:[%s262 + $0xa8] sm:$0xff]
      %v2280 = vld [vmem:[%s262 + $0xb0] sm:$0xff]
      %v2281 = vld [vmem:[%s262 + $0xb8] sm:$0xff]
      %v2282 = vld [vmem:[%s262 + $0xc0] sm:$0xff]
      %v2283 = vld [vmem:[%s262 + $0xc8] sm:$0xff]
      %v2284 = vld [vmem:[%s262 + $0xd0] sm:$0xff]
      %v2285 = vld [vmem:[%s262 + $0xd8] sm:$0xff]
      %v2286 = vld [vmem:[%s262 + $0xe0] sm:$0xff]
      %v2287 = vld [vmem:[%s262 + $0xe8] sm:$0xff]
      %v2288 = vld [vmem:[%s262 + $0xf0] sm:$0xff]
      %v2289 = vld [vmem:[%s262 + $0xf8] sm:$0xff]
      %v2290 = vld [vmem:[%s262 + $0x100] sm:$0xff]
      %v2291 = vld [vmem:[%s262 + $0x108] sm:$0xff]
      %v2292 = vld [vmem:[%s262 + $0x110] sm:$0xff]
      %v2293 = vld [vmem:[%s262 + $0x118] sm:$0xff]
      %v2294 = vld [vmem:[%s262 + $0x120] sm:$0xff]
      %v2295 = vld [vmem:[%s262 + $0x128] sm:$0xff]
      %v2296 = vld [vmem:[%s262 + $0x130] sm:$0xff]
      %v2297 = vld [vmem:[%s262 + $0x138] sm:$0xff]
      %v2298 = vld [vmem:[%s262 + $0x140] sm:$0xff]
      %v2299 = vld [vmem:[%s262 + $0x148] sm:$0xff]
      %v2300 = vld [vmem:[%s262 + $0x150] sm:$0xff]
      %v2301 = vld [vmem:[%s262 + $0x158] sm:$0xff]
      %v2302 = vld [vmem:[%s262 + $0x160] sm:$0xff]
      %v2303 = vld [vmem:[%s262 + $0x168] sm:$0xff]
      %v2304 = vld [vmem:[%s262 + $0x170] sm:$0xff]
      %v2305 = vld [vmem:[%s262 + $0x178] sm:$0xff]
      %v2306 = vld [vmem:[%s262 + $0x180] sm:$0xff]
      %v2307 = vld [vmem:[%s262 + $0x188] sm:$0xff]
      %v2308 = vld [vmem:[%s262 + $0x190] sm:$0xff]
      %v2309 = vld [vmem:[%s262 + $0x198] sm:$0xff]
      %v2310 = vld [vmem:[%s262 + $0x1a0] sm:$0xff]
      %v2311 = vld [vmem:[%s262 + $0x1a8] sm:$0xff]
      %v2312 = vld [vmem:[%s262 + $0x1b0] sm:$0xff]
      %v2313 = vld [vmem:[%s262 + $0x1b8] sm:$0xff]
      %v2314 = vld [vmem:[%s262 + $0x1c0] sm:$0xff]
      %v2315 = vld [vmem:[%s262 + $0x1c8] sm:$0xff]
      %v2316 = vld [vmem:[%s262 + $0x1d0] sm:$0xff]
      %v2317 = vld [vmem:[%s262 + $0x1d8] sm:$0xff]
      %v2318 = vld [vmem:[%s262 + $0x1e0] sm:$0xff]
      %v2319 = vld [vmem:[%s262 + $0x1e8] sm:$0xff]
      %v2320 = vld [vmem:[%s262 + $0x1f0] sm:$0xff]
      %v2321 = vld [vmem:[%s262 + $0x1f8] sm:$0xff]
      %v2322 = vld [vmem:[%s262 + $0x200] sm:$0xff]
      %v2323 = vld [vmem:[%s262 + $0x208] sm:$0xff]
      %v2324 = vmul.f32 %v2258, %v2192
      %v2325 = vmul.f32 %v2259, %v2193
      %v2326 = vmul.f32 %v2260, %v2194
      %v2327 = vmul.f32 %v2261, %v2195
      %v2328 = vmul.f32 %v2262, %v2196
      %v2329 = vmul.f32 %v2263, %v2197
      %v2330 = vmul.f32 %v2264, %v2198
      %v2331 = vmul.f32 %v2265, %v2199
      %v2332 = vmul.f32 %v2266, %v2200
      %v2333 = vmul.f32 %v2267, %v2201
      %v2334 = vmul.f32 %v2268, %v2202
      %v2335 = vmul.f32 %v2269, %v2203
      %v2336 = vmul.f32 %v2270, %v2204
      %v2337 = vmul.f32 %v2271, %v2205
      %v2338 = vmul.f32 %v2272, %v2206
      %v2339 = vmul.f32 %v2273, %v2207
      %v2340 = vmul.f32 %v2274, %v2208
      %v2341 = vmul.f32 %v2275, %v2209
      %v2342 = vmul.f32 %v2276, %v2210
      %v2343 = vmul.f32 %v2277, %v2211
      %v2344 = vmul.f32 %v2278, %v2212
      %v2345 = vmul.f32 %v2279, %v2213
      %v2346 = vmul.f32 %v2280, %v2214
      %v2347 = vmul.f32 %v2281, %v2215
      %v2348 = vmul.f32 %v2282, %v2216
      %v2349 = vmul.f32 %v2283, %v2217
      %v2350 = vmul.f32 %v2284, %v2218
      %v2351 = vmul.f32 %v2285, %v2219
      %v2352 = vmul.f32 %v2286, %v2220
      %v2353 = vmul.f32 %v2287, %v2221
      %v2354 = vmul.f32 %v2288, %v2222
      %v2355 = vmul.f32 %v2289, %v2223
      %v2356 = vmul.f32 %v2290, %v2224
      %v2357 = vmul.f32 %v2291, %v2225
      %v2358 = vmul.f32 %v2292, %v2226
      %v2359 = vmul.f32 %v2293, %v2227
      %v2360 = vmul.f32 %v2294, %v2228
      %v2361 = vmul.f32 %v2295, %v2229
      %v2362 = vmul.f32 %v2296, %v2230
      %v2363 = vmul.f32 %v2297, %v2231
      %v2364 = vmul.f32 %v2298, %v2232
      %v2365 = vmul.f32 %v2299, %v2233
      %v2366 = vmul.f32 %v2300, %v2234
      %v2367 = vmul.f32 %v2301, %v2235
      %v2368 = vmul.f32 %v2302, %v2236
      %v2369 = vmul.f32 %v2303, %v2237
      %v2370 = vmul.f32 %v2304, %v2238
      %v2371 = vmul.f32 %v2305, %v2239
      %v2372 = vmul.f32 %v2306, %v2240
      %v2373 = vmul.f32 %v2307, %v2241
      %v2374 = vmul.f32 %v2308, %v2242
      %v2375 = vmul.f32 %v2309, %v2243
      %v2376 = vmul.f32 %v2310, %v2244
      %v2377 = vmul.f32 %v2311, %v2245
      %v2378 = vmul.f32 %v2312, %v2246
      %v2379 = vmul.f32 %v2313, %v2247
      %v2380 = vmul.f32 %v2314, %v2248
      %v2381 = vmul.f32 %v2315, %v2249
      %v2382 = vmul.f32 %v2316, %v2250
      %v2383 = vmul.f32 %v2317, %v2251
      %v2384 = vmul.f32 %v2318, %v2252
      %v2385 = vmul.f32 %v2319, %v2253
      %v2386 = vmul.f32 %v2320, %v2254
      %v2387 = vmul.f32 %v2321, %v2255
      %v2388 = vmul.f32 %v2322, %v2256
      %v2389 = vmul.f32 %v2323, %v2257
      %2391 = vset.pattern.permute.xlu0 0
      %2392 = vperm.xlu0 %2391, %v2324
      %v2393 = vpop.permute.xlu0 %2392
      %2396 = vset.pattern.permute.xlu0 0
      %2397 = vperm.xlu0 %2396, %v2325
      %v2398 = vpop.permute.xlu0 %2397
      %2401 = vset.pattern.permute.xlu0 0
      %2402 = vperm.xlu0 %2401, %v2326
      %v2403 = vpop.permute.xlu0 %2402
      %2406 = vset.pattern.permute.xlu0 0
      %2407 = vperm.xlu0 %2406, %v2327
      %v2408 = vpop.permute.xlu0 %2407
      %2411 = vset.pattern.permute.xlu0 0
      %2412 = vperm.xlu0 %2411, %v2328
      %v2413 = vpop.permute.xlu0 %2412
      %2416 = vset.pattern.permute.xlu0 0
      %2417 = vperm.xlu0 %2416, %v2329
      %v2418 = vpop.permute.xlu0 %2417
      %2421 = vset.pattern.permute.xlu0 0
      %2422 = vperm.xlu0 %2421, %v2330
      %v2423 = vpop.permute.xlu0 %2422
      %2426 = vset.pattern.permute.xlu0 0
      %2427 = vperm.xlu0 %2426, %v2331
      %v2428 = vpop.permute.xlu0 %2427
      %2431 = vset.pattern.permute.xlu0 0
      %2432 = vperm.xlu0 %2431, %v2332
      %v2433 = vpop.permute.xlu0 %2432
      %2436 = vset.pattern.permute.xlu0 0
      %2437 = vperm.xlu0 %2436, %v2333
      %v2438 = vpop.permute.xlu0 %2437
      %2441 = vset.pattern.permute.xlu0 0
      %2442 = vperm.xlu0 %2441, %v2334
      %v2443 = vpop.permute.xlu0 %2442
      %2446 = vset.pattern.permute.xlu0 0
      %2447 = vperm.xlu0 %2446, %v2335
      %v2448 = vpop.permute.xlu0 %2447
      %2451 = vset.pattern.permute.xlu0 0
      %2452 = vperm.xlu0 %2451, %v2336
      %v2453 = vpop.permute.xlu0 %2452
      %2456 = vset.pattern.permute.xlu0 0
      %2457 = vperm.xlu0 %2456, %v2337
      %v2458 = vpop.permute.xlu0 %2457
      %2461 = vset.pattern.permute.xlu0 0
      %2462 = vperm.xlu0 %2461, %v2338
      %v2463 = vpop.permute.xlu0 %2462
      %2466 = vset.pattern.permute.xlu0 0
      %2467 = vperm.xlu0 %2466, %v2339
      %v2468 = vpop.permute.xlu0 %2467
      %2471 = vset.pattern.permute.xlu0 0
      %2472 = vperm.xlu0 %2471, %v2340
      %v2473 = vpop.permute.xlu0 %2472
      %2476 = vset.pattern.permute.xlu0 0
      %2477 = vperm.xlu0 %2476, %v2341
      %v2478 = vpop.permute.xlu0 %2477
      %2481 = vset.pattern.permute.xlu0 0
      %2482 = vperm.xlu0 %2481, %v2342
      %v2483 = vpop.permute.xlu0 %2482
      %2486 = vset.pattern.permute.xlu0 0
      %2487 = vperm.xlu0 %2486, %v2343
      %v2488 = vpop.permute.xlu0 %2487
      %2491 = vset.pattern.permute.xlu0 0
      %2492 = vperm.xlu0 %2491, %v2344
      %v2493 = vpop.permute.xlu0 %2492
      %2496 = vset.pattern.permute.xlu0 0
      %2497 = vperm.xlu0 %2496, %v2345
      %v2498 = vpop.permute.xlu0 %2497
      %2501 = vset.pattern.permute.xlu0 0
      %2502 = vperm.xlu0 %2501, %v2346
      %v2503 = vpop.permute.xlu0 %2502
      %2506 = vset.pattern.permute.xlu0 0
      %2507 = vperm.xlu0 %2506, %v2347
      %v2508 = vpop.permute.xlu0 %2507
      %2511 = vset.pattern.permute.xlu0 0
      %2512 = vperm.xlu0 %2511, %v2348
      %v2513 = vpop.permute.xlu0 %2512
      %2516 = vset.pattern.permute.xlu0 0
      %2517 = vperm.xlu0 %2516, %v2349
      %v2518 = vpop.permute.xlu0 %2517
      %2521 = vset.pattern.permute.xlu0 0
      %2522 = vperm.xlu0 %2521, %v2350
      %v2523 = vpop.permute.xlu0 %2522
      %2526 = vset.pattern.permute.xlu0 0
      %2527 = vperm.xlu0 %2526, %v2351
      %v2528 = vpop.permute.xlu0 %2527
      %2531 = vset.pattern.permute.xlu0 0
      %2532 = vperm.xlu0 %2531, %v2352
      %v2533 = vpop.permute.xlu0 %2532
      %2536 = vset.pattern.permute.xlu0 0
      %2537 = vperm.xlu0 %2536, %v2353
      %v2538 = vpop.permute.xlu0 %2537
      %2541 = vset.pattern.permute.xlu0 0
      %2542 = vperm.xlu0 %2541, %v2354
      %v2543 = vpop.permute.xlu0 %2542
      %2546 = vset.pattern.permute.xlu0 0
      %2547 = vperm.xlu0 %2546, %v2355
      %v2548 = vpop.permute.xlu0 %2547
      %2551 = vset.pattern.permute.xlu0 0
      %2552 = vperm.xlu0 %2551, %v2356
      %v2553 = vpop.permute.xlu0 %2552
      %2556 = vset.pattern.permute.xlu0 0
      %2557 = vperm.xlu0 %2556, %v2357
      %v2558 = vpop.permute.xlu0 %2557
      %2561 = vset.pattern.permute.xlu0 0
      %2562 = vperm.xlu0 %2561, %v2358
      %v2563 = vpop.permute.xlu0 %2562
      %2566 = vset.pattern.permute.xlu0 0
      %2567 = vperm.xlu0 %2566, %v2359
      %v2568 = vpop.permute.xlu0 %2567
      %2571 = vset.pattern.permute.xlu0 0
      %2572 = vperm.xlu0 %2571, %v2360
      %v2573 = vpop.permute.xlu0 %2572
      %2576 = vset.pattern.permute.xlu0 0
      %2577 = vperm.xlu0 %2576, %v2361
      %v2578 = vpop.permute.xlu0 %2577
      %2581 = vset.pattern.permute.xlu0 0
      %2582 = vperm.xlu0 %2581, %v2362
      %v2583 = vpop.permute.xlu0 %2582
      %2586 = vset.pattern.permute.xlu0 0
      %2587 = vperm.xlu0 %2586, %v2363
      %v2588 = vpop.permute.xlu0 %2587
      %2591 = vset.pattern.permute.xlu0 0
      %2592 = vperm.xlu0 %2591, %v2364
      %v2593 = vpop.permute.xlu0 %2592
      %2596 = vset.pattern.permute.xlu0 0
      %2597 = vperm.xlu0 %2596, %v2365
      %v2598 = vpop.permute.xlu0 %2597
      %2601 = vset.pattern.permute.xlu0 0
      %2602 = vperm.xlu0 %2601, %v2366
      %v2603 = vpop.permute.xlu0 %2602
      %2606 = vset.pattern.permute.xlu0 0
      %2607 = vperm.xlu0 %2606, %v2367
      %v2608 = vpop.permute.xlu0 %2607
      %2611 = vset.pattern.permute.xlu0 0
      %2612 = vperm.xlu0 %2611, %v2368
      %v2613 = vpop.permute.xlu0 %2612
      %2616 = vset.pattern.permute.xlu0 0
      %2617 = vperm.xlu0 %2616, %v2369
      %v2618 = vpop.permute.xlu0 %2617
      %2621 = vset.pattern.permute.xlu0 0
      %2622 = vperm.xlu0 %2621, %v2370
      %v2623 = vpop.permute.xlu0 %2622
      %2626 = vset.pattern.permute.xlu0 0
      %2627 = vperm.xlu0 %2626, %v2371
      %v2628 = vpop.permute.xlu0 %2627
      %2631 = vset.pattern.permute.xlu0 0
      %2632 = vperm.xlu0 %2631, %v2372
      %v2633 = vpop.permute.xlu0 %2632
      %2636 = vset.pattern.permute.xlu0 0
      %2637 = vperm.xlu0 %2636, %v2373
      %v2638 = vpop.permute.xlu0 %2637
      %2641 = vset.pattern.permute.xlu0 0
      %2642 = vperm.xlu0 %2641, %v2374
      %v2643 = vpop.permute.xlu0 %2642
      %2646 = vset.pattern.permute.xlu0 0
      %2647 = vperm.xlu0 %2646, %v2375
      %v2648 = vpop.permute.xlu0 %2647
      %2651 = vset.pattern.permute.xlu0 0
      %2652 = vperm.xlu0 %2651, %v2376
      %v2653 = vpop.permute.xlu0 %2652
      %2656 = vset.pattern.permute.xlu0 0
      %2657 = vperm.xlu0 %2656, %v2377
      %v2658 = vpop.permute.xlu0 %2657
      %2661 = vset.pattern.permute.xlu0 0
      %2662 = vperm.xlu0 %2661, %v2378
      %v2663 = vpop.permute.xlu0 %2662
      %2666 = vset.pattern.permute.xlu0 0
      %2667 = vperm.xlu0 %2666, %v2379
      %v2668 = vpop.permute.xlu0 %2667
      %2671 = vset.pattern.permute.xlu0 0
      %2672 = vperm.xlu0 %2671, %v2380
      %v2673 = vpop.permute.xlu0 %2672
      %2676 = vset.pattern.permute.xlu0 0
      %2677 = vperm.xlu0 %2676, %v2381
      %v2678 = vpop.permute.xlu0 %2677
      %2681 = vset.pattern.permute.xlu0 0
      %2682 = vperm.xlu0 %2681, %v2382
      %v2683 = vpop.permute.xlu0 %2682
      %2686 = vset.pattern.permute.xlu0 0
      %2687 = vperm.xlu0 %2686, %v2383
      %v2688 = vpop.permute.xlu0 %2687
      %2691 = vset.pattern.permute.xlu0 0
      %2692 = vperm.xlu0 %2691, %v2384
      %v2693 = vpop.permute.xlu0 %2692
      %2696 = vset.pattern.permute.xlu0 0
      %2697 = vperm.xlu0 %2696, %v2385
      %v2698 = vpop.permute.xlu0 %2697
      %2701 = vset.pattern.permute.xlu0 0
      %2702 = vperm.xlu0 %2701, %v2386
      %v2703 = vpop.permute.xlu0 %2702
      %2706 = vset.pattern.permute.xlu0 0
      %2707 = vperm.xlu0 %2706, %v2387
      %v2708 = vpop.permute.xlu0 %2707
      %2711 = vset.pattern.permute.xlu0 0
      %2712 = vperm.xlu0 %2711, %v2388
      %v2713 = vpop.permute.xlu0 %2712
      %2716 = vset.pattern.permute.xlu0 0
      %2717 = vperm.xlu0 %2716, %v2389
      %v2718 = vpop.permute.xlu0 %2717
      %v2720 = vmul.f32 %v1532, %v2393
      %v2721 = vmul.f32 %v1533, %v2393
      %v2722 = vmul.f32 %v1534, %v2398
      %v2723 = vmul.f32 %v1535, %v2398
      %v2724 = vmul.f32 %v1536, %v2403
      %v2725 = vmul.f32 %v1537, %v2403
      %v2726 = vmul.f32 %v1538, %v2408
      %v2727 = vmul.f32 %v1539, %v2408
      %v2728 = vmul.f32 %v1540, %v2413
      %v2729 = vmul.f32 %v1541, %v2413
      %v2730 = vmul.f32 %v1542, %v2418
      %v2731 = vmul.f32 %v1543, %v2418
      %v2732 = vmul.f32 %v1544, %v2423
      %v2733 = vmul.f32 %v1545, %v2423
      %v2734 = vmul.f32 %v1546, %v2428
      %v2735 = vmul.f32 %v1547, %v2428
      %v2736 = vmul.f32 %v1548, %v2433
      %v2737 = vmul.f32 %v1549, %v2433
      %v2738 = vmul.f32 %v1550, %v2438
      %v2739 = vmul.f32 %v1551, %v2438
      %v2740 = vmul.f32 %v1552, %v2443
      %v2741 = vmul.f32 %v1553, %v2443
      %v2742 = vmul.f32 %v1554, %v2448
      %v2743 = vmul.f32 %v1555, %v2448
      %v2744 = vmul.f32 %v1556, %v2453
      %v2745 = vmul.f32 %v1557, %v2453
      %v2746 = vmul.f32 %v1558, %v2458
      %v2747 = vmul.f32 %v1559, %v2458
      %v2748 = vmul.f32 %v1560, %v2463
      %v2749 = vmul.f32 %v1561, %v2463
      %v2750 = vmul.f32 %v1562, %v2468
      %v2751 = vmul.f32 %v1563, %v2468
      %v2752 = vmul.f32 %v1564, %v2473
      %v2753 = vmul.f32 %v1565, %v2473
      %v2754 = vmul.f32 %v1566, %v2478
      %v2755 = vmul.f32 %v1567, %v2478
      %v2756 = vmul.f32 %v1568, %v2483
      %v2757 = vmul.f32 %v1569, %v2483
      %v2758 = vmul.f32 %v1570, %v2488
      %v2759 = vmul.f32 %v1571, %v2488
      %v2760 = vmul.f32 %v1572, %v2493
      %v2761 = vmul.f32 %v1573, %v2493
      %v2762 = vmul.f32 %v1574, %v2498
      %v2763 = vmul.f32 %v1575, %v2498
      %v2764 = vmul.f32 %v1576, %v2503
      %v2765 = vmul.f32 %v1577, %v2503
      %v2766 = vmul.f32 %v1578, %v2508
      %v2767 = vmul.f32 %v1579, %v2508
      %v2768 = vmul.f32 %v1580, %v2513
      %v2769 = vmul.f32 %v1581, %v2513
      %v2770 = vmul.f32 %v1582, %v2518
      %v2771 = vmul.f32 %v1583, %v2518
      %v2772 = vmul.f32 %v1584, %v2523
      %v2773 = vmul.f32 %v1585, %v2523
      %v2774 = vmul.f32 %v1586, %v2528
      %v2775 = vmul.f32 %v1587, %v2528
      %v2776 = vmul.f32 %v1588, %v2533
      %v2777 = vmul.f32 %v1589, %v2533
      %v2778 = vmul.f32 %v1590, %v2538
      %v2779 = vmul.f32 %v1591, %v2538
      %v2780 = vmul.f32 %v1592, %v2543
      %v2781 = vmul.f32 %v1593, %v2543
      %v2782 = vmul.f32 %v1594, %v2548
      %v2783 = vmul.f32 %v1595, %v2548
      %v2784 = vmul.f32 %v1596, %v2553
      %v2785 = vmul.f32 %v1597, %v2553
      %v2786 = vmul.f32 %v1598, %v2558
      %v2787 = vmul.f32 %v1599, %v2558
      %v2788 = vmul.f32 %v1600, %v2563
      %v2789 = vmul.f32 %v1601, %v2563
      %v2790 = vmul.f32 %v1602, %v2568
      %v2791 = vmul.f32 %v1603, %v2568
      %v2792 = vmul.f32 %v1604, %v2573
      %v2793 = vmul.f32 %v1605, %v2573
      %v2794 = vmul.f32 %v1606, %v2578
      %v2795 = vmul.f32 %v1607, %v2578
      %v2796 = vmul.f32 %v1608, %v2583
      %v2797 = vmul.f32 %v1609, %v2583
      %v2798 = vmul.f32 %v1610, %v2588
      %v2799 = vmul.f32 %v1611, %v2588
      %v2800 = vmul.f32 %v1612, %v2593
      %v2801 = vmul.f32 %v1613, %v2593
      %v2802 = vmul.f32 %v1614, %v2598
      %v2803 = vmul.f32 %v1615, %v2598
      %v2804 = vmul.f32 %v1616, %v2603
      %v2805 = vmul.f32 %v1617, %v2603
      %v2806 = vmul.f32 %v1618, %v2608
      %v2807 = vmul.f32 %v1619, %v2608
      %v2808 = vmul.f32 %v1620, %v2613
      %v2809 = vmul.f32 %v1621, %v2613
      %v2810 = vmul.f32 %v1622, %v2618
      %v2811 = vmul.f32 %v1623, %v2618
      %v2812 = vmul.f32 %v1624, %v2623
      %v2813 = vmul.f32 %v1625, %v2623
      %v2814 = vmul.f32 %v1626, %v2628
      %v2815 = vmul.f32 %v1627, %v2628
      %v2816 = vmul.f32 %v1628, %v2633
      %v2817 = vmul.f32 %v1629, %v2633
      %v2818 = vmul.f32 %v1630, %v2638
      %v2819 = vmul.f32 %v1631, %v2638
      %v2820 = vmul.f32 %v1632, %v2643
      %v2821 = vmul.f32 %v1633, %v2643
      %v2822 = vmul.f32 %v1634, %v2648
      %v2823 = vmul.f32 %v1635, %v2648
      %v2824 = vmul.f32 %v1636, %v2653
      %v2825 = vmul.f32 %v1637, %v2653
      %v2826 = vmul.f32 %v1638, %v2658
      %v2827 = vmul.f32 %v1639, %v2658
      %v2828 = vmul.f32 %v1640, %v2663
      %v2829 = vmul.f32 %v1641, %v2663
      %v2830 = vmul.f32 %v1642, %v2668
      %v2831 = vmul.f32 %v1643, %v2668
      %v2832 = vmul.f32 %v1644, %v2673
      %v2833 = vmul.f32 %v1645, %v2673
      %v2834 = vmul.f32 %v1646, %v2678
      %v2835 = vmul.f32 %v1647, %v2678
      %v2836 = vmul.f32 %v1648, %v2683
      %v2837 = vmul.f32 %v1649, %v2683
      %v2838 = vmul.f32 %v1650, %v2688
      %v2839 = vmul.f32 %v1651, %v2688
      %v2840 = vmul.f32 %v1652, %v2693
      %v2841 = vmul.f32 %v1653, %v2693
      %v2842 = vmul.f32 %v1654, %v2698
      %v2843 = vmul.f32 %v1655, %v2698
      %v2844 = vmul.f32 %v1656, %v2703
      %v2845 = vmul.f32 %v1657, %v2703
      %v2846 = vmul.f32 %v1658, %v2708
      %v2847 = vmul.f32 %v1659, %v2708
      %v2848 = vmul.f32 %v1660, %v2713
      %v2849 = vmul.f32 %v1661, %v2713
      %v2850 = vmul.f32 %v1662, %v2718
      %v2851 = vmul.f32 %v1663, %v2718
      %v2852 = vld [vmem:[%s268] sm:$0xff]
      %v2853 = vld [vmem:[%s268 + $0x8] sm:$0xff]
      %v2854 = vld [vmem:[%s268 + $0x10] sm:$0xff]
      %v2855 = vld [vmem:[%s268 + $0x18] sm:$0xff]
      %v2856 = vld [vmem:[%s268 + $0x20] sm:$0xff]
      %v2857 = vld [vmem:[%s268 + $0x28] sm:$0xff]
      %v2858 = vld [vmem:[%s268 + $0x30] sm:$0xff]
      %v2859 = vld [vmem:[%s268 + $0x38] sm:$0xff]
      %v2860 = vld [vmem:[%s268 + $0x40] sm:$0xff]
      %v2861 = vld [vmem:[%s268 + $0x48] sm:$0xff]
      %v2862 = vld [vmem:[%s268 + $0x50] sm:$0xff]
      %v2863 = vld [vmem:[%s268 + $0x58] sm:$0xff]
      %v2864 = vld [vmem:[%s268 + $0x60] sm:$0xff]
      %v2865 = vld [vmem:[%s268 + $0x68] sm:$0xff]
      %v2866 = vld [vmem:[%s268 + $0x70] sm:$0xff]
      %v2867 = vld [vmem:[%s268 + $0x78] sm:$0xff]
      %v2868 = vld [vmem:[%s268 + $0x80] sm:$0xff]
      %v2869 = vld [vmem:[%s268 + $0x88] sm:$0xff]
      %v2870 = vld [vmem:[%s268 + $0x90] sm:$0xff]
      %v2871 = vld [vmem:[%s268 + $0x98] sm:$0xff]
      %v2872 = vld [vmem:[%s268 + $0xa0] sm:$0xff]
      %v2873 = vld [vmem:[%s268 + $0xa8] sm:$0xff]
      %v2874 = vld [vmem:[%s268 + $0xb0] sm:$0xff]
      %v2875 = vld [vmem:[%s268 + $0xb8] sm:$0xff]
      %v2876 = vld [vmem:[%s268 + $0xc0] sm:$0xff]
      %v2877 = vld [vmem:[%s268 + $0xc8] sm:$0xff]
      %v2878 = vld [vmem:[%s268 + $0xd0] sm:$0xff]
      %v2879 = vld [vmem:[%s268 + $0xd8] sm:$0xff]
      %v2880 = vld [vmem:[%s268 + $0xe0] sm:$0xff]
      %v2881 = vld [vmem:[%s268 + $0xe8] sm:$0xff]
      %v2882 = vld [vmem:[%s268 + $0xf0] sm:$0xff]
      %v2883 = vld [vmem:[%s268 + $0xf8] sm:$0xff]
      %v2884 = vld [vmem:[%s268 + $0x100] sm:$0xff]
      %v2885 = vld [vmem:[%s268 + $0x108] sm:$0xff]
      %v2886 = vld [vmem:[%s268 + $0x110] sm:$0xff]
      %v2887 = vld [vmem:[%s268 + $0x118] sm:$0xff]
      %v2888 = vld [vmem:[%s268 + $0x120] sm:$0xff]
      %v2889 = vld [vmem:[%s268 + $0x128] sm:$0xff]
      %v2890 = vld [vmem:[%s268 + $0x130] sm:$0xff]
      %v2891 = vld [vmem:[%s268 + $0x138] sm:$0xff]
      %v2892 = vld [vmem:[%s268 + $0x140] sm:$0xff]
      %v2893 = vld [vmem:[%s268 + $0x148] sm:$0xff]
      %v2894 = vld [vmem:[%s268 + $0x150] sm:$0xff]
      %v2895 = vld [vmem:[%s268 + $0x158] sm:$0xff]
      %v2896 = vld [vmem:[%s268 + $0x160] sm:$0xff]
      %v2897 = vld [vmem:[%s268 + $0x168] sm:$0xff]
      %v2898 = vld [vmem:[%s268 + $0x170] sm:$0xff]
      %v2899 = vld [vmem:[%s268 + $0x178] sm:$0xff]
      %v2900 = vld [vmem:[%s268 + $0x180] sm:$0xff]
      %v2901 = vld [vmem:[%s268 + $0x188] sm:$0xff]
      %v2902 = vld [vmem:[%s268 + $0x190] sm:$0xff]
      %v2903 = vld [vmem:[%s268 + $0x198] sm:$0xff]
      %v2904 = vld [vmem:[%s268 + $0x1a0] sm:$0xff]
      %v2905 = vld [vmem:[%s268 + $0x1a8] sm:$0xff]
      %v2906 = vld [vmem:[%s268 + $0x1b0] sm:$0xff]
      %v2907 = vld [vmem:[%s268 + $0x1b8] sm:$0xff]
      %v2908 = vld [vmem:[%s268 + $0x1c0] sm:$0xff]
      %v2909 = vld [vmem:[%s268 + $0x1c8] sm:$0xff]
      %v2910 = vld [vmem:[%s268 + $0x1d0] sm:$0xff]
      %v2911 = vld [vmem:[%s268 + $0x1d8] sm:$0xff]
      %v2912 = vld [vmem:[%s268 + $0x1e0] sm:$0xff]
      %v2913 = vld [vmem:[%s268 + $0x1e8] sm:$0xff]
      %v2914 = vld [vmem:[%s268 + $0x1f0] sm:$0xff]
      %v2915 = vld [vmem:[%s268 + $0x1f8] sm:$0xff]
      %v2916 = vld [vmem:[%s268 + $0x200] sm:$0xff]
      %v2917 = vld [vmem:[%s268 + $0x208] sm:$0xff]
      %2919 = vset.pattern.permute.xlu0 0
      %2920 = vperm.xlu0 %2919, %v2852
      %v2921 = vpop.permute.xlu0 %2920
      %2924 = vset.pattern.permute.xlu0 0
      %2925 = vperm.xlu0 %2924, %v2853
      %v2926 = vpop.permute.xlu0 %2925
      %2929 = vset.pattern.permute.xlu0 0
      %2930 = vperm.xlu0 %2929, %v2854
      %v2931 = vpop.permute.xlu0 %2930
      %2934 = vset.pattern.permute.xlu0 0
      %2935 = vperm.xlu0 %2934, %v2855
      %v2936 = vpop.permute.xlu0 %2935
      %2939 = vset.pattern.permute.xlu0 0
      %2940 = vperm.xlu0 %2939, %v2856
      %v2941 = vpop.permute.xlu0 %2940
      %2944 = vset.pattern.permute.xlu0 0
      %2945 = vperm.xlu0 %2944, %v2857
      %v2946 = vpop.permute.xlu0 %2945
      %2949 = vset.pattern.permute.xlu0 0
      %2950 = vperm.xlu0 %2949, %v2858
      %v2951 = vpop.permute.xlu0 %2950
      %2954 = vset.pattern.permute.xlu0 0
      %2955 = vperm.xlu0 %2954, %v2859
      %v2956 = vpop.permute.xlu0 %2955
      %2959 = vset.pattern.permute.xlu0 0
      %2960 = vperm.xlu0 %2959, %v2860
      %v2961 = vpop.permute.xlu0 %2960
      %2964 = vset.pattern.permute.xlu0 0
      %2965 = vperm.xlu0 %2964, %v2861
      %v2966 = vpop.permute.xlu0 %2965
      %2969 = vset.pattern.permute.xlu0 0
      %2970 = vperm.xlu0 %2969, %v2862
      %v2971 = vpop.permute.xlu0 %2970
      %2974 = vset.pattern.permute.xlu0 0
      %2975 = vperm.xlu0 %2974, %v2863
      %v2976 = vpop.permute.xlu0 %2975
      %2979 = vset.pattern.permute.xlu0 0
      %2980 = vperm.xlu0 %2979, %v2864
      %v2981 = vpop.permute.xlu0 %2980
      %2984 = vset.pattern.permute.xlu0 0
      %2985 = vperm.xlu0 %2984, %v2865
      %v2986 = vpop.permute.xlu0 %2985
      %2989 = vset.pattern.permute.xlu0 0
      %2990 = vperm.xlu0 %2989, %v2866
      %v2991 = vpop.permute.xlu0 %2990
      %2994 = vset.pattern.permute.xlu0 0
      %2995 = vperm.xlu0 %2994, %v2867
      %v2996 = vpop.permute.xlu0 %2995
      %2999 = vset.pattern.permute.xlu0 0
      %3000 = vperm.xlu0 %2999, %v2868
      %v3001 = vpop.permute.xlu0 %3000
      %3004 = vset.pattern.permute.xlu0 0
      %3005 = vperm.xlu0 %3004, %v2869
      %v3006 = vpop.permute.xlu0 %3005
      %3009 = vset.pattern.permute.xlu0 0
      %3010 = vperm.xlu0 %3009, %v2870
      %v3011 = vpop.permute.xlu0 %3010
      %3014 = vset.pattern.permute.xlu0 0
      %3015 = vperm.xlu0 %3014, %v2871
      %v3016 = vpop.permute.xlu0 %3015
      %3019 = vset.pattern.permute.xlu0 0
      %3020 = vperm.xlu0 %3019, %v2872
      %v3021 = vpop.permute.xlu0 %3020
      %3024 = vset.pattern.permute.xlu0 0
      %3025 = vperm.xlu0 %3024, %v2873
      %v3026 = vpop.permute.xlu0 %3025
      %3029 = vset.pattern.permute.xlu0 0
      %3030 = vperm.xlu0 %3029, %v2874
      %v3031 = vpop.permute.xlu0 %3030
      %3034 = vset.pattern.permute.xlu0 0
      %3035 = vperm.xlu0 %3034, %v2875
      %v3036 = vpop.permute.xlu0 %3035
      %3039 = vset.pattern.permute.xlu0 0
      %3040 = vperm.xlu0 %3039, %v2876
      %v3041 = vpop.permute.xlu0 %3040
      %3044 = vset.pattern.permute.xlu0 0
      %3045 = vperm.xlu0 %3044, %v2877
      %v3046 = vpop.permute.xlu0 %3045
      %3049 = vset.pattern.permute.xlu0 0
      %3050 = vperm.xlu0 %3049, %v2878
      %v3051 = vpop.permute.xlu0 %3050
      %3054 = vset.pattern.permute.xlu0 0
      %3055 = vperm.xlu0 %3054, %v2879
      %v3056 = vpop.permute.xlu0 %3055
      %3059 = vset.pattern.permute.xlu0 0
      %3060 = vperm.xlu0 %3059, %v2880
      %v3061 = vpop.permute.xlu0 %3060
      %3064 = vset.pattern.permute.xlu0 0
      %3065 = vperm.xlu0 %3064, %v2881
      %v3066 = vpop.permute.xlu0 %3065
      %3069 = vset.pattern.permute.xlu0 0
      %3070 = vperm.xlu0 %3069, %v2882
      %v3071 = vpop.permute.xlu0 %3070
      %3074 = vset.pattern.permute.xlu0 0
      %3075 = vperm.xlu0 %3074, %v2883
      %v3076 = vpop.permute.xlu0 %3075
      %3079 = vset.pattern.permute.xlu0 0
      %3080 = vperm.xlu0 %3079, %v2884
      %v3081 = vpop.permute.xlu0 %3080
      %3084 = vset.pattern.permute.xlu0 0
      %3085 = vperm.xlu0 %3084, %v2885
      %v3086 = vpop.permute.xlu0 %3085
      %3089 = vset.pattern.permute.xlu0 0
      %3090 = vperm.xlu0 %3089, %v2886
      %v3091 = vpop.permute.xlu0 %3090
      %3094 = vset.pattern.permute.xlu0 0
      %3095 = vperm.xlu0 %3094, %v2887
      %v3096 = vpop.permute.xlu0 %3095
      %3099 = vset.pattern.permute.xlu0 0
      %3100 = vperm.xlu0 %3099, %v2888
      %v3101 = vpop.permute.xlu0 %3100
      %3104 = vset.pattern.permute.xlu0 0
      %3105 = vperm.xlu0 %3104, %v2889
      %v3106 = vpop.permute.xlu0 %3105
      %3109 = vset.pattern.permute.xlu0 0
      %3110 = vperm.xlu0 %3109, %v2890
      %v3111 = vpop.permute.xlu0 %3110
      %3114 = vset.pattern.permute.xlu0 0
      %3115 = vperm.xlu0 %3114, %v2891
      %v3116 = vpop.permute.xlu0 %3115
      %3119 = vset.pattern.permute.xlu0 0
      %3120 = vperm.xlu0 %3119, %v2892
      %v3121 = vpop.permute.xlu0 %3120
      %3124 = vset.pattern.permute.xlu0 0
      %3125 = vperm.xlu0 %3124, %v2893
      %v3126 = vpop.permute.xlu0 %3125
      %3129 = vset.pattern.permute.xlu0 0
      %3130 = vperm.xlu0 %3129, %v2894
      %v3131 = vpop.permute.xlu0 %3130
      %3134 = vset.pattern.permute.xlu0 0
      %3135 = vperm.xlu0 %3134, %v2895
      %v3136 = vpop.permute.xlu0 %3135
      %3139 = vset.pattern.permute.xlu0 0
      %3140 = vperm.xlu0 %3139, %v2896
      %v3141 = vpop.permute.xlu0 %3140
      %3144 = vset.pattern.permute.xlu0 0
      %3145 = vperm.xlu0 %3144, %v2897
      %v3146 = vpop.permute.xlu0 %3145
      %3149 = vset.pattern.permute.xlu0 0
      %3150 = vperm.xlu0 %3149, %v2898
      %v3151 = vpop.permute.xlu0 %3150
      %3154 = vset.pattern.permute.xlu0 0
      %3155 = vperm.xlu0 %3154, %v2899
      %v3156 = vpop.permute.xlu0 %3155
      %3159 = vset.pattern.permute.xlu0 0
      %3160 = vperm.xlu0 %3159, %v2900
      %v3161 = vpop.permute.xlu0 %3160
      %3164 = vset.pattern.permute.xlu0 0
      %3165 = vperm.xlu0 %3164, %v2901
      %v3166 = vpop.permute.xlu0 %3165
      %3169 = vset.pattern.permute.xlu0 0
      %3170 = vperm.xlu0 %3169, %v2902
      %v3171 = vpop.permute.xlu0 %3170
      %3174 = vset.pattern.permute.xlu0 0
      %3175 = vperm.xlu0 %3174, %v2903
      %v3176 = vpop.permute.xlu0 %3175
      %3179 = vset.pattern.permute.xlu0 0
      %3180 = vperm.xlu0 %3179, %v2904
      %v3181 = vpop.permute.xlu0 %3180
      %3184 = vset.pattern.permute.xlu0 0
      %3185 = vperm.xlu0 %3184, %v2905
      %v3186 = vpop.permute.xlu0 %3185
      %3189 = vset.pattern.permute.xlu0 0
      %3190 = vperm.xlu0 %3189, %v2906
      %v3191 = vpop.permute.xlu0 %3190
      %3194 = vset.pattern.permute.xlu0 0
      %3195 = vperm.xlu0 %3194, %v2907
      %v3196 = vpop.permute.xlu0 %3195
      %3199 = vset.pattern.permute.xlu0 0
      %3200 = vperm.xlu0 %3199, %v2908
      %v3201 = vpop.permute.xlu0 %3200
      %3204 = vset.pattern.permute.xlu0 0
      %3205 = vperm.xlu0 %3204, %v2909
      %v3206 = vpop.permute.xlu0 %3205
      %3209 = vset.pattern.permute.xlu0 0
      %3210 = vperm.xlu0 %3209, %v2910
      %v3211 = vpop.permute.xlu0 %3210
      %3214 = vset.pattern.permute.xlu0 0
      %3215 = vperm.xlu0 %3214, %v2911
      %v3216 = vpop.permute.xlu0 %3215
      %3219 = vset.pattern.permute.xlu0 0
      %3220 = vperm.xlu0 %3219, %v2912
      %v3221 = vpop.permute.xlu0 %3220
      %3224 = vset.pattern.permute.xlu0 0
      %3225 = vperm.xlu0 %3224, %v2913
      %v3226 = vpop.permute.xlu0 %3225
      %3229 = vset.pattern.permute.xlu0 0
      %3230 = vperm.xlu0 %3229, %v2914
      %v3231 = vpop.permute.xlu0 %3230
      %3234 = vset.pattern.permute.xlu0 0
      %3235 = vperm.xlu0 %3234, %v2915
      %v3236 = vpop.permute.xlu0 %3235
      %3239 = vset.pattern.permute.xlu0 0
      %3240 = vperm.xlu0 %3239, %v2916
      %v3241 = vpop.permute.xlu0 %3240
      %3244 = vset.pattern.permute.xlu0 0
      %3245 = vperm.xlu0 %3244, %v2917
      %v3246 = vpop.permute.xlu0 %3245
      %v3248 = vadd.f32 %v2720, %v2921
      %v3249 = vadd.f32 %v2721, %v2921
      %v3250 = vadd.f32 %v2722, %v2926
      %v3251 = vadd.f32 %v2723, %v2926
      %v3252 = vadd.f32 %v2724, %v2931
      %v3253 = vadd.f32 %v2725, %v2931
      %v3254 = vadd.f32 %v2726, %v2936
      %v3255 = vadd.f32 %v2727, %v2936
      %v3256 = vadd.f32 %v2728, %v2941
      %v3257 = vadd.f32 %v2729, %v2941
      %v3258 = vadd.f32 %v2730, %v2946
      %v3259 = vadd.f32 %v2731, %v2946
      %v3260 = vadd.f32 %v2732, %v2951
      %v3261 = vadd.f32 %v2733, %v2951
      %v3262 = vadd.f32 %v2734, %v2956
      %v3263 = vadd.f32 %v2735, %v2956
      %v3264 = vadd.f32 %v2736, %v2961
      %v3265 = vadd.f32 %v2737, %v2961
      %v3266 = vadd.f32 %v2738, %v2966
      %v3267 = vadd.f32 %v2739, %v2966
      %v3268 = vadd.f32 %v2740, %v2971
      %v3269 = vadd.f32 %v2741, %v2971
      %v3270 = vadd.f32 %v2742, %v2976
      %v3271 = vadd.f32 %v2743, %v2976
      %v3272 = vadd.f32 %v2744, %v2981
      %v3273 = vadd.f32 %v2745, %v2981
      %v3274 = vadd.f32 %v2746, %v2986
      %v3275 = vadd.f32 %v2747, %v2986
      %v3276 = vadd.f32 %v2748, %v2991
      %v3277 = vadd.f32 %v2749, %v2991
      %v3278 = vadd.f32 %v2750, %v2996
      %v3279 = vadd.f32 %v2751, %v2996
      %v3280 = vadd.f32 %v2752, %v3001
      %v3281 = vadd.f32 %v2753, %v3001
      %v3282 = vadd.f32 %v2754, %v3006
      %v3283 = vadd.f32 %v2755, %v3006
      %v3284 = vadd.f32 %v2756, %v3011
      %v3285 = vadd.f32 %v2757, %v3011
      %v3286 = vadd.f32 %v2758, %v3016
      %v3287 = vadd.f32 %v2759, %v3016
      %v3288 = vadd.f32 %v2760, %v3021
      %v3289 = vadd.f32 %v2761, %v3021
      %v3290 = vadd.f32 %v2762, %v3026
      %v3291 = vadd.f32 %v2763, %v3026
      %v3292 = vadd.f32 %v2764, %v3031
      %v3293 = vadd.f32 %v2765, %v3031
      %v3294 = vadd.f32 %v2766, %v3036
      %v3295 = vadd.f32 %v2767, %v3036
      %v3296 = vadd.f32 %v2768, %v3041
      %v3297 = vadd.f32 %v2769, %v3041
      %v3298 = vadd.f32 %v2770, %v3046
      %v3299 = vadd.f32 %v2771, %v3046
      %v3300 = vadd.f32 %v2772, %v3051
      %v3301 = vadd.f32 %v2773, %v3051
      %v3302 = vadd.f32 %v2774, %v3056
      %v3303 = vadd.f32 %v2775, %v3056
      %v3304 = vadd.f32 %v2776, %v3061
      %v3305 = vadd.f32 %v2777, %v3061
      %v3306 = vadd.f32 %v2778, %v3066
      %v3307 = vadd.f32 %v2779, %v3066
      %v3308 = vadd.f32 %v2780, %v3071
      %v3309 = vadd.f32 %v2781, %v3071
      %v3310 = vadd.f32 %v2782, %v3076
      %v3311 = vadd.f32 %v2783, %v3076
      %v3312 = vadd.f32 %v2784, %v3081
      %v3313 = vadd.f32 %v2785, %v3081
      %v3314 = vadd.f32 %v2786, %v3086
      %v3315 = vadd.f32 %v2787, %v3086
      %v3316 = vadd.f32 %v2788, %v3091
      %v3317 = vadd.f32 %v2789, %v3091
      %v3318 = vadd.f32 %v2790, %v3096
      %v3319 = vadd.f32 %v2791, %v3096
      %v3320 = vadd.f32 %v2792, %v3101
      %v3321 = vadd.f32 %v2793, %v3101
      %v3322 = vadd.f32 %v2794, %v3106
      %v3323 = vadd.f32 %v2795, %v3106
      %v3324 = vadd.f32 %v2796, %v3111
      %v3325 = vadd.f32 %v2797, %v3111
      %v3326 = vadd.f32 %v2798, %v3116
      %v3327 = vadd.f32 %v2799, %v3116
      %v3328 = vadd.f32 %v2800, %v3121
      %v3329 = vadd.f32 %v2801, %v3121
      %v3330 = vadd.f32 %v2802, %v3126
      %v3331 = vadd.f32 %v2803, %v3126
      %v3332 = vadd.f32 %v2804, %v3131
      %v3333 = vadd.f32 %v2805, %v3131
      %v3334 = vadd.f32 %v2806, %v3136
      %v3335 = vadd.f32 %v2807, %v3136
      %v3336 = vadd.f32 %v2808, %v3141
      %v3337 = vadd.f32 %v2809, %v3141
      %v3338 = vadd.f32 %v2810, %v3146
      %v3339 = vadd.f32 %v2811, %v3146
      %v3340 = vadd.f32 %v2812, %v3151
      %v3341 = vadd.f32 %v2813, %v3151
      %v3342 = vadd.f32 %v2814, %v3156
      %v3343 = vadd.f32 %v2815, %v3156
      %v3344 = vadd.f32 %v2816, %v3161
      %v3345 = vadd.f32 %v2817, %v3161
      %v3346 = vadd.f32 %v2818, %v3166
      %v3347 = vadd.f32 %v2819, %v3166
      %v3348 = vadd.f32 %v2820, %v3171
      %v3349 = vadd.f32 %v2821, %v3171
      %v3350 = vadd.f32 %v2822, %v3176
      %v3351 = vadd.f32 %v2823, %v3176
      %v3352 = vadd.f32 %v2824, %v3181
      %v3353 = vadd.f32 %v2825, %v3181
      %v3354 = vadd.f32 %v2826, %v3186
      %v3355 = vadd.f32 %v2827, %v3186
      %v3356 = vadd.f32 %v2828, %v3191
      %v3357 = vadd.f32 %v2829, %v3191
      %v3358 = vadd.f32 %v2830, %v3196
      %v3359 = vadd.f32 %v2831, %v3196
      %v3360 = vadd.f32 %v2832, %v3201
      %v3361 = vadd.f32 %v2833, %v3201
      %v3362 = vadd.f32 %v2834, %v3206
      %v3363 = vadd.f32 %v2835, %v3206
      %v3364 = vadd.f32 %v2836, %v3211
      %v3365 = vadd.f32 %v2837, %v3211
      %v3366 = vadd.f32 %v2838, %v3216
      %v3367 = vadd.f32 %v2839, %v3216
      %v3368 = vadd.f32 %v2840, %v3221
      %v3369 = vadd.f32 %v2841, %v3221
      %v3370 = vadd.f32 %v2842, %v3226
      %v3371 = vadd.f32 %v2843, %v3226
      %v3372 = vadd.f32 %v2844, %v3231
      %v3373 = vadd.f32 %v2845, %v3231
      %v3374 = vadd.f32 %v2846, %v3236
      %v3375 = vadd.f32 %v2847, %v3236
      %v3376 = vadd.f32 %v2848, %v3241
      %v3377 = vadd.f32 %v2849, %v3241
      %v3378 = vadd.f32 %v2850, %v3246
      %v3379 = vadd.f32 %v2851, %v3246
      %3380 = vst [vmem:[%s275] sm:$0xff] %v3248
      %3381 = vst.msk [vmem:[%s275 + $0x8] sm:$0xff] %vm1201, %v3249
      %3382 = vst [vmem:[%s275 + $0x10] sm:$0xff] %v3250
      %3383 = vst.msk [vmem:[%s275 + $0x18] sm:$0xff] %vm1201, %v3251
      %3384 = vst [vmem:[%s275 + $0x20] sm:$0xff] %v3252
      %3385 = vst.msk [vmem:[%s275 + $0x28] sm:$0xff] %vm1201, %v3253
      %3386 = vst [vmem:[%s275 + $0x30] sm:$0xff] %v3254
      %3387 = vst.msk [vmem:[%s275 + $0x38] sm:$0xff] %vm1201, %v3255
      %3388 = vst [vmem:[%s275 + $0x40] sm:$0xff] %v3256
      %3389 = vst.msk [vmem:[%s275 + $0x48] sm:$0xff] %vm1201, %v3257
      %3390 = vst [vmem:[%s275 + $0x50] sm:$0xff] %v3258
      %3391 = vst.msk [vmem:[%s275 + $0x58] sm:$0xff] %vm1201, %v3259
      %3392 = vst [vmem:[%s275 + $0x60] sm:$0xff] %v3260
      %3393 = vst.msk [vmem:[%s275 + $0x68] sm:$0xff] %vm1201, %v3261
      %3394 = vst [vmem:[%s275 + $0x70] sm:$0xff] %v3262
      %3395 = vst.msk [vmem:[%s275 + $0x78] sm:$0xff] %vm1201, %v3263
      %3396 = vst [vmem:[%s275 + $0x80] sm:$0xff] %v3264
      %3397 = vst.msk [vmem:[%s275 + $0x88] sm:$0xff] %vm1201, %v3265
      %3398 = vst [vmem:[%s275 + $0x90] sm:$0xff] %v3266
      %3399 = vst.msk [vmem:[%s275 + $0x98] sm:$0xff] %vm1201, %v3267
      %3400 = vst [vmem:[%s275 + $0xa0] sm:$0xff] %v3268
      %3401 = vst.msk [vmem:[%s275 + $0xa8] sm:$0xff] %vm1201, %v3269
      %3402 = vst [vmem:[%s275 + $0xb0] sm:$0xff] %v3270
      %3403 = vst.msk [vmem:[%s275 + $0xb8] sm:$0xff] %vm1201, %v3271
      %3404 = vst [vmem:[%s275 + $0xc0] sm:$0xff] %v3272
      %3405 = vst.msk [vmem:[%s275 + $0xc8] sm:$0xff] %vm1201, %v3273
      %3406 = vst [vmem:[%s275 + $0xd0] sm:$0xff] %v3274
      %3407 = vst.msk [vmem:[%s275 + $0xd8] sm:$0xff] %vm1201, %v3275
      %3408 = vst [vmem:[%s275 + $0xe0] sm:$0xff] %v3276
      %3409 = vst.msk [vmem:[%s275 + $0xe8] sm:$0xff] %vm1201, %v3277
      %3410 = vst [vmem:[%s275 + $0xf0] sm:$0xff] %v3278
      %3411 = vst.msk [vmem:[%s275 + $0xf8] sm:$0xff] %vm1201, %v3279
      %3412 = vst [vmem:[%s275 + $0x100] sm:$0xff] %v3280
      %3413 = vst.msk [vmem:[%s275 + $0x108] sm:$0xff] %vm1201, %v3281
      %3414 = vst [vmem:[%s275 + $0x110] sm:$0xff] %v3282
      %3415 = vst.msk [vmem:[%s275 + $0x118] sm:$0xff] %vm1201, %v3283
      %3416 = vst [vmem:[%s275 + $0x120] sm:$0xff] %v3284
      %3417 = vst.msk [vmem:[%s275 + $0x128] sm:$0xff] %vm1201, %v3285
      %3418 = vst [vmem:[%s275 + $0x130] sm:$0xff] %v3286
      %3419 = vst.msk [vmem:[%s275 + $0x138] sm:$0xff] %vm1201, %v3287
      %3420 = vst [vmem:[%s275 + $0x140] sm:$0xff] %v3288
      %3421 = vst.msk [vmem:[%s275 + $0x148] sm:$0xff] %vm1201, %v3289
      %3422 = vst [vmem:[%s275 + $0x150] sm:$0xff] %v3290
      %3423 = vst.msk [vmem:[%s275 + $0x158] sm:$0xff] %vm1201, %v3291
      %3424 = vst [vmem:[%s275 + $0x160] sm:$0xff] %v3292
      %3425 = vst.msk [vmem:[%s275 + $0x168] sm:$0xff] %vm1201, %v3293
      %3426 = vst [vmem:[%s275 + $0x170] sm:$0xff] %v3294
      %3427 = vst.msk [vmem:[%s275 + $0x178] sm:$0xff] %vm1201, %v3295
      %3428 = vst [vmem:[%s275 + $0x180] sm:$0xff] %v3296
      %3429 = vst.msk [vmem:[%s275 + $0x188] sm:$0xff] %vm1201, %v3297
      %3430 = vst [vmem:[%s275 + $0x190] sm:$0xff] %v3298
      %3431 = vst.msk [vmem:[%s275 + $0x198] sm:$0xff] %vm1201, %v3299
      %3432 = vst [vmem:[%s275 + $0x1a0] sm:$0xff] %v3300
      %3433 = vst.msk [vmem:[%s275 + $0x1a8] sm:$0xff] %vm1201, %v3301
      %3434 = vst [vmem:[%s275 + $0x1b0] sm:$0xff] %v3302
      %3435 = vst.msk [vmem:[%s275 + $0x1b8] sm:$0xff] %vm1201, %v3303
      %3436 = vst [vmem:[%s275 + $0x1c0] sm:$0xff] %v3304
      %3437 = vst.msk [vmem:[%s275 + $0x1c8] sm:$0xff] %vm1201, %v3305
      %3438 = vst [vmem:[%s275 + $0x1d0] sm:$0xff] %v3306
      %3439 = vst.msk [vmem:[%s275 + $0x1d8] sm:$0xff] %vm1201, %v3307
      %3440 = vst [vmem:[%s275 + $0x1e0] sm:$0xff] %v3308
      %3441 = vst.msk [vmem:[%s275 + $0x1e8] sm:$0xff] %vm1201, %v3309
      %3442 = vst [vmem:[%s275 + $0x1f0] sm:$0xff] %v3310
      %3443 = vst.msk [vmem:[%s275 + $0x1f8] sm:$0xff] %vm1201, %v3311
      %3444 = vst [vmem:[%s275 + $0x200] sm:$0xff] %v3312
      %3445 = vst.msk [vmem:[%s275 + $0x208] sm:$0xff] %vm1201, %v3313
      %3446 = vst [vmem:[%s275 + $0x210] sm:$0xff] %v3314
      %3447 = vst.msk [vmem:[%s275 + $0x218] sm:$0xff] %vm1201, %v3315
      %3448 = vst [vmem:[%s275 + $0x220] sm:$0xff] %v3316
      %3449 = vst.msk [vmem:[%s275 + $0x228] sm:$0xff] %vm1201, %v3317
      %3450 = vst [vmem:[%s275 + $0x230] sm:$0xff] %v3318
      %3451 = vst.msk [vmem:[%s275 + $0x238] sm:$0xff] %vm1201, %v3319
      %3452 = vst [vmem:[%s275 + $0x240] sm:$0xff] %v3320
      %3453 = vst.msk [vmem:[%s275 + $0x248] sm:$0xff] %vm1201, %v3321
      %3454 = vst [vmem:[%s275 + $0x250] sm:$0xff] %v3322
      %3455 = vst.msk [vmem:[%s275 + $0x258] sm:$0xff] %vm1201, %v3323
      %3456 = vst [vmem:[%s275 + $0x260] sm:$0xff] %v3324
      %3457 = vst.msk [vmem:[%s275 + $0x268] sm:$0xff] %vm1201, %v3325
      %3458 = vst [vmem:[%s275 + $0x270] sm:$0xff] %v3326
      %3459 = vst.msk [vmem:[%s275 + $0x278] sm:$0xff] %vm1201, %v3327
      %3460 = vst [vmem:[%s275 + $0x280] sm:$0xff] %v3328
      %3461 = vst.msk [vmem:[%s275 + $0x288] sm:$0xff] %vm1201, %v3329
      %3462 = vst [vmem:[%s275 + $0x290] sm:$0xff] %v3330
      %3463 = vst.msk [vmem:[%s275 + $0x298] sm:$0xff] %vm1201, %v3331
      %3464 = vst [vmem:[%s275 + $0x2a0] sm:$0xff] %v3332
      %3465 = vst.msk [vmem:[%s275 + $0x2a8] sm:$0xff] %vm1201, %v3333
      %3466 = vst [vmem:[%s275 + $0x2b0] sm:$0xff] %v3334
      %3467 = vst.msk [vmem:[%s275 + $0x2b8] sm:$0xff] %vm1201, %v3335
      %3468 = vst [vmem:[%s275 + $0x2c0] sm:$0xff] %v3336
      %3469 = vst.msk [vmem:[%s275 + $0x2c8] sm:$0xff] %vm1201, %v3337
      %3470 = vst [vmem:[%s275 + $0x2d0] sm:$0xff] %v3338
      %3471 = vst.msk [vmem:[%s275 + $0x2d8] sm:$0xff] %vm1201, %v3339
      %3472 = vst [vmem:[%s275 + $0x2e0] sm:$0xff] %v3340
      %3473 = vst.msk [vmem:[%s275 + $0x2e8] sm:$0xff] %vm1201, %v3341
      %3474 = vst [vmem:[%s275 + $0x2f0] sm:$0xff] %v3342
      %3475 = vst.msk [vmem:[%s275 + $0x2f8] sm:$0xff] %vm1201, %v3343
      %3476 = vst [vmem:[%s275 + $0x300] sm:$0xff] %v3344
      %3477 = vst.msk [vmem:[%s275 + $0x308] sm:$0xff] %vm1201, %v3345
      %3478 = vst [vmem:[%s275 + $0x310] sm:$0xff] %v3346
      %3479 = vst.msk [vmem:[%s275 + $0x318] sm:$0xff] %vm1201, %v3347
      %3480 = vst [vmem:[%s275 + $0x320] sm:$0xff] %v3348
      %3481 = vst.msk [vmem:[%s275 + $0x328] sm:$0xff] %vm1201, %v3349
      %3482 = vst [vmem:[%s275 + $0x330] sm:$0xff] %v3350
      %3483 = vst.msk [vmem:[%s275 + $0x338] sm:$0xff] %vm1201, %v3351
      %3484 = vst [vmem:[%s275 + $0x340] sm:$0xff] %v3352
      %3485 = vst.msk [vmem:[%s275 + $0x348] sm:$0xff] %vm1201, %v3353
      %3486 = vst [vmem:[%s275 + $0x350] sm:$0xff] %v3354
      %3487 = vst.msk [vmem:[%s275 + $0x358] sm:$0xff] %vm1201, %v3355
      %3488 = vst [vmem:[%s275 + $0x360] sm:$0xff] %v3356
      %3489 = vst.msk [vmem:[%s275 + $0x368] sm:$0xff] %vm1201, %v3357
      %3490 = vst [vmem:[%s275 + $0x370] sm:$0xff] %v3358
      %3491 = vst.msk [vmem:[%s275 + $0x378] sm:$0xff] %vm1201, %v3359
      %3492 = vst [vmem:[%s275 + $0x380] sm:$0xff] %v3360
      %3493 = vst.msk [vmem:[%s275 + $0x388] sm:$0xff] %vm1201, %v3361
      %3494 = vst [vmem:[%s275 + $0x390] sm:$0xff] %v3362
      %3495 = vst.msk [vmem:[%s275 + $0x398] sm:$0xff] %vm1201, %v3363
      %3496 = vst [vmem:[%s275 + $0x3a0] sm:$0xff] %v3364
      %3497 = vst.msk [vmem:[%s275 + $0x3a8] sm:$0xff] %vm1201, %v3365
      %3498 = vst [vmem:[%s275 + $0x3b0] sm:$0xff] %v3366
      %3499 = vst.msk [vmem:[%s275 + $0x3b8] sm:$0xff] %vm1201, %v3367
      %3500 = vst [vmem:[%s275 + $0x3c0] sm:$0xff] %v3368
      %3501 = vst.msk [vmem:[%s275 + $0x3c8] sm:$0xff] %vm1201, %v3369
      %3502 = vst [vmem:[%s275 + $0x3d0] sm:$0xff] %v3370
      %3503 = vst.msk [vmem:[%s275 + $0x3d8] sm:$0xff] %vm1201, %v3371
      %3504 = vst [vmem:[%s275 + $0x3e0] sm:$0xff] %v3372
      %3505 = vst.msk [vmem:[%s275 + $0x3e8] sm:$0xff] %vm1201, %v3373
      %3506 = vst [vmem:[%s275 + $0x3f0] sm:$0xff] %v3374
      %3507 = vst.msk [vmem:[%s275 + $0x3f8] sm:$0xff] %vm1201, %v3375
      %3508 = vst [vmem:[%s275 + $0x400] sm:$0xff] %v3376
      %3509 = vst.msk [vmem:[%s275 + $0x408] sm:$0xff] %vm1201, %v3377
      %3510 = vst [vmem:[%s275 + $0x410] sm:$0xff] %v3378
      %3511 = vst.msk [vmem:[%s275 + $0x418] sm:$0xff] %vm1201, %v3379
      %s3512 = smul.u32 66, %s16
      %p3513 = scmp.lt.s32.totalorder %s3512, 131
      %s3514 = scalar_select %p3513, %s3512, 131
      %s3515 = smul.addr %s3514, 2
      %s3516 = smul.addr %s3515, 8
      %s3517 = scalar_lea.vmem %s5, %s3516
      // Predicated region
      $region41: #{fused_add_conv1x1_bn.1} parent=39 // pred_check
        %p3518 = pneg %p154
      $region42: #{fused_add_conv1x1_bn.1} parent=39 // pred_check_branch
        %3520 = sbr.rel (%p3518) target = $region44
      $region43: #{fused_add_conv1x1_bn.1} parent=39 // pred_region
        %s3521 = smul.u32 66, %s16
      $region44: #{fused_add_conv1x1_bn.1} parent=39 // pred_fallthru
        _
    $region40: #{fused_add_conv1x1_bn.1} parent=5 // pred_fallthru
      _
    %p3522 = scmp.le.s32.totalorder 2, %s11
    // Predicated region
    $region45: #{fused_add_conv1x1_bn.1} parent=5 // pred_check
      %p3523 = pneg %p3522
    $region46: #{fused_add_conv1x1_bn.1} parent=5 // pred_check_branch
      %3525 = sbr.rel (%p3523) target = $region48
    $region47: #{fused_add_conv1x1_bn.1} parent=5 // pred_region
      %s3526 = ssub.s32 %s11, 2
      // Predicated region
      $region49: #{fused_add_conv1x1_bn.1} parent=47 // pred_check
        %p3527 = pneg %p160
      $region50: #{fused_add_conv1x1_bn.1} parent=47 // pred_check_branch
        %3529 = sbr.rel (%p3527) target = $region52
      $region51: #{fused_add_conv1x1_bn.1} parent=47 // pred_region
        %s3530 = smul.u32 66, %s17
        %p3531 = scmp.lt.s32.totalorder %s3530, 131
        %s3532 = scalar_select %p3531, %s3530, 131
        %s3533 = smul.addr %s3532, 2
        %s3534 = smul.addr %s3533, 8
        %s3535 = scalar_lea.vmem %s5, %s3534
      $region52: #{fused_add_conv1x1_bn.1} parent=47 // pred_fallthru
        _
    $region48: #{fused_add_conv1x1_bn.1} parent=5 // pred_fallthru
      _
  $region6: #{fused_add_conv1x1_bn.1} parent=0 // loop_footer
    %s15 = sadd.s32 1, %s11
  $region7: #{fused_add_conv1x1_bn.1} parent=0 // loop_footer_branch
    %10 = sbr.rel target = $region3
  $region8: #{fused_add_conv1x1_bn.1} parent=0 // loop_exit
    _

</llo_original>
